<compile_context>
chip_gen: v7x
topology: tpu7x:2x2x1
jax: 0.10.0
libtpu: 0.0.40
codegen_flags: <defaults>
</compile_context>

<pallas_src>
import functools
import math

import jax
import jax.numpy as jnp
from jax import lax
from jax.experimental import pallas as pl
from jax.experimental.pallas import tpu as pltpu


# ----------------------------------------------------------------------------
# Fused decoder-layer kernel (one grid step == one batch element)
# ----------------------------------------------------------------------------
def _decoder_layer_kernel(
    trg_ref, src_ref, msk_sa_ref, msk_ea_ref,
    wqkv_sa_ref, bqkv_sa_ref, wo_sa_ref, bo_sa_ref,
    wq_ea_ref, bq_ea_ref, wkv_ea_ref, bkv_ea_ref, wo_ea_ref, bo_ea_ref,
    w1_ref, b1_ref, w2_ref, b2_ref,
    g1_ref, be1_ref, g2_ref, be2_ref, g3_ref, be3_ref,
    out_ref,
    *, n_heads, inv_scale, eps):
    f32 = jnp.float32

    def layer_norm(x, gamma, beta):
        # torch: (x - mean) / (std_unbiased + eps) * gamma + beta
        d = x.shape[-1]
        mean = jnp.mean(x, axis=-1, keepdims=True)
        diff = x - mean
        var = jnp.sum(diff * diff, axis=-1, keepdims=True) * (1.0 / (d - 1))
        inv = pl.reciprocal(jnp.sqrt(var) + eps, approx=True)
        return gamma * (diff * inv) + beta

    def mha(q, k, v, masked):
        # q: (Lq, D), k/v: (Lk, D), masked: (Lq, Lk) (1.0 where mask == 0)
        d = q.shape[-1]
        dh = d // n_heads
        q = q * inv_scale                  # fold 1/sqrt(dh) into q (Lq*D work)
        is_masked = masked > 0.5           # hoisted out of the per-head unroll
        outs = []
        for h in range(n_heads):           # static unroll over heads
            lo = h * dh
            qh = q[:, lo:lo + dh]
            kh = k[:, lo:lo + dh]
            vh = v[:, lo:lo + dh]
            # q @ k.T without an explicit transpose op
            s = lax.dot_general(qh, kh, (((1,), (1,)), ((), ())),
                                preferred_element_type=f32)
            s = jnp.where(is_masked, f32(-1e10), s)  # masked_fill(mask==0, -1e10)
            s = s - jnp.max(s, axis=-1, keepdims=True)
            p = jnp.exp(s)
            p = p * pl.reciprocal(jnp.sum(p, axis=-1, keepdims=True), approx=True)
            outs.append(jnp.dot(p, vh, preferred_element_type=f32))
        return jnp.concatenate(outs, axis=-1)        # (Lq, D)

    trg = trg_ref[0]                 # (Lq, D)
    src = src_ref[0]                 # (Lk, D)
    d = trg.shape[-1]

    # ---- self-attention + residual + LN1 ----
    qkv = jnp.dot(trg, wqkv_sa_ref[...], preferred_element_type=f32) + bqkv_sa_ref[...]
    att = mha(qkv[:, :d], qkv[:, d:2 * d], qkv[:, 2 * d:], msk_sa_ref[0])
    sa_out = jnp.dot(att, wo_sa_ref[...], preferred_element_type=f32) + bo_sa_ref[...]
    x = layer_norm(trg + sa_out, g1_ref[...], be1_ref[...])

    # ---- cross-attention + residual + LN2 ----
    q = jnp.dot(x, wq_ea_ref[...], preferred_element_type=f32) + bq_ea_ref[...]
    kv = jnp.dot(src, wkv_ea_ref[...], preferred_element_type=f32) + bkv_ea_ref[...]
    att = mha(q, kv[:, :d], kv[:, d:], msk_ea_ref[0])
    ea_out = jnp.dot(att, wo_ea_ref[...], preferred_element_type=f32) + bo_ea_ref[...]
    x = layer_norm(x + ea_out, g2_ref[...], be2_ref[...])

    # ---- position-wise feed-forward + residual + LN3 ----
    h = jnp.maximum(jnp.dot(x, w1_ref[...], preferred_element_type=f32) + b1_ref[...], 0.0)
    ff = jnp.dot(h, w2_ref[...], preferred_element_type=f32) + b2_ref[...]
    out_ref[0] = layer_norm(x + ff, g3_ref[...], be3_ref[...])


# ----------------------------------------------------------------------------
# Wrapper
# ----------------------------------------------------------------------------
def decoder_layer(params, trg, src, trg_mask, cross_attn_mask, n_heads, eps=1e-12):
    B, Lq, D = trg.shape
    Lk = src.shape[1]
    dh = D // n_heads
    inv_scale = 1.0 / math.sqrt(dh)

    # "masked out" indicator, broadcast once to (B, Lq, Lk); loaded once per batch
    msk_sa = jnp.broadcast_to((trg_mask == 0).astype(jnp.float32), (B, 1, Lq, Lq))[:, 0]
    msk_ea = jnp.broadcast_to((cross_attn_mask == 0).astype(jnp.float32), (B, 1, Lq, Lk))[:, 0]

    sa, ea, pf = params["sa"], params["ea"], params["pf"]
    pf_dim = pf["w1"].shape[1]

    def row(v):                       # bias / LN params as (1, N) 2-D VMEM tiles
        return v.reshape(1, -1)

    def full2d(shape):                # grid-invariant weight block (DMA'd once)
        return pl.BlockSpec(shape, lambda b: (0, 0))

    def batched(s1, s2):              # per-batch activation / mask block
        return pl.BlockSpec((1, s1, s2), lambda b: (b, 0, 0))

    kernel = functools.partial(_decoder_layer_kernel, n_heads=n_heads,
                               inv_scale=inv_scale, eps=eps)

    return pl.pallas_call(
        kernel,
        out_shape=jax.ShapeDtypeStruct((B, Lq, D), jnp.float32),
        grid=(B,),
        in_specs=[
            batched(Lq, D),                              # trg
            batched(Lk, D),                              # src
            batched(Lq, Lq),                             # self-attn mask
            batched(Lq, Lk),                             # cross-attn mask
            full2d((D, 3 * D)), full2d((1, 3 * D)),      # wqkv_sa, bqkv_sa
            full2d((D, D)), full2d((1, D)),              # wo_sa, bo_sa
            full2d((D, D)), full2d((1, D)),              # wq_ea, bq_ea
            full2d((D, 2 * D)), full2d((1, 2 * D)),      # wkv_ea, bkv_ea
            full2d((D, D)), full2d((1, D)),              # wo_ea, bo_ea
            full2d((D, pf_dim)), full2d((1, pf_dim)),    # w1, b1
            full2d((pf_dim, D)), full2d((1, D)),         # w2, b2
            full2d((1, D)), full2d((1, D)),              # ln1 gamma, beta
            full2d((1, D)), full2d((1, D)),              # ln2 gamma, beta
            full2d((1, D)), full2d((1, D)),              # ln3 gamma, beta
        ],
        out_specs=batched(Lq, D),
        compiler_params=pltpu.CompilerParams(
            dimension_semantics=("parallel",),           # shard batch across TCs
            vmem_limit_bytes=32 * 1024 * 1024),
    )(
        trg, src, msk_sa, msk_ea,
        sa["wqkv"], row(sa["bqkv"]), sa["wo"], row(sa["bo"]),
        ea["wq"], row(ea["bq"]), ea["wkv"], row(ea["bkv"]), ea["wo"], row(ea["bo"]),
        pf["w1"], row(pf["b1"]), pf["w2"], row(pf["b2"]),
        row(params["ln1"]["gamma"]), row(params["ln1"]["beta"]),
        row(params["ln2"]["gamma"]), row(params["ln2"]["beta"]),
        row(params["ln3"]["gamma"]), row(params["ln3"]["beta"]),
    )


# ----------------------------------------------------------------------------
# Pure-JAX reference (mirrors the PyTorch module exactly)
# ----------------------------------------------------------------------------
def _ref_layer_norm(x, gamma, beta, eps=1e-12):
    mean = jnp.mean(x, axis=-1, keepdims=True)
    var = jnp.sum((x - mean) ** 2, axis=-1, keepdims=True) / (x.shape[-1] - 1)
    return gamma * ((x - mean) / (jnp.sqrt(var) + eps)) + beta


def _ref_attention(xq, xkv, wq, bq, wk, bk, wv, bv, wo, bo, mask, n_heads):
    B, Lq, D = xq.shape
    Lk = xkv.shape[1]
    dh = D // n_heads
    q = (xq @ wq + bq).reshape(B, Lq, n_heads, dh).transpose(0, 2, 1, 3)
    k = (xkv @ wk + bk).reshape(B, Lk, n_heads, dh).transpose(0, 2, 1, 3)
    v = (xkv @ wv + bv).reshape(B, Lk, n_heads, dh).transpose(0, 2, 1, 3)
    s = jnp.einsum("bhqd,bhkd->bhqk", q, k) / math.sqrt(dh)
    s = jnp.where(mask == 0, -1e10, s)
    a = jax.nn.softmax(s, axis=-1)
    o = jnp.einsum("bhqk,bhkd->bhqd", a, v).transpose(0, 2, 1, 3).reshape(B, Lq, D)
    return o @ wo + bo


def _ref_decoder_layer(p, trg, src, trg_mask, cross_mask, n_heads, eps=1e-12):
    D = trg.shape[-1]
    sa, ea, pf = p["sa"], p["ea"], p["pf"]
    wq, wk, wv = sa["wqkv"][:, :D], sa["wqkv"][:, D:2 * D], sa["wqkv"][:, 2 * D:]
    bq, bk, bv = sa["bqkv"][:D], sa["bqkv"][D:2 * D], sa["bqkv"][2 * D:]
    t = _ref_layer_norm(
        trg + _ref_attention(trg, trg, wq, bq, wk, bk, wv, bv,
                             sa["wo"], sa["bo"], trg_mask, n_heads),
        p["ln1"]["gamma"], p["ln1"]["beta"], eps)
    wk2, wv2 = ea["wkv"][:, :D], ea["wkv"][:, D:]
    bk2, bv2 = ea["bkv"][:D], ea["bkv"][D:]
    t = _ref_layer_norm(
        t + _ref_attention(t, src, ea["wq"], ea["bq"], wk2, bk2, wv2, bv2,
                           ea["wo"], ea["bo"], cross_mask, n_heads),
        p["ln2"]["gamma"], p["ln2"]["beta"], eps)
    ff = jnp.maximum(t @ pf["w1"] + pf["b1"], 0.0) @ pf["w2"] + pf["b2"]
    return _ref_layer_norm(t + ff, p["ln3"]["gamma"], p["ln3"]["beta"], eps)


# ----------------------------------------------------------------------------
# Deterministic synthetic parameters (shapes match the nn.Module __init__)
# ----------------------------------------------------------------------------
class _KeyGen:
    def __init__(self, key):
        self._key = key

    def __call__(self):
        self._key, sub = jax.random.split(self._key)
        return sub


def init_params(key, hid_dim, pf_dim):
    kg = _KeyGen(key)
    w = lambda din, dout: jax.random.normal(kg(), (din, dout), jnp.float32) * 0.05
    b = lambda n: jax.random.normal(kg(), (n,), jnp.float32) * 0.02
    ln = lambda: {"gamma": jnp.ones((hid_dim,), jnp.float32),
                  "beta": jnp.zeros((hid_dim,), jnp.float32)}
    return {
        "sa": {"wqkv": w(hid_dim, 3 * hid_dim), "bqkv": b(3 * hid_dim),
               "wo": w(hid_dim, hid_dim), "bo": b(hid_dim)},
        "ea": {"wq": w(hid_dim, hid_dim), "bq": b(hid_dim),
               "wkv": w(hid_dim, 2 * hid_dim), "bkv": b(2 * hid_dim),
               "wo": w(hid_dim, hid_dim), "bo": b(hid_dim)},
        "pf": {"w1": w(hid_dim, pf_dim), "b1": b(pf_dim),
               "w2": w(pf_dim, hid_dim), "b2": b(hid_dim)},
        "ln1": ln(), "ln2": ln(), "ln3": ln(),
    }


# ----------------------------------------------------------------------------
# Main
# ----------------------------------------------------------------------------
if __name__ == "__main__":
    B, L_trg, L_src = 2, 8, 16
    hid_dim, n_heads, pf_dim = 32, 4, 64

    key = jax.random.PRNGKey(0)
    k_trg, k_src, k_par = jax.random.split(key, 3)
    trg = jax.random.normal(k_trg, (B, L_trg, hid_dim), jnp.float32)
    src = jax.random.normal(k_src, (B, L_src, hid_dim), jnp.float32)

    # masks follow the usual convention: trg_mask masks query rows,
    # cross_attn_mask = query-row mask * key-column mask
    trg_mask = jnp.ones((B, 1, L_trg, 1), jnp.float32).at[1, 0, -2:, 0].set(0.0)
    src_key_mask = jnp.ones((B, 1, 1, L_src), jnp.float32).at[0, 0, 0, -3:].set(0.0)
    cross_attn_mask = trg_mask * src_key_mask          # (B, 1, L_trg, L_src)

    params = init_params(k_par, hid_dim, pf_dim)

    fwd = jax.jit(functools.partial(decoder_layer, n_heads=n_heads))
    out = fwd(params, trg, src, trg_mask, cross_attn_mask)
    jax.block_until_ready(out)
    assert out.shape == (B, L_trg, hid_dim), out.shape

    ref = _ref_decoder_layer(params, trg, src, trg_mask, cross_attn_mask, n_heads)
    err = float(jnp.max(jnp.abs(out - ref)))
    assert err < 5e-2, f"max |err| = {err}"
    print("KERNEL_OK")
</pallas_src>

<mosaic_0001>
module attributes {stable_mosaic.version = 11 : i64} {
  func.func @_decoder_layer_kernel(%arg0: i32, %arg1: memref<1x8x32xf32, #tpu.memory_space<vmem>>, %arg2: memref<1x16x32xf32, #tpu.memory_space<vmem>>, %arg3: memref<1x8x8xf32, #tpu.memory_space<vmem>>, %arg4: memref<1x8x16xf32, #tpu.memory_space<vmem>>, %arg5: memref<32x96xf32, #tpu.memory_space<vmem>>, %arg6: memref<1x96xf32, #tpu.memory_space<vmem>>, %arg7: memref<32x32xf32, #tpu.memory_space<vmem>>, %arg8: memref<1x32xf32, #tpu.memory_space<vmem>>, %arg9: memref<32x32xf32, #tpu.memory_space<vmem>>, %arg10: memref<1x32xf32, #tpu.memory_space<vmem>>, %arg11: memref<32x64xf32, #tpu.memory_space<vmem>>, %arg12: memref<1x64xf32, #tpu.memory_space<vmem>>, %arg13: memref<32x32xf32, #tpu.memory_space<vmem>>, %arg14: memref<1x32xf32, #tpu.memory_space<vmem>>, %arg15: memref<32x64xf32, #tpu.memory_space<vmem>>, %arg16: memref<1x64xf32, #tpu.memory_space<vmem>>, %arg17: memref<64x32xf32, #tpu.memory_space<vmem>>, %arg18: memref<1x32xf32, #tpu.memory_space<vmem>>, %arg19: memref<1x32xf32, #tpu.memory_space<vmem>>, %arg20: memref<1x32xf32, #tpu.memory_space<vmem>>, %arg21: memref<1x32xf32, #tpu.memory_space<vmem>>, %arg22: memref<1x32xf32, #tpu.memory_space<vmem>>, %arg23: memref<1x32xf32, #tpu.memory_space<vmem>>, %arg24: memref<1x32xf32, #tpu.memory_space<vmem>>, %arg25: memref<1x8x32xf32, #tpu.memory_space<vmem>>) attributes {dimension_semantics = [#tpu.dimension_semantics<parallel>], iteration_bounds = array<i64: 2>, scalar_prefetch = 0 : i64, scratch_operands = 0 : i64, tpu.core_type = #tpu.core_type<tc>, window_params = [{transform_indices = @transform_0, window_bounds = array<i64: 1, 8, 32>}, {transform_indices = @transform_1, window_bounds = array<i64: 1, 16, 32>}, {transform_indices = @transform_2, window_bounds = array<i64: 1, 8, 8>}, {transform_indices = @transform_3, window_bounds = array<i64: 1, 8, 16>}, {pipeline_mode = #tpu.pipeline_mode<synchronous>, transform_indices = @transform_4, window_bounds = array<i64: 32, 96>}, {pipeline_mode = #tpu.pipeline_mode<synchronous>, transform_indices = @transform_5, window_bounds = array<i64: 1, 96>}, {pipeline_mode = #tpu.pipeline_mode<synchronous>, transform_indices = @transform_6, window_bounds = array<i64: 32, 32>}, {pipeline_mode = #tpu.pipeline_mode<synchronous>, transform_indices = @transform_7, window_bounds = array<i64: 1, 32>}, {pipeline_mode = #tpu.pipeline_mode<synchronous>, transform_indices = @transform_8, window_bounds = array<i64: 32, 32>}, {pipeline_mode = #tpu.pipeline_mode<synchronous>, transform_indices = @transform_9, window_bounds = array<i64: 1, 32>}, {pipeline_mode = #tpu.pipeline_mode<synchronous>, transform_indices = @transform_10, window_bounds = array<i64: 32, 64>}, {pipeline_mode = #tpu.pipeline_mode<synchronous>, transform_indices = @transform_11, window_bounds = array<i64: 1, 64>}, {pipeline_mode = #tpu.pipeline_mode<synchronous>, transform_indices = @transform_12, window_bounds = array<i64: 32, 32>}, {pipeline_mode = #tpu.pipeline_mode<synchronous>, transform_indices = @transform_13, window_bounds = array<i64: 1, 32>}, {pipeline_mode = #tpu.pipeline_mode<synchronous>, transform_indices = @transform_14, window_bounds = array<i64: 32, 64>}, {pipeline_mode = #tpu.pipeline_mode<synchronous>, transform_indices = @transform_15, window_bounds = array<i64: 1, 64>}, {pipeline_mode = #tpu.pipeline_mode<synchronous>, transform_indices = @transform_16, window_bounds = array<i64: 64, 32>}, {pipeline_mode = #tpu.pipeline_mode<synchronous>, transform_indices = @transform_17, window_bounds = array<i64: 1, 32>}, {pipeline_mode = #tpu.pipeline_mode<synchronous>, transform_indices = @transform_18, window_bounds = array<i64: 1, 32>}, {pipeline_mode = #tpu.pipeline_mode<synchronous>, transform_indices = @transform_19, window_bounds = array<i64: 1, 32>}, {pipeline_mode = #tpu.pipeline_mode<synchronous>, transform_indices = @transform_20, window_bounds = array<i64: 1, 32>}, {pipeline_mode = #tpu.pipeline_mode<synchronous>, transform_indices = @transform_21, window_bounds = array<i64: 1, 32>}, {pipeline_mode = #tpu.pipeline_mode<synchronous>, transform_indices = @transform_22, window_bounds = array<i64: 1, 32>}, {pipeline_mode = #tpu.pipeline_mode<synchronous>, transform_indices = @transform_23, window_bounds = array<i64: 1, 32>}, {transform_indices = @transform_24, window_bounds = array<i64: 1, 8, 32>}]} {
    %c0 = arith.constant 0 : index
    %c0_0 = arith.constant 0 : index
    %c0_1 = arith.constant 0 : index
    %0 = vector.load %arg1[%c0, %c0_0, %c0_1] : memref<1x8x32xf32, #tpu.memory_space<vmem>>, vector<1x8x32xf32>
    %1 = vector.shape_cast %0 : vector<1x8x32xf32> to vector<8x32xf32>
    %c0_2 = arith.constant 0 : index
    %c0_3 = arith.constant 0 : index
    %c0_4 = arith.constant 0 : index
    %2 = vector.load %arg2[%c0_2, %c0_3, %c0_4] : memref<1x16x32xf32, #tpu.memory_space<vmem>>, vector<1x16x32xf32>
    %3 = vector.shape_cast %2 : vector<1x16x32xf32> to vector<16x32xf32>
    %c0_5 = arith.constant 0 : index
    %c0_6 = arith.constant 0 : index
    %4 = vector.load %arg5[%c0_5, %c0_6] : memref<32x96xf32, #tpu.memory_space<vmem>>, vector<32x96xf32>
    %cst = arith.constant dense<0.000000e+00> : vector<8x96xf32>
    %5 = tpu.matmul %1, %4, %cst {dimension_numbers = #tpu.dot_dimension_numbers<[1], [0], [0], [1], [0, 0, 1, 1], [], []>} : vector<8x32xf32>, vector<32x96xf32>, vector<8x96xf32> -> vector<8x96xf32>
    %c0_7 = arith.constant 0 : index
    %c0_8 = arith.constant 0 : index
    %6 = vector.load %arg6[%c0_7, %c0_8] : memref<1x96xf32, #tpu.memory_space<vmem>>, vector<1x96xf32>
    %7 = vector.broadcast %6 : vector<1x96xf32> to vector<8x96xf32>
    %8 = arith.addf %5, %7 : vector<8x96xf32>
    %9 = vector.extract_strided_slice %8 {offsets = [0, 0], sizes = [8, 32], strides = [1, 1]} : vector<8x96xf32> to vector<8x32xf32>
    %10 = vector.extract_strided_slice %8 {offsets = [0, 32], sizes = [8, 32], strides = [1, 1]} : vector<8x96xf32> to vector<8x32xf32>
    %11 = vector.extract_strided_slice %8 {offsets = [0, 64], sizes = [8, 32], strides = [1, 1]} : vector<8x96xf32> to vector<8x32xf32>
    %c0_9 = arith.constant 0 : index
    %c0_10 = arith.constant 0 : index
    %c0_11 = arith.constant 0 : index
    %12 = vector.load %arg3[%c0_9, %c0_10, %c0_11] : memref<1x8x8xf32, #tpu.memory_space<vmem>>, vector<1x8x8xf32>
    %13 = vector.shape_cast %12 : vector<1x8x8xf32> to vector<8x8xf32>
    %cst_12 = arith.constant 0.353553385 : f32
    %14 = vector.broadcast %cst_12 : f32 to vector<8x32xf32>
    %15 = arith.mulf %9, %14 : vector<8x32xf32>
    %cst_13 = arith.constant 5.000000e-01 : f32
    %16 = vector.broadcast %cst_13 : f32 to vector<8x8xf32>
    %17 = arith.cmpf ogt, %13, %16 : vector<8x8xf32>
    %18 = vector.extract_strided_slice %15 {offsets = [0, 0], sizes = [8, 8], strides = [1, 1]} : vector<8x32xf32> to vector<8x8xf32>
    %19 = vector.extract_strided_slice %10 {offsets = [0, 0], sizes = [8, 8], strides = [1, 1]} : vector<8x32xf32> to vector<8x8xf32>
    %20 = vector.extract_strided_slice %11 {offsets = [0, 0], sizes = [8, 8], strides = [1, 1]} : vector<8x32xf32> to vector<8x8xf32>
    %cst_14 = arith.constant dense<0.000000e+00> : vector<8x8xf32>
    %21 = tpu.matmul %18, %19, %cst_14 {dimension_numbers = #tpu.dot_dimension_numbers<[1], [1], [0], [0], [0, 0, 1, 0], [], []>} : vector<8x8xf32>, vector<8x8xf32>, vector<8x8xf32> -> vector<8x8xf32>
    %cst_15 = arith.constant -1.000000e+10 : f32
    %22 = vector.broadcast %cst_15 : f32 to vector<8x8xf32>
    %23 = arith.select %17, %22, %21 : vector<8x8xi1>, vector<8x8xf32>
    %cst_16 = arith.constant dense<0xFF800000> : vector<8xf32>
    %24 = vector.multi_reduction <maximumf>, %23, %cst_16 [1] : vector<8x8xf32> to vector<8xf32>
    %25 = vector.shape_cast %24 : vector<8xf32> to vector<8x1xf32>
    %26 = vector.broadcast %25 : vector<8x1xf32> to vector<8x8xf32>
    %27 = arith.subf %23, %26 : vector<8x8xf32>
    %28 = math.exp %27 : vector<8x8xf32>
    %cst_17 = arith.constant dense<0.000000e+00> : vector<8xf32>
    %29 = vector.multi_reduction <add>, %28, %cst_17 [1] : vector<8x8xf32> to vector<8xf32>
    %30 = vector.shape_cast %29 : vector<8xf32> to vector<8x1xf32>
    %31 = tpu.reciprocal %30 {approx = true} : vector<8x1xf32> -> vector<8x1xf32>
    %32 = vector.broadcast %31 : vector<8x1xf32> to vector<8x8xf32>
    %33 = arith.mulf %28, %32 : vector<8x8xf32>
    %cst_18 = arith.constant dense<0.000000e+00> : vector<8x8xf32>
    %34 = tpu.matmul %33, %20, %cst_18 {dimension_numbers = #tpu.dot_dimension_numbers<[1], [0], [0], [1], [0, 0, 1, 1], [], []>} : vector<8x8xf32>, vector<8x8xf32>, vector<8x8xf32> -> vector<8x8xf32>
    %35 = vector.extract_strided_slice %15 {offsets = [0, 8], sizes = [8, 8], strides = [1, 1]} : vector<8x32xf32> to vector<8x8xf32>
    %36 = vector.extract_strided_slice %10 {offsets = [0, 8], sizes = [8, 8], strides = [1, 1]} : vector<8x32xf32> to vector<8x8xf32>
    %37 = vector.extract_strided_slice %11 {offsets = [0, 8], sizes = [8, 8], strides = [1, 1]} : vector<8x32xf32> to vector<8x8xf32>
    %cst_19 = arith.constant dense<0.000000e+00> : vector<8x8xf32>
    %38 = tpu.matmul %35, %36, %cst_19 {dimension_numbers = #tpu.dot_dimension_numbers<[1], [1], [0], [0], [0, 0, 1, 0], [], []>} : vector<8x8xf32>, vector<8x8xf32>, vector<8x8xf32> -> vector<8x8xf32>
    %cst_20 = arith.constant -1.000000e+10 : f32
    %39 = vector.broadcast %cst_20 : f32 to vector<8x8xf32>
    %40 = arith.select %17, %39, %38 : vector<8x8xi1>, vector<8x8xf32>
    %cst_21 = arith.constant dense<0xFF800000> : vector<8xf32>
    %41 = vector.multi_reduction <maximumf>, %40, %cst_21 [1] : vector<8x8xf32> to vector<8xf32>
    %42 = vector.shape_cast %41 : vector<8xf32> to vector<8x1xf32>
    %43 = vector.broadcast %42 : vector<8x1xf32> to vector<8x8xf32>
    %44 = arith.subf %40, %43 : vector<8x8xf32>
    %45 = math.exp %44 : vector<8x8xf32>
    %cst_22 = arith.constant dense<0.000000e+00> : vector<8xf32>
    %46 = vector.multi_reduction <add>, %45, %cst_22 [1] : vector<8x8xf32> to vector<8xf32>
    %47 = vector.shape_cast %46 : vector<8xf32> to vector<8x1xf32>
    %48 = tpu.reciprocal %47 {approx = true} : vector<8x1xf32> -> vector<8x1xf32>
    %49 = vector.broadcast %48 : vector<8x1xf32> to vector<8x8xf32>
    %50 = arith.mulf %45, %49 : vector<8x8xf32>
    %cst_23 = arith.constant dense<0.000000e+00> : vector<8x8xf32>
    %51 = tpu.matmul %50, %37, %cst_23 {dimension_numbers = #tpu.dot_dimension_numbers<[1], [0], [0], [1], [0, 0, 1, 1], [], []>} : vector<8x8xf32>, vector<8x8xf32>, vector<8x8xf32> -> vector<8x8xf32>
    %52 = vector.extract_strided_slice %15 {offsets = [0, 16], sizes = [8, 8], strides = [1, 1]} : vector<8x32xf32> to vector<8x8xf32>
    %53 = vector.extract_strided_slice %10 {offsets = [0, 16], sizes = [8, 8], strides = [1, 1]} : vector<8x32xf32> to vector<8x8xf32>
    %54 = vector.extract_strided_slice %11 {offsets = [0, 16], sizes = [8, 8], strides = [1, 1]} : vector<8x32xf32> to vector<8x8xf32>
    %cst_24 = arith.constant dense<0.000000e+00> : vector<8x8xf32>
    %55 = tpu.matmul %52, %53, %cst_24 {dimension_numbers = #tpu.dot_dimension_numbers<[1], [1], [0], [0], [0, 0, 1, 0], [], []>} : vector<8x8xf32>, vector<8x8xf32>, vector<8x8xf32> -> vector<8x8xf32>
    %cst_25 = arith.constant -1.000000e+10 : f32
    %56 = vector.broadcast %cst_25 : f32 to vector<8x8xf32>
    %57 = arith.select %17, %56, %55 : vector<8x8xi1>, vector<8x8xf32>
    %cst_26 = arith.constant dense<0xFF800000> : vector<8xf32>
    %58 = vector.multi_reduction <maximumf>, %57, %cst_26 [1] : vector<8x8xf32> to vector<8xf32>
    %59 = vector.shape_cast %58 : vector<8xf32> to vector<8x1xf32>
    %60 = vector.broadcast %59 : vector<8x1xf32> to vector<8x8xf32>
    %61 = arith.subf %57, %60 : vector<8x8xf32>
    %62 = math.exp %61 : vector<8x8xf32>
    %cst_27 = arith.constant dense<0.000000e+00> : vector<8xf32>
    %63 = vector.multi_reduction <add>, %62, %cst_27 [1] : vector<8x8xf32> to vector<8xf32>
    %64 = vector.shape_cast %63 : vector<8xf32> to vector<8x1xf32>
    %65 = tpu.reciprocal %64 {approx = true} : vector<8x1xf32> -> vector<8x1xf32>
    %66 = vector.broadcast %65 : vector<8x1xf32> to vector<8x8xf32>
    %67 = arith.mulf %62, %66 : vector<8x8xf32>
    %cst_28 = arith.constant dense<0.000000e+00> : vector<8x8xf32>
    %68 = tpu.matmul %67, %54, %cst_28 {dimension_numbers = #tpu.dot_dimension_numbers<[1], [0], [0], [1], [0, 0, 1, 1], [], []>} : vector<8x8xf32>, vector<8x8xf32>, vector<8x8xf32> -> vector<8x8xf32>
    %69 = vector.extract_strided_slice %15 {offsets = [0, 24], sizes = [8, 8], strides = [1, 1]} : vector<8x32xf32> to vector<8x8xf32>
    %70 = vector.extract_strided_slice %10 {offsets = [0, 24], sizes = [8, 8], strides = [1, 1]} : vector<8x32xf32> to vector<8x8xf32>
    %71 = vector.extract_strided_slice %11 {offsets = [0, 24], sizes = [8, 8], strides = [1, 1]} : vector<8x32xf32> to vector<8x8xf32>
    %cst_29 = arith.constant dense<0.000000e+00> : vector<8x8xf32>
    %72 = tpu.matmul %69, %70, %cst_29 {dimension_numbers = #tpu.dot_dimension_numbers<[1], [1], [0], [0], [0, 0, 1, 0], [], []>} : vector<8x8xf32>, vector<8x8xf32>, vector<8x8xf32> -> vector<8x8xf32>
    %cst_30 = arith.constant -1.000000e+10 : f32
    %73 = vector.broadcast %cst_30 : f32 to vector<8x8xf32>
    %74 = arith.select %17, %73, %72 : vector<8x8xi1>, vector<8x8xf32>
    %cst_31 = arith.constant dense<0xFF800000> : vector<8xf32>
    %75 = vector.multi_reduction <maximumf>, %74, %cst_31 [1] : vector<8x8xf32> to vector<8xf32>
    %76 = vector.shape_cast %75 : vector<8xf32> to vector<8x1xf32>
    %77 = vector.broadcast %76 : vector<8x1xf32> to vector<8x8xf32>
    %78 = arith.subf %74, %77 : vector<8x8xf32>
    %79 = math.exp %78 : vector<8x8xf32>
    %cst_32 = arith.constant dense<0.000000e+00> : vector<8xf32>
    %80 = vector.multi_reduction <add>, %79, %cst_32 [1] : vector<8x8xf32> to vector<8xf32>
    %81 = vector.shape_cast %80 : vector<8xf32> to vector<8x1xf32>
    %82 = tpu.reciprocal %81 {approx = true} : vector<8x1xf32> -> vector<8x1xf32>
    %83 = vector.broadcast %82 : vector<8x1xf32> to vector<8x8xf32>
    %84 = arith.mulf %79, %83 : vector<8x8xf32>
    %cst_33 = arith.constant dense<0.000000e+00> : vector<8x8xf32>
    %85 = tpu.matmul %84, %71, %cst_33 {dimension_numbers = #tpu.dot_dimension_numbers<[1], [0], [0], [1], [0, 0, 1, 1], [], []>} : vector<8x8xf32>, vector<8x8xf32>, vector<8x8xf32> -> vector<8x8xf32>
    %86 = tpu.concatenate %34, %51, %68, %85 in 1 : vector<8x8xf32>, vector<8x8xf32>, vector<8x8xf32>, vector<8x8xf32> -> vector<8x32xf32>
    %c0_34 = arith.constant 0 : index
    %c0_35 = arith.constant 0 : index
    %87 = vector.load %arg7[%c0_34, %c0_35] : memref<32x32xf32, #tpu.memory_space<vmem>>, vector<32x32xf32>
    %cst_36 = arith.constant dense<0.000000e+00> : vector<8x32xf32>
    %88 = tpu.matmul %86, %87, %cst_36 {dimension_numbers = #tpu.dot_dimension_numbers<[1], [0], [0], [1], [0, 0, 1, 1], [], []>} : vector<8x32xf32>, vector<32x32xf32>, vector<8x32xf32> -> vector<8x32xf32>
    %c0_37 = arith.constant 0 : index
    %c0_38 = arith.constant 0 : index
    %89 = vector.load %arg8[%c0_37, %c0_38] : memref<1x32xf32, #tpu.memory_space<vmem>>, vector<1x32xf32>
    %90 = vector.broadcast %89 : vector<1x32xf32> to vector<8x32xf32>
    %91 = arith.addf %88, %90 : vector<8x32xf32>
    %92 = arith.addf %1, %91 : vector<8x32xf32>
    %c0_39 = arith.constant 0 : index
    %c0_40 = arith.constant 0 : index
    %93 = vector.load %arg19[%c0_39, %c0_40] : memref<1x32xf32, #tpu.memory_space<vmem>>, vector<1x32xf32>
    %c0_41 = arith.constant 0 : index
    %c0_42 = arith.constant 0 : index
    %94 = vector.load %arg20[%c0_41, %c0_42] : memref<1x32xf32, #tpu.memory_space<vmem>>, vector<1x32xf32>
    %cst_43 = arith.constant dense<0.000000e+00> : vector<8xf32>
    %95 = vector.multi_reduction <add>, %92, %cst_43 [1] : vector<8x32xf32> to vector<8xf32>
    %96 = vector.shape_cast %95 : vector<8xf32> to vector<8x1xf32>
    %cst_44 = arith.constant 3.200000e+01 : f32
    %97 = vector.broadcast %cst_44 : f32 to vector<8x1xf32>
    %98 = arith.divf %96, %97 : vector<8x1xf32>
    %99 = vector.broadcast %98 : vector<8x1xf32> to vector<8x32xf32>
    %100 = arith.subf %92, %99 : vector<8x32xf32>
    %101 = arith.mulf %100, %100 : vector<8x32xf32>
    %cst_45 = arith.constant dense<0.000000e+00> : vector<8xf32>
    %102 = vector.multi_reduction <add>, %101, %cst_45 [1] : vector<8x32xf32> to vector<8xf32>
    %103 = vector.shape_cast %102 : vector<8xf32> to vector<8x1xf32>
    %cst_46 = arith.constant 0.0322580636 : f32
    %104 = vector.broadcast %cst_46 : f32 to vector<8x1xf32>
    %105 = arith.mulf %103, %104 : vector<8x1xf32>
    %106 = math.sqrt %105 : vector<8x1xf32>
    %cst_47 = arith.constant 9.99999996E-13 : f32
    %107 = vector.broadcast %cst_47 : f32 to vector<8x1xf32>
    %108 = arith.addf %106, %107 : vector<8x1xf32>
    %109 = tpu.reciprocal %108 {approx = true} : vector<8x1xf32> -> vector<8x1xf32>
    %110 = vector.broadcast %109 : vector<8x1xf32> to vector<8x32xf32>
    %111 = arith.mulf %100, %110 : vector<8x32xf32>
    %112 = vector.broadcast %93 : vector<1x32xf32> to vector<8x32xf32>
    %113 = arith.mulf %112, %111 : vector<8x32xf32>
    %114 = vector.broadcast %94 : vector<1x32xf32> to vector<8x32xf32>
    %115 = arith.addf %113, %114 : vector<8x32xf32>
    %c0_48 = arith.constant 0 : index
    %c0_49 = arith.constant 0 : index
    %116 = vector.load %arg9[%c0_48, %c0_49] : memref<32x32xf32, #tpu.memory_space<vmem>>, vector<32x32xf32>
    %cst_50 = arith.constant dense<0.000000e+00> : vector<8x32xf32>
    %117 = tpu.matmul %115, %116, %cst_50 {dimension_numbers = #tpu.dot_dimension_numbers<[1], [0], [0], [1], [0, 0, 1, 1], [], []>} : vector<8x32xf32>, vector<32x32xf32>, vector<8x32xf32> -> vector<8x32xf32>
    %c0_51 = arith.constant 0 : index
    %c0_52 = arith.constant 0 : index
    %118 = vector.load %arg10[%c0_51, %c0_52] : memref<1x32xf32, #tpu.memory_space<vmem>>, vector<1x32xf32>
    %119 = vector.broadcast %118 : vector<1x32xf32> to vector<8x32xf32>
    %120 = arith.addf %117, %119 : vector<8x32xf32>
    %c0_53 = arith.constant 0 : index
    %c0_54 = arith.constant 0 : index
    %121 = vector.load %arg11[%c0_53, %c0_54] : memref<32x64xf32, #tpu.memory_space<vmem>>, vector<32x64xf32>
    %cst_55 = arith.constant dense<0.000000e+00> : vector<16x64xf32>
    %122 = tpu.matmul %3, %121, %cst_55 {dimension_numbers = #tpu.dot_dimension_numbers<[1], [0], [0], [1], [0, 0, 1, 1], [], []>} : vector<16x32xf32>, vector<32x64xf32>, vector<16x64xf32> -> vector<16x64xf32>
    %c0_56 = arith.constant 0 : index
    %c0_57 = arith.constant 0 : index
    %123 = vector.load %arg12[%c0_56, %c0_57] : memref<1x64xf32, #tpu.memory_space<vmem>>, vector<1x64xf32>
    %124 = vector.broadcast %123 : vector<1x64xf32> to vector<16x64xf32>
    %125 = arith.addf %122, %124 : vector<16x64xf32>
    %126 = vector.extract_strided_slice %125 {offsets = [0, 0], sizes = [16, 32], strides = [1, 1]} : vector<16x64xf32> to vector<16x32xf32>
    %127 = vector.extract_strided_slice %125 {offsets = [0, 32], sizes = [16, 32], strides = [1, 1]} : vector<16x64xf32> to vector<16x32xf32>
    %c0_58 = arith.constant 0 : index
    %c0_59 = arith.constant 0 : index
    %c0_60 = arith.constant 0 : index
    %128 = vector.load %arg4[%c0_58, %c0_59, %c0_60] : memref<1x8x16xf32, #tpu.memory_space<vmem>>, vector<1x8x16xf32>
    %129 = vector.shape_cast %128 : vector<1x8x16xf32> to vector<8x16xf32>
    %cst_61 = arith.constant 0.353553385 : f32
    %130 = vector.broadcast %cst_61 : f32 to vector<8x32xf32>
    %131 = arith.mulf %120, %130 : vector<8x32xf32>
    %cst_62 = arith.constant 5.000000e-01 : f32
    %132 = vector.broadcast %cst_62 : f32 to vector<8x16xf32>
    %133 = arith.cmpf ogt, %129, %132 : vector<8x16xf32>
    %134 = vector.extract_strided_slice %131 {offsets = [0, 0], sizes = [8, 8], strides = [1, 1]} : vector<8x32xf32> to vector<8x8xf32>
    %135 = vector.extract_strided_slice %126 {offsets = [0, 0], sizes = [16, 8], strides = [1, 1]} : vector<16x32xf32> to vector<16x8xf32>
    %136 = vector.extract_strided_slice %127 {offsets = [0, 0], sizes = [16, 8], strides = [1, 1]} : vector<16x32xf32> to vector<16x8xf32>
    %cst_63 = arith.constant dense<0.000000e+00> : vector<8x16xf32>
    %137 = tpu.matmul %134, %135, %cst_63 {dimension_numbers = #tpu.dot_dimension_numbers<[1], [1], [0], [0], [0, 0, 1, 0], [], []>} : vector<8x8xf32>, vector<16x8xf32>, vector<8x16xf32> -> vector<8x16xf32>
    %cst_64 = arith.constant -1.000000e+10 : f32
    %138 = vector.broadcast %cst_64 : f32 to vector<8x16xf32>
    %139 = arith.select %133, %138, %137 : vector<8x16xi1>, vector<8x16xf32>
    %cst_65 = arith.constant dense<0xFF800000> : vector<8xf32>
    %140 = vector.multi_reduction <maximumf>, %139, %cst_65 [1] : vector<8x16xf32> to vector<8xf32>
    %141 = vector.shape_cast %140 : vector<8xf32> to vector<8x1xf32>
    %142 = vector.broadcast %141 : vector<8x1xf32> to vector<8x16xf32>
    %143 = arith.subf %139, %142 : vector<8x16xf32>
    %144 = math.exp %143 : vector<8x16xf32>
    %cst_66 = arith.constant dense<0.000000e+00> : vector<8xf32>
    %145 = vector.multi_reduction <add>, %144, %cst_66 [1] : vector<8x16xf32> to vector<8xf32>
    %146 = vector.shape_cast %145 : vector<8xf32> to vector<8x1xf32>
    %147 = tpu.reciprocal %146 {approx = true} : vector<8x1xf32> -> vector<8x1xf32>
    %148 = vector.broadcast %147 : vector<8x1xf32> to vector<8x16xf32>
    %149 = arith.mulf %144, %148 : vector<8x16xf32>
    %cst_67 = arith.constant dense<0.000000e+00> : vector<8x8xf32>
    %150 = tpu.matmul %149, %136, %cst_67 {dimension_numbers = #tpu.dot_dimension_numbers<[1], [0], [0], [1], [0, 0, 1, 1], [], []>} : vector<8x16xf32>, vector<16x8xf32>, vector<8x8xf32> -> vector<8x8xf32>
    %151 = vector.extract_strided_slice %131 {offsets = [0, 8], sizes = [8, 8], strides = [1, 1]} : vector<8x32xf32> to vector<8x8xf32>
    %152 = vector.extract_strided_slice %126 {offsets = [0, 8], sizes = [16, 8], strides = [1, 1]} : vector<16x32xf32> to vector<16x8xf32>
    %153 = vector.extract_strided_slice %127 {offsets = [0, 8], sizes = [16, 8], strides = [1, 1]} : vector<16x32xf32> to vector<16x8xf32>
    %cst_68 = arith.constant dense<0.000000e+00> : vector<8x16xf32>
    %154 = tpu.matmul %151, %152, %cst_68 {dimension_numbers = #tpu.dot_dimension_numbers<[1], [1], [0], [0], [0, 0, 1, 0], [], []>} : vector<8x8xf32>, vector<16x8xf32>, vector<8x16xf32> -> vector<8x16xf32>
    %cst_69 = arith.constant -1.000000e+10 : f32
    %155 = vector.broadcast %cst_69 : f32 to vector<8x16xf32>
    %156 = arith.select %133, %155, %154 : vector<8x16xi1>, vector<8x16xf32>
    %cst_70 = arith.constant dense<0xFF800000> : vector<8xf32>
    %157 = vector.multi_reduction <maximumf>, %156, %cst_70 [1] : vector<8x16xf32> to vector<8xf32>
    %158 = vector.shape_cast %157 : vector<8xf32> to vector<8x1xf32>
    %159 = vector.broadcast %158 : vector<8x1xf32> to vector<8x16xf32>
    %160 = arith.subf %156, %159 : vector<8x16xf32>
    %161 = math.exp %160 : vector<8x16xf32>
    %cst_71 = arith.constant dense<0.000000e+00> : vector<8xf32>
    %162 = vector.multi_reduction <add>, %161, %cst_71 [1] : vector<8x16xf32> to vector<8xf32>
    %163 = vector.shape_cast %162 : vector<8xf32> to vector<8x1xf32>
    %164 = tpu.reciprocal %163 {approx = true} : vector<8x1xf32> -> vector<8x1xf32>
    %165 = vector.broadcast %164 : vector<8x1xf32> to vector<8x16xf32>
    %166 = arith.mulf %161, %165 : vector<8x16xf32>
    %cst_72 = arith.constant dense<0.000000e+00> : vector<8x8xf32>
    %167 = tpu.matmul %166, %153, %cst_72 {dimension_numbers = #tpu.dot_dimension_numbers<[1], [0], [0], [1], [0, 0, 1, 1], [], []>} : vector<8x16xf32>, vector<16x8xf32>, vector<8x8xf32> -> vector<8x8xf32>
    %168 = vector.extract_strided_slice %131 {offsets = [0, 16], sizes = [8, 8], strides = [1, 1]} : vector<8x32xf32> to vector<8x8xf32>
    %169 = vector.extract_strided_slice %126 {offsets = [0, 16], sizes = [16, 8], strides = [1, 1]} : vector<16x32xf32> to vector<16x8xf32>
    %170 = vector.extract_strided_slice %127 {offsets = [0, 16], sizes = [16, 8], strides = [1, 1]} : vector<16x32xf32> to vector<16x8xf32>
    %cst_73 = arith.constant dense<0.000000e+00> : vector<8x16xf32>
    %171 = tpu.matmul %168, %169, %cst_73 {dimension_numbers = #tpu.dot_dimension_numbers<[1], [1], [0], [0], [0, 0, 1, 0], [], []>} : vector<8x8xf32>, vector<16x8xf32>, vector<8x16xf32> -> vector<8x16xf32>
    %cst_74 = arith.constant -1.000000e+10 : f32
    %172 = vector.broadcast %cst_74 : f32 to vector<8x16xf32>
    %173 = arith.select %133, %172, %171 : vector<8x16xi1>, vector<8x16xf32>
    %cst_75 = arith.constant dense<0xFF800000> : vector<8xf32>
    %174 = vector.multi_reduction <maximumf>, %173, %cst_75 [1] : vector<8x16xf32> to vector<8xf32>
    %175 = vector.shape_cast %174 : vector<8xf32> to vector<8x1xf32>
    %176 = vector.broadcast %175 : vector<8x1xf32> to vector<8x16xf32>
    %177 = arith.subf %173, %176 : vector<8x16xf32>
    %178 = math.exp %177 : vector<8x16xf32>
    %cst_76 = arith.constant dense<0.000000e+00> : vector<8xf32>
    %179 = vector.multi_reduction <add>, %178, %cst_76 [1] : vector<8x16xf32> to vector<8xf32>
    %180 = vector.shape_cast %179 : vector<8xf32> to vector<8x1xf32>
    %181 = tpu.reciprocal %180 {approx = true} : vector<8x1xf32> -> vector<8x1xf32>
    %182 = vector.broadcast %181 : vector<8x1xf32> to vector<8x16xf32>
    %183 = arith.mulf %178, %182 : vector<8x16xf32>
    %cst_77 = arith.constant dense<0.000000e+00> : vector<8x8xf32>
    %184 = tpu.matmul %183, %170, %cst_77 {dimension_numbers = #tpu.dot_dimension_numbers<[1], [0], [0], [1], [0, 0, 1, 1], [], []>} : vector<8x16xf32>, vector<16x8xf32>, vector<8x8xf32> -> vector<8x8xf32>
    %185 = vector.extract_strided_slice %131 {offsets = [0, 24], sizes = [8, 8], strides = [1, 1]} : vector<8x32xf32> to vector<8x8xf32>
    %186 = vector.extract_strided_slice %126 {offsets = [0, 24], sizes = [16, 8], strides = [1, 1]} : vector<16x32xf32> to vector<16x8xf32>
    %187 = vector.extract_strided_slice %127 {offsets = [0, 24], sizes = [16, 8], strides = [1, 1]} : vector<16x32xf32> to vector<16x8xf32>
    %cst_78 = arith.constant dense<0.000000e+00> : vector<8x16xf32>
    %188 = tpu.matmul %185, %186, %cst_78 {dimension_numbers = #tpu.dot_dimension_numbers<[1], [1], [0], [0], [0, 0, 1, 0], [], []>} : vector<8x8xf32>, vector<16x8xf32>, vector<8x16xf32> -> vector<8x16xf32>
    %cst_79 = arith.constant -1.000000e+10 : f32
    %189 = vector.broadcast %cst_79 : f32 to vector<8x16xf32>
    %190 = arith.select %133, %189, %188 : vector<8x16xi1>, vector<8x16xf32>
    %cst_80 = arith.constant dense<0xFF800000> : vector<8xf32>
    %191 = vector.multi_reduction <maximumf>, %190, %cst_80 [1] : vector<8x16xf32> to vector<8xf32>
    %192 = vector.shape_cast %191 : vector<8xf32> to vector<8x1xf32>
    %193 = vector.broadcast %192 : vector<8x1xf32> to vector<8x16xf32>
    %194 = arith.subf %190, %193 : vector<8x16xf32>
    %195 = math.exp %194 : vector<8x16xf32>
    %cst_81 = arith.constant dense<0.000000e+00> : vector<8xf32>
    %196 = vector.multi_reduction <add>, %195, %cst_81 [1] : vector<8x16xf32> to vector<8xf32>
    %197 = vector.shape_cast %196 : vector<8xf32> to vector<8x1xf32>
    %198 = tpu.reciprocal %197 {approx = true} : vector<8x1xf32> -> vector<8x1xf32>
    %199 = vector.broadcast %198 : vector<8x1xf32> to vector<8x16xf32>
    %200 = arith.mulf %195, %199 : vector<8x16xf32>
    %cst_82 = arith.constant dense<0.000000e+00> : vector<8x8xf32>
    %201 = tpu.matmul %200, %187, %cst_82 {dimension_numbers = #tpu.dot_dimension_numbers<[1], [0], [0], [1], [0, 0, 1, 1], [], []>} : vector<8x16xf32>, vector<16x8xf32>, vector<8x8xf32> -> vector<8x8xf32>
    %202 = tpu.concatenate %150, %167, %184, %201 in 1 : vector<8x8xf32>, vector<8x8xf32>, vector<8x8xf32>, vector<8x8xf32> -> vector<8x32xf32>
    %c0_83 = arith.constant 0 : index
    %c0_84 = arith.constant 0 : index
    %203 = vector.load %arg13[%c0_83, %c0_84] : memref<32x32xf32, #tpu.memory_space<vmem>>, vector<32x32xf32>
    %cst_85 = arith.constant dense<0.000000e+00> : vector<8x32xf32>
    %204 = tpu.matmul %202, %203, %cst_85 {dimension_numbers = #tpu.dot_dimension_numbers<[1], [0], [0], [1], [0, 0, 1, 1], [], []>} : vector<8x32xf32>, vector<32x32xf32>, vector<8x32xf32> -> vector<8x32xf32>
    %c0_86 = arith.constant 0 : index
    %c0_87 = arith.constant 0 : index
    %205 = vector.load %arg14[%c0_86, %c0_87] : memref<1x32xf32, #tpu.memory_space<vmem>>, vector<1x32xf32>
    %206 = vector.broadcast %205 : vector<1x32xf32> to vector<8x32xf32>
    %207 = arith.addf %204, %206 : vector<8x32xf32>
    %208 = arith.addf %115, %207 : vector<8x32xf32>
    %c0_88 = arith.constant 0 : index
    %c0_89 = arith.constant 0 : index
    %209 = vector.load %arg21[%c0_88, %c0_89] : memref<1x32xf32, #tpu.memory_space<vmem>>, vector<1x32xf32>
    %c0_90 = arith.constant 0 : index
    %c0_91 = arith.constant 0 : index
    %210 = vector.load %arg22[%c0_90, %c0_91] : memref<1x32xf32, #tpu.memory_space<vmem>>, vector<1x32xf32>
    %cst_92 = arith.constant dense<0.000000e+00> : vector<8xf32>
    %211 = vector.multi_reduction <add>, %208, %cst_92 [1] : vector<8x32xf32> to vector<8xf32>
    %212 = vector.shape_cast %211 : vector<8xf32> to vector<8x1xf32>
    %cst_93 = arith.constant 3.200000e+01 : f32
    %213 = vector.broadcast %cst_93 : f32 to vector<8x1xf32>
    %214 = arith.divf %212, %213 : vector<8x1xf32>
    %215 = vector.broadcast %214 : vector<8x1xf32> to vector<8x32xf32>
    %216 = arith.subf %208, %215 : vector<8x32xf32>
    %217 = arith.mulf %216, %216 : vector<8x32xf32>
    %cst_94 = arith.constant dense<0.000000e+00> : vector<8xf32>
    %218 = vector.multi_reduction <add>, %217, %cst_94 [1] : vector<8x32xf32> to vector<8xf32>
    %219 = vector.shape_cast %218 : vector<8xf32> to vector<8x1xf32>
    %cst_95 = arith.constant 0.0322580636 : f32
    %220 = vector.broadcast %cst_95 : f32 to vector<8x1xf32>
    %221 = arith.mulf %219, %220 : vector<8x1xf32>
    %222 = math.sqrt %221 : vector<8x1xf32>
    %cst_96 = arith.constant 9.99999996E-13 : f32
    %223 = vector.broadcast %cst_96 : f32 to vector<8x1xf32>
    %224 = arith.addf %222, %223 : vector<8x1xf32>
    %225 = tpu.reciprocal %224 {approx = true} : vector<8x1xf32> -> vector<8x1xf32>
    %226 = vector.broadcast %225 : vector<8x1xf32> to vector<8x32xf32>
    %227 = arith.mulf %216, %226 : vector<8x32xf32>
    %228 = vector.broadcast %209 : vector<1x32xf32> to vector<8x32xf32>
    %229 = arith.mulf %228, %227 : vector<8x32xf32>
    %230 = vector.broadcast %210 : vector<1x32xf32> to vector<8x32xf32>
    %231 = arith.addf %229, %230 : vector<8x32xf32>
    %c0_97 = arith.constant 0 : index
    %c0_98 = arith.constant 0 : index
    %232 = vector.load %arg15[%c0_97, %c0_98] : memref<32x64xf32, #tpu.memory_space<vmem>>, vector<32x64xf32>
    %cst_99 = arith.constant dense<0.000000e+00> : vector<8x64xf32>
    %233 = tpu.matmul %231, %232, %cst_99 {dimension_numbers = #tpu.dot_dimension_numbers<[1], [0], [0], [1], [0, 0, 1, 1], [], []>} : vector<8x32xf32>, vector<32x64xf32>, vector<8x64xf32> -> vector<8x64xf32>
    %c0_100 = arith.constant 0 : index
    %c0_101 = arith.constant 0 : index
    %234 = vector.load %arg16[%c0_100, %c0_101] : memref<1x64xf32, #tpu.memory_space<vmem>>, vector<1x64xf32>
    %235 = vector.broadcast %234 : vector<1x64xf32> to vector<8x64xf32>
    %236 = arith.addf %233, %235 : vector<8x64xf32>
    %cst_102 = arith.constant 0.000000e+00 : f32
    %237 = vector.broadcast %cst_102 : f32 to vector<8x64xf32>
    %238 = arith.maximumf %236, %237 : vector<8x64xf32>
    %c0_103 = arith.constant 0 : index
    %c0_104 = arith.constant 0 : index
    %239 = vector.load %arg17[%c0_103, %c0_104] : memref<64x32xf32, #tpu.memory_space<vmem>>, vector<64x32xf32>
    %cst_105 = arith.constant dense<0.000000e+00> : vector<8x32xf32>
    %240 = tpu.matmul %238, %239, %cst_105 {dimension_numbers = #tpu.dot_dimension_numbers<[1], [0], [0], [1], [0, 0, 1, 1], [], []>} : vector<8x64xf32>, vector<64x32xf32>, vector<8x32xf32> -> vector<8x32xf32>
    %c0_106 = arith.constant 0 : index
    %c0_107 = arith.constant 0 : index
    %241 = vector.load %arg18[%c0_106, %c0_107] : memref<1x32xf32, #tpu.memory_space<vmem>>, vector<1x32xf32>
    %242 = vector.broadcast %241 : vector<1x32xf32> to vector<8x32xf32>
    %243 = arith.addf %240, %242 : vector<8x32xf32>
    %244 = arith.addf %231, %243 : vector<8x32xf32>
    %c0_108 = arith.constant 0 : index
    %c0_109 = arith.constant 0 : index
    %245 = vector.load %arg23[%c0_108, %c0_109] : memref<1x32xf32, #tpu.memory_space<vmem>>, vector<1x32xf32>
    %c0_110 = arith.constant 0 : index
    %c0_111 = arith.constant 0 : index
    %246 = vector.load %arg24[%c0_110, %c0_111] : memref<1x32xf32, #tpu.memory_space<vmem>>, vector<1x32xf32>
    %cst_112 = arith.constant dense<0.000000e+00> : vector<8xf32>
    %247 = vector.multi_reduction <add>, %244, %cst_112 [1] : vector<8x32xf32> to vector<8xf32>
    %248 = vector.shape_cast %247 : vector<8xf32> to vector<8x1xf32>
    %cst_113 = arith.constant 3.200000e+01 : f32
    %249 = vector.broadcast %cst_113 : f32 to vector<8x1xf32>
    %250 = arith.divf %248, %249 : vector<8x1xf32>
    %251 = vector.broadcast %250 : vector<8x1xf32> to vector<8x32xf32>
    %252 = arith.subf %244, %251 : vector<8x32xf32>
    %253 = arith.mulf %252, %252 : vector<8x32xf32>
    %cst_114 = arith.constant dense<0.000000e+00> : vector<8xf32>
    %254 = vector.multi_reduction <add>, %253, %cst_114 [1] : vector<8x32xf32> to vector<8xf32>
    %255 = vector.shape_cast %254 : vector<8xf32> to vector<8x1xf32>
    %cst_115 = arith.constant 0.0322580636 : f32
    %256 = vector.broadcast %cst_115 : f32 to vector<8x1xf32>
    %257 = arith.mulf %255, %256 : vector<8x1xf32>
    %258 = math.sqrt %257 : vector<8x1xf32>
    %cst_116 = arith.constant 9.99999996E-13 : f32
    %259 = vector.broadcast %cst_116 : f32 to vector<8x1xf32>
    %260 = arith.addf %258, %259 : vector<8x1xf32>
    %261 = tpu.reciprocal %260 {approx = true} : vector<8x1xf32> -> vector<8x1xf32>
    %262 = vector.broadcast %261 : vector<8x1xf32> to vector<8x32xf32>
    %263 = arith.mulf %252, %262 : vector<8x32xf32>
    %264 = vector.broadcast %245 : vector<1x32xf32> to vector<8x32xf32>
    %265 = arith.mulf %264, %263 : vector<8x32xf32>
    %266 = vector.broadcast %246 : vector<1x32xf32> to vector<8x32xf32>
    %267 = arith.addf %265, %266 : vector<8x32xf32>
    %c0_117 = arith.constant 0 : index
    %c0_118 = arith.constant 0 : index
    %c0_119 = arith.constant 0 : index
    %268 = vector.load %arg25[%c0_117, %c0_118, %c0_119] : memref<1x8x32xf32, #tpu.memory_space<vmem>>, vector<1x8x32xf32>
    %269 = vector.shape_cast %268 : vector<1x8x32xf32> to vector<8x32xf32>
    %270 = vector.shape_cast %267 : vector<8x32xf32> to vector<1x8x32xf32>
    tpu.vector_store %arg25[%c0_117, %c0_118, %c0_119], %270 {strides = array<i32>} : memref<1x8x32xf32, #tpu.memory_space<vmem>>, vector<1x8x32xf32>,
    return
  }
  func.func @transform_0(%arg0: i32) -> (i32, i32, i32) {
    %c0_i32 = arith.constant 0 : i32
    %c0_i32_0 = arith.constant 0 : i32
    %c0_i32_1 = arith.constant 0 : i32
    return %arg0, %c0_i32, %c0_i32_0 : i32, i32, i32
  }
  func.func @transform_1(%arg0: i32) -> (i32, i32, i32) {
    %c0_i32 = arith.constant 0 : i32
    %c0_i32_0 = arith.constant 0 : i32
    %c0_i32_1 = arith.constant 0 : i32
    return %arg0, %c0_i32, %c0_i32_0 : i32, i32, i32
  }
  func.func @transform_2(%arg0: i32) -> (i32, i32, i32) {
    %c0_i32 = arith.constant 0 : i32
    %c0_i32_0 = arith.constant 0 : i32
    %c0_i32_1 = arith.constant 0 : i32
    return %arg0, %c0_i32, %c0_i32_0 : i32, i32, i32
  }
  func.func @transform_3(%arg0: i32) -> (i32, i32, i32) {
    %c0_i32 = arith.constant 0 : i32
    %c0_i32_0 = arith.constant 0 : i32
    %c0_i32_1 = arith.constant 0 : i32
    return %arg0, %c0_i32, %c0_i32_0 : i32, i32, i32
  }
  func.func @transform_4(%arg0: i32) -> (i32, i32) {
    %c0_i32 = arith.constant 0 : i32
    %c0_i32_0 = arith.constant 0 : i32
    %c0_i32_1 = arith.constant 0 : i32
    return %c0_i32, %c0_i32_0 : i32, i32
  }
  func.func @transform_5(%arg0: i32) -> (i32, i32) {
    %c0_i32 = arith.constant 0 : i32
    %c0_i32_0 = arith.constant 0 : i32
    %c0_i32_1 = arith.constant 0 : i32
    return %c0_i32, %c0_i32_0 : i32, i32
  }
  func.func @transform_6(%arg0: i32) -> (i32, i32) {
    %c0_i32 = arith.constant 0 : i32
    %c0_i32_0 = arith.constant 0 : i32
    %c0_i32_1 = arith.constant 0 : i32
    return %c0_i32, %c0_i32_0 : i32, i32
  }
  func.func @transform_7(%arg0: i32) -> (i32, i32) {
    %c0_i32 = arith.constant 0 : i32
    %c0_i32_0 = arith.constant 0 : i32
    %c0_i32_1 = arith.constant 0 : i32
    return %c0_i32, %c0_i32_0 : i32, i32
  }
  func.func @transform_8(%arg0: i32) -> (i32, i32) {
    %c0_i32 = arith.constant 0 : i32
    %c0_i32_0 = arith.constant 0 : i32
    %c0_i32_1 = arith.constant 0 : i32
    return %c0_i32, %c0_i32_0 : i32, i32
  }
  func.func @transform_9(%arg0: i32) -> (i32, i32) {
    %c0_i32 = arith.constant 0 : i32
    %c0_i32_0 = arith.constant 0 : i32
    %c0_i32_1 = arith.constant 0 : i32
    return %c0_i32, %c0_i32_0 : i32, i32
  }
  func.func @transform_10(%arg0: i32) -> (i32, i32) {
    %c0_i32 = arith.constant 0 : i32
    %c0_i32_0 = arith.constant 0 : i32
    %c0_i32_1 = arith.constant 0 : i32
    return %c0_i32, %c0_i32_0 : i32, i32
  }
  func.func @transform_11(%arg0: i32) -> (i32, i32) {
    %c0_i32 = arith.constant 0 : i32
    %c0_i32_0 = arith.constant 0 : i32
    %c0_i32_1 = arith.constant 0 : i32
    return %c0_i32, %c0_i32_0 : i32, i32
  }
  func.func @transform_12(%arg0: i32) -> (i32, i32) {
    %c0_i32 = arith.constant 0 : i32
    %c0_i32_0 = arith.constant 0 : i32
    %c0_i32_1 = arith.constant 0 : i32
    return %c0_i32, %c0_i32_0 : i32, i32
  }
  func.func @transform_13(%arg0: i32) -> (i32, i32) {
    %c0_i32 = arith.constant 0 : i32
    %c0_i32_0 = arith.constant 0 : i32
    %c0_i32_1 = arith.constant 0 : i32
    return %c0_i32, %c0_i32_0 : i32, i32
  }
  func.func @transform_14(%arg0: i32) -> (i32, i32) {
    %c0_i32 = arith.constant 0 : i32
    %c0_i32_0 = arith.constant 0 : i32
    %c0_i32_1 = arith.constant 0 : i32
    return %c0_i32, %c0_i32_0 : i32, i32
  }
  func.func @transform_15(%arg0: i32) -> (i32, i32) {
    %c0_i32 = arith.constant 0 : i32
    %c0_i32_0 = arith.constant 0 : i32
    %c0_i32_1 = arith.constant 0 : i32
    return %c0_i32, %c0_i32_0 : i32, i32
  }
  func.func @transform_16(%arg0: i32) -> (i32, i32) {
    %c0_i32 = arith.constant 0 : i32
    %c0_i32_0 = arith.constant 0 : i32
    %c0_i32_1 = arith.constant 0 : i32
    return %c0_i32, %c0_i32_0 : i32, i32
  }
  func.func @transform_17(%arg0: i32) -> (i32, i32) {
    %c0_i32 = arith.constant 0 : i32
    %c0_i32_0 = arith.constant 0 : i32
    %c0_i32_1 = arith.constant 0 : i32
    return %c0_i32, %c0_i32_0 : i32, i32
  }
  func.func @transform_18(%arg0: i32) -> (i32, i32) {
    %c0_i32 = arith.constant 0 : i32
    %c0_i32_0 = arith.constant 0 : i32
    %c0_i32_1 = arith.constant 0 : i32
    return %c0_i32, %c0_i32_0 : i32, i32
  }
  func.func @transform_19(%arg0: i32) -> (i32, i32) {
    %c0_i32 = arith.constant 0 : i32
    %c0_i32_0 = arith.constant 0 : i32
    %c0_i32_1 = arith.constant 0 : i32
    return %c0_i32, %c0_i32_0 : i32, i32
  }
  func.func @transform_20(%arg0: i32) -> (i32, i32) {
    %c0_i32 = arith.constant 0 : i32
    %c0_i32_0 = arith.constant 0 : i32
    %c0_i32_1 = arith.constant 0 : i32
    return %c0_i32, %c0_i32_0 : i32, i32
  }
  func.func @transform_21(%arg0: i32) -> (i32, i32) {
    %c0_i32 = arith.constant 0 : i32
    %c0_i32_0 = arith.constant 0 : i32
    %c0_i32_1 = arith.constant 0 : i32
    return %c0_i32, %c0_i32_0 : i32, i32
  }
  func.func @transform_22(%arg0: i32) -> (i32, i32) {
    %c0_i32 = arith.constant 0 : i32
    %c0_i32_0 = arith.constant 0 : i32
    %c0_i32_1 = arith.constant 0 : i32
    return %c0_i32, %c0_i32_0 : i32, i32
  }
  func.func @transform_23(%arg0: i32) -> (i32, i32) {
    %c0_i32 = arith.constant 0 : i32
    %c0_i32_0 = arith.constant 0 : i32
    %c0_i32_1 = arith.constant 0 : i32
    return %c0_i32, %c0_i32_0 : i32, i32
  }
  func.func @transform_24(%arg0: i32) -> (i32, i32, i32) {
    %c0_i32 = arith.constant 0 : i32
    %c0_i32_0 = arith.constant 0 : i32
    %c0_i32_1 = arith.constant 0 : i32
    return %arg0, %c0_i32, %c0_i32_0 : i32, i32, i32
  }
}

</mosaic_0001>

<llo_original>
// kernel: decoder_layer.1
$region0: #{decoder_layer.1}
  #allocation0 [shape = 'u32[]', space=smem, size = 0x4, offset = 0x4, fixed_abs, tag = 'smem constant byte address 0x4 - core index']
  #allocation1 [shape = 'u32[144,128]{1,0:T(1,128)}', space=vmem, size = 0x12000, scoped, tag = 'internal scratch']
  %s0 = inlined_call_operand.vmem [shape: f32[2,8,32], index: 0, kind: input, shape index: {}]
  %s1 = inlined_call_operand.vmem [shape: f32[2,16,32], index: 1, kind: input, shape index: {}]
  %s2 = inlined_call_operand.vmem [shape: f32[2,8,8], index: 2, kind: input, shape index: {}]
  %s3 = inlined_call_operand.vmem [shape: f32[2,8,16], index: 3, kind: input, shape index: {}]
  %s4 = inlined_call_operand.vmem [shape: f32[32,96], index: 4, kind: input, shape index: {}]
  %s5 = inlined_call_operand.vmem [shape: f32[1,96], index: 5, kind: input, shape index: {}]
  %s6 = inlined_call_operand.vmem [shape: f32[32,32], index: 6, kind: input, shape index: {}]
  %s7 = inlined_call_operand.vmem [shape: f32[1,32], index: 7, kind: input, shape index: {}]
  %s8 = inlined_call_operand.vmem [shape: f32[32,32], index: 8, kind: input, shape index: {}]
  %s9 = inlined_call_operand.hbm [shape: f32[1,32], index: 9, kind: input, shape index: {}]
  %s10 = inlined_call_operand.vmem [shape: f32[32,64], index: 10, kind: input, shape index: {}]
  %s11 = inlined_call_operand.hbm [shape: f32[1,64], index: 11, kind: input, shape index: {}]
  %s12 = inlined_call_operand.hbm [shape: f32[32,32], index: 12, kind: input, shape index: {}]
  %s13 = inlined_call_operand.hbm [shape: f32[1,32], index: 13, kind: input, shape index: {}]
  %s14 = inlined_call_operand.vmem [shape: f32[32,64], index: 14, kind: input, shape index: {}]
  %s15 = inlined_call_operand.hbm [shape: f32[1,64], index: 15, kind: input, shape index: {}]
  %s16 = inlined_call_operand.vmem [shape: f32[64,32], index: 16, kind: input, shape index: {}]
  %s17 = inlined_call_operand.hbm [shape: f32[1,32], index: 17, kind: input, shape index: {}]
  %s18 = inlined_call_operand.hbm [shape: f32[1,32], index: 18, kind: input, shape index: {}]
  %s19 = inlined_call_operand.hbm [shape: f32[1,32], index: 19, kind: input, shape index: {}]
  %s20 = inlined_call_operand.hbm [shape: f32[1,32], index: 20, kind: input, shape index: {}]
  %s21 = inlined_call_operand.hbm [shape: f32[1,32], index: 21, kind: input, shape index: {}]
  %s22 = inlined_call_operand.hbm [shape: f32[1,32], index: 22, kind: input, shape index: {}]
  %s23 = inlined_call_operand.hbm [shape: f32[1,32], index: 23, kind: input, shape index: {}]
  %s24 = inlined_call_operand.hbm [shape: f32[2,8,32], index: 24, kind: output, shape index: {}]
  %s25 = sld [smem:[#allocation0]]
  $region177: #{decoder_layer.1} parent=0
    _
  %s27 = ssub.s32 1, %s25
  %s28 = scalar_select 0, %s27, %s25
  $region1: #{decoder_layer.1} parent=0
    #allocation2 [shape = 'u8[512]{0}', space=vmem, size = 0x400, scoped, tag = 'input window, operand 9, single buffered']
    #allocation3 [shape = 's32[2]{0}', space=sflag, size = 0x8, scoped, tag = 'scoped memory for decoder_layer.1']
    #allocation4 [shape = 's32[2]{0}', space=sflag, size = 0x8, scoped, tag = 'scoped memory for decoder_layer.1']
    #allocation5 [shape = 'u8[512]{0}', space=vmem, size = 0x400, scoped, tag = 'input window, operand 11, single buffered']
    #allocation6 [shape = 's32[1]{0}', space=sflag, size = 0x4, scoped, tag = 'scoped memory for decoder_layer.1']
    #allocation7 [shape = 'u8[16384]{0}', space=vmem, size = 0x4000, scoped, tag = 'input window, operand 12, single buffered']
    #allocation8 [shape = 'u8[512]{0}', space=vmem, size = 0x400, scoped, tag = 'input window, operand 13, single buffered']
    #allocation9 [shape = 's32[1]{0}', space=sflag, size = 0x4, scoped, tag = 'scoped memory for decoder_layer.1']
    #allocation10 [shape = 'u8[512]{0}', space=vmem, size = 0x400, scoped, tag = 'input window, operand 15, single buffered']
    #allocation11 [shape = 'u8[512]{0}', space=vmem, size = 0x400, scoped, tag = 'input window, operand 17, single buffered']
    #allocation12 [shape = 's32[1]{0}', space=sflag, size = 0x4, scoped, tag = 'scoped memory for decoder_layer.1']
    #allocation13 [shape = 'u8[512]{0}', space=vmem, size = 0x400, scoped, tag = 'input window, operand 18, single buffered']
    #allocation14 [shape = 'u8[512]{0}', space=vmem, size = 0x400, scoped, tag = 'input window, operand 19, single buffered']
    #allocation15 [shape = 's32[1]{0}', space=sflag, size = 0x4, scoped, tag = 'scoped memory for decoder_layer.1']
    #allocation16 [shape = 'u8[512]{0}', space=vmem, size = 0x400, scoped, tag = 'input window, operand 20, single buffered']
    #allocation17 [shape = 'u8[512]{0}', space=vmem, size = 0x400, scoped, tag = 'input window, operand 21, single buffered']
    #allocation18 [shape = 's32[1]{0}', space=sflag, size = 0x4, scoped, tag = 'scoped memory for decoder_layer.1']
    #allocation19 [shape = 'u8[512]{0}', space=vmem, size = 0x400, scoped, tag = 'input window, operand 22, single buffered']
    #allocation20 [shape = 'u8[512]{0}', space=vmem, size = 0x400, scoped, tag = 'input window, operand 23, single buffered']
    #allocation21 [shape = 's32[1]{0}', space=sflag, size = 0x4, scoped, tag = 'scoped memory for decoder_layer.1']
    #allocation22 [shape = 'u8[8192]{0}', space=vmem, size = 0x2000, scoped, tag = 'output window, operand 0']
    %29 = vsyncpa [#allocation3], 0
    %30 = vsyncpa [#allocation6], 0
    %31 = vsyncpa [#allocation9], 0
    %32 = vsyncpa [#allocation12], 0
    %33 = vsyncpa [#allocation15], 0
    %34 = vsyncpa [#allocation18], 0
    %35 = vsyncpa [#allocation21], 0
    %36 = vsyncpa [#allocation4], 0
    %s37 = scalar_lea.sflag [#allocation4], 1
    %38 = vsyncpa %s37, 0
    loop: start=0, step=1, limit=4
    $region2: #{decoder_layer.1} parent=1 // loop_pre_header
      _
    $region3: #{decoder_layer.1} parent=1 // loop_header
      %s40 = sphi 0, %s44
      %p41 = scmp.ge.s32.totalorder %s40, 4
      %s50 = sphi 0, %s52
      %s53 = sphi 0, %s50
      %s54 = sphi 0, %s53
      %s70 = sphi 0, %s54
      %s76 = sphi 0, %s78
      %s79 = sphi 0, %s76
      %s80 = sphi 0, %s79
      %s96 = sphi 0, %s80
      %s102 = sphi 0, %s104
      %s105 = sphi 0, %s102
      %s106 = sphi 0, %s105
      %s122 = sphi 0, %s106
      %s128 = sphi 0, %s130
      %s131 = sphi 0, %s128
      %s132 = sphi 0, %s131
      %s148 = sphi 0, %s132
      %s152 = sphi 0, %s152
      %s154 = sphi 0, %s152
      %s155 = sphi 0, %s154
      %s169 = sphi 0, %s155
      %s173 = sphi 0, %s173
      %s175 = sphi 0, %s173
      %s176 = sphi 0, %s175
      %s190 = sphi 0, %s176
      %s194 = sphi 0, %s194
      %s196 = sphi 0, %s194
      %s197 = sphi 0, %s196
      %s211 = sphi 0, %s197
      %s215 = sphi 0, %s215
      %s217 = sphi 0, %s215
      %s218 = sphi 0, %s217
      %s232 = sphi 0, %s218
      %s236 = sphi 0, %s236
      %s238 = sphi 0, %s236
      %s239 = sphi 0, %s238
      %s253 = sphi 0, %s239
      %s257 = sphi 0, %s257
      %s259 = sphi 0, %s257
      %s260 = sphi 0, %s259
      %s274 = sphi 0, %s260
      %s278 = sphi 0, %s278
      %s280 = sphi 0, %s278
      %s281 = sphi 0, %s280
      %s295 = sphi 0, %s281
      %s299 = sphi 0, %s299
      %s301 = sphi 0, %s299
      %s302 = sphi 0, %s301
      %s316 = sphi 0, %s302
      %s320 = sphi 0, %s320
      %s322 = sphi 0, %s320
      %s323 = sphi 0, %s322
      %s337 = sphi 0, %s323
      %s341 = sphi 0, %s341
      %s343 = sphi 0, %s341
      %s344 = sphi 0, %s343
      %s358 = sphi 0, %s344
      %s362 = sphi 0, %s362
      %s364 = sphi 0, %s362
      %s365 = sphi 0, %s364
      %s379 = sphi 0, %s365
      %s383 = sphi 0, %s383
      %s385 = sphi 0, %s383
      %s386 = sphi 0, %s385
      %s400 = sphi 0, %s386
      %s404 = sphi 0, %s404
      %s406 = sphi 0, %s404
      %s407 = sphi 0, %s406
      %s421 = sphi 0, %s407
      %s425 = sphi 0, %s425
      %s427 = sphi 0, %s425
      %s428 = sphi 0, %s427
      %s442 = sphi 0, %s428
      %s446 = sphi 0, %s446
      %s448 = sphi 0, %s446
      %s449 = sphi 0, %s448
      %s463 = sphi 0, %s449
      %s467 = sphi 0, %s467
      %s469 = sphi 0, %s467
      %s470 = sphi 0, %s469
      %s484 = sphi 0, %s470
      %s488 = sphi 0, %s488
      %s490 = sphi 0, %s488
      %s491 = sphi 0, %s490
      %s505 = sphi 0, %s491
      %s509 = sphi 0, %s509
      %s511 = sphi 0, %s509
      %s512 = sphi 0, %s511
      %s526 = sphi 0, %s512
      %s530 = sphi 0, %s530
      %s532 = sphi 0, %s530
      %s533 = sphi 0, %s532
      %s547 = sphi 0, %s533
      %s551 = sphi 0, %s551
      %s553 = sphi 0, %s551
      %s554 = sphi 0, %s553
      %s568 = sphi 0, %s554
      %s574 = sphi 0, %s576
      %s577 = sphi 0, %s574
      %s578 = sphi 0, %s577
      %s594 = sphi 0, %s578
    $region4: #{decoder_layer.1} parent=1 // loop_header_branch
      %43 = sbr.rel (%p41) target = $region8
    $region5: #{decoder_layer.1} parent=1 // loop_body
      %s45 = ssub.s32 %s40, 1
      %s46 = ssub.s32 %s40, 2
      %s47 = sadd.s32 %s40, 1
      %s48 = ssub.s32 %s40, %s47
      %p49 = scmp.eq.s32.totalorder %s48, 0
      %s51 = sadd.s32 %s50, 1
      %s52 = scalar_select %p49, %s50, %s51
      %p55 = pneg %p49
      %p56 = scmp.eq.s32.totalorder %s40, 1
      %p57 = por %p55, %p56
      %p58 = scmp.ne.s32.totalorder %s50, %s53
      %p59 = scmp.eq.s32.totalorder %s40, 0
      %p60 = por %p58, %p59
      %p61 = scmp.ne.s32.totalorder %s50, %s53
      %p62 = scmp.eq.s32.totalorder %s45, 1
      %p63 = por %p61, %p62
      %p64 = scmp.ne.s32.totalorder %s53, %s54
      %p65 = scmp.eq.s32.totalorder %s45, 0
      %p66 = por %p64, %p65
      %p67 = scmp.ne.s32.totalorder %s53, %s54
      %p68 = scmp.eq.s32.totalorder %s46, 1
      %p69 = por %p67, %p68
      %p71 = scmp.ne.s32.totalorder %s54, %s70
      %p72 = scmp.eq.s32.totalorder %s46, 0
      %p73 = por %p71, %p72
      %s74 = ssub.s32 %s40, %s47
      %p75 = scmp.eq.s32.totalorder %s74, 0
      %s77 = sadd.s32 %s76, 1
      %s78 = scalar_select %p75, %s76, %s77
      %p81 = pneg %p75
      %p82 = scmp.eq.s32.totalorder %s40, 1
      %p83 = por %p81, %p82
      %p84 = scmp.ne.s32.totalorder %s76, %s79
      %p85 = scmp.eq.s32.totalorder %s40, 0
      %p86 = por %p84, %p85
      %p87 = scmp.ne.s32.totalorder %s76, %s79
      %p88 = scmp.eq.s32.totalorder %s45, 1
      %p89 = por %p87, %p88
      %p90 = scmp.ne.s32.totalorder %s79, %s80
      %p91 = scmp.eq.s32.totalorder %s45, 0
      %p92 = por %p90, %p91
      %p93 = scmp.ne.s32.totalorder %s79, %s80
      %p94 = scmp.eq.s32.totalorder %s46, 1
      %p95 = por %p93, %p94
      %p97 = scmp.ne.s32.totalorder %s80, %s96
      %p98 = scmp.eq.s32.totalorder %s46, 0
      %p99 = por %p97, %p98
      %s100 = ssub.s32 %s40, %s47
      %p101 = scmp.eq.s32.totalorder %s100, 0
      %s103 = sadd.s32 %s102, 1
      %s104 = scalar_select %p101, %s102, %s103
      %p107 = pneg %p101
      %p108 = scmp.eq.s32.totalorder %s40, 1
      %p109 = por %p107, %p108
      %p110 = scmp.ne.s32.totalorder %s102, %s105
      %p111 = scmp.eq.s32.totalorder %s40, 0
      %p112 = por %p110, %p111
      %p113 = scmp.ne.s32.totalorder %s102, %s105
      %p114 = scmp.eq.s32.totalorder %s45, 1
      %p115 = por %p113, %p114
      %p116 = scmp.ne.s32.totalorder %s105, %s106
      %p117 = scmp.eq.s32.totalorder %s45, 0
      %p118 = por %p116, %p117
      %p119 = scmp.ne.s32.totalorder %s105, %s106
      %p120 = scmp.eq.s32.totalorder %s46, 1
      %p121 = por %p119, %p120
      %p123 = scmp.ne.s32.totalorder %s106, %s122
      %p124 = scmp.eq.s32.totalorder %s46, 0
      %p125 = por %p123, %p124
      %s126 = ssub.s32 %s40, %s47
      %p127 = scmp.eq.s32.totalorder %s126, 0
      %s129 = sadd.s32 %s128, 1
      %s130 = scalar_select %p127, %s128, %s129
      %p133 = pneg %p127
      %p134 = scmp.eq.s32.totalorder %s40, 1
      %p135 = por %p133, %p134
      %p136 = scmp.ne.s32.totalorder %s128, %s131
      %p137 = scmp.eq.s32.totalorder %s40, 0
      %p138 = por %p136, %p137
      %p139 = scmp.ne.s32.totalorder %s128, %s131
      %p140 = scmp.eq.s32.totalorder %s45, 1
      %p141 = por %p139, %p140
      %p142 = scmp.ne.s32.totalorder %s131, %s132
      %p143 = scmp.eq.s32.totalorder %s45, 0
      %p144 = por %p142, %p143
      %p145 = scmp.ne.s32.totalorder %s131, %s132
      %p146 = scmp.eq.s32.totalorder %s46, 1
      %p147 = por %p145, %p146
      %p149 = scmp.ne.s32.totalorder %s132, %s148
      %p150 = scmp.eq.s32.totalorder %s46, 0
      %p151 = por %p149, %p150
      %s153 = sadd.s32 %s152, 1
      %p156 = scmp.eq.s32.totalorder %s40, 1
      %p157 = scmp.ne.s32.totalorder %s152, %s154
      %p158 = scmp.eq.s32.totalorder %s40, 0
      %p159 = por %p157, %p158
      %p160 = scmp.ne.s32.totalorder %s152, %s154
      %p161 = scmp.eq.s32.totalorder %s45, 1
      %p162 = por %p160, %p161
      %p163 = scmp.ne.s32.totalorder %s154, %s155
      %p164 = scmp.eq.s32.totalorder %s45, 0
      %p165 = por %p163, %p164
      %p166 = scmp.ne.s32.totalorder %s154, %s155
      %p167 = scmp.eq.s32.totalorder %s46, 1
      %p168 = por %p166, %p167
      %p170 = scmp.ne.s32.totalorder %s155, %s169
      %p171 = scmp.eq.s32.totalorder %s46, 0
      %p172 = por %p170, %p171
      %s174 = sadd.s32 %s173, 1
      %p177 = scmp.eq.s32.totalorder %s40, 1
      %p178 = scmp.ne.s32.totalorder %s173, %s175
      %p179 = scmp.eq.s32.totalorder %s40, 0
      %p180 = por %p178, %p179
      %p181 = scmp.ne.s32.totalorder %s173, %s175
      %p182 = scmp.eq.s32.totalorder %s45, 1
      %p183 = por %p181, %p182
      %p184 = scmp.ne.s32.totalorder %s175, %s176
      %p185 = scmp.eq.s32.totalorder %s45, 0
      %p186 = por %p184, %p185
      %p187 = scmp.ne.s32.totalorder %s175, %s176
      %p188 = scmp.eq.s32.totalorder %s46, 1
      %p189 = por %p187, %p188
      %p191 = scmp.ne.s32.totalorder %s176, %s190
      %p192 = scmp.eq.s32.totalorder %s46, 0
      %p193 = por %p191, %p192
      %s195 = sadd.s32 %s194, 1
      %p198 = scmp.eq.s32.totalorder %s40, 1
      %p199 = scmp.ne.s32.totalorder %s194, %s196
      %p200 = scmp.eq.s32.totalorder %s40, 0
      %p201 = por %p199, %p200
      %p202 = scmp.ne.s32.totalorder %s194, %s196
      %p203 = scmp.eq.s32.totalorder %s45, 1
      %p204 = por %p202, %p203
      %p205 = scmp.ne.s32.totalorder %s196, %s197
      %p206 = scmp.eq.s32.totalorder %s45, 0
      %p207 = por %p205, %p206
      %p208 = scmp.ne.s32.totalorder %s196, %s197
      %p209 = scmp.eq.s32.totalorder %s46, 1
      %p210 = por %p208, %p209
      %p212 = scmp.ne.s32.totalorder %s197, %s211
      %p213 = scmp.eq.s32.totalorder %s46, 0
      %p214 = por %p212, %p213
      %s216 = sadd.s32 %s215, 1
      %p219 = scmp.eq.s32.totalorder %s40, 1
      %p220 = scmp.ne.s32.totalorder %s215, %s217
      %p221 = scmp.eq.s32.totalorder %s40, 0
      %p222 = por %p220, %p221
      %p223 = scmp.ne.s32.totalorder %s215, %s217
      %p224 = scmp.eq.s32.totalorder %s45, 1
      %p225 = por %p223, %p224
      %p226 = scmp.ne.s32.totalorder %s217, %s218
      %p227 = scmp.eq.s32.totalorder %s45, 0
      %p228 = por %p226, %p227
      %p229 = scmp.ne.s32.totalorder %s217, %s218
      %p230 = scmp.eq.s32.totalorder %s46, 1
      %p231 = por %p229, %p230
      %p233 = scmp.ne.s32.totalorder %s218, %s232
      %p234 = scmp.eq.s32.totalorder %s46, 0
      %p235 = por %p233, %p234
      %s237 = sadd.s32 %s236, 1
      %p240 = scmp.eq.s32.totalorder %s40, 1
      %p241 = scmp.ne.s32.totalorder %s236, %s238
      %p242 = scmp.eq.s32.totalorder %s40, 0
      %p243 = por %p241, %p242
      %p244 = scmp.ne.s32.totalorder %s236, %s238
      %p245 = scmp.eq.s32.totalorder %s45, 1
      %p246 = por %p244, %p245
      %p247 = scmp.ne.s32.totalorder %s238, %s239
      %p248 = scmp.eq.s32.totalorder %s45, 0
      %p249 = por %p247, %p248
      %p250 = scmp.ne.s32.totalorder %s238, %s239
      %p251 = scmp.eq.s32.totalorder %s46, 1
      %p252 = por %p250, %p251
      %p254 = scmp.ne.s32.totalorder %s239, %s253
      %p255 = scmp.eq.s32.totalorder %s46, 0
      %p256 = por %p254, %p255
      %s258 = sadd.s32 %s257, 1
      %p261 = scmp.eq.s32.totalorder %s40, 1
      %p262 = scmp.ne.s32.totalorder %s257, %s259
      %p263 = scmp.eq.s32.totalorder %s40, 0
      %p264 = por %p262, %p263
      %p265 = scmp.ne.s32.totalorder %s257, %s259
      %p266 = scmp.eq.s32.totalorder %s45, 1
      %p267 = por %p265, %p266
      %p268 = scmp.ne.s32.totalorder %s259, %s260
      %p269 = scmp.eq.s32.totalorder %s45, 0
      %p270 = por %p268, %p269
      %p271 = scmp.ne.s32.totalorder %s259, %s260
      %p272 = scmp.eq.s32.totalorder %s46, 1
      %p273 = por %p271, %p272
      %p275 = scmp.ne.s32.totalorder %s260, %s274
      %p276 = scmp.eq.s32.totalorder %s46, 0
      %p277 = por %p275, %p276
      %s279 = sadd.s32 %s278, 1
      %p282 = scmp.eq.s32.totalorder %s40, 1
      %p283 = scmp.ne.s32.totalorder %s278, %s280
      %p284 = scmp.eq.s32.totalorder %s40, 0
      %p285 = por %p283, %p284
      %p286 = scmp.ne.s32.totalorder %s278, %s280
      %p287 = scmp.eq.s32.totalorder %s45, 1
      %p288 = por %p286, %p287
      %p289 = scmp.ne.s32.totalorder %s280, %s281
      %p290 = scmp.eq.s32.totalorder %s45, 0
      %p291 = por %p289, %p290
      %p292 = scmp.ne.s32.totalorder %s280, %s281
      %p293 = scmp.eq.s32.totalorder %s46, 1
      %p294 = por %p292, %p293
      %p296 = scmp.ne.s32.totalorder %s281, %s295
      %p297 = scmp.eq.s32.totalorder %s46, 0
      %p298 = por %p296, %p297
      %s300 = sadd.s32 %s299, 1
      %p303 = scmp.eq.s32.totalorder %s40, 1
      %p304 = scmp.ne.s32.totalorder %s299, %s301
      %p305 = scmp.eq.s32.totalorder %s40, 0
      %p306 = por %p304, %p305
      %p307 = scmp.ne.s32.totalorder %s299, %s301
      %p308 = scmp.eq.s32.totalorder %s45, 1
      %p309 = por %p307, %p308
      %p310 = scmp.ne.s32.totalorder %s301, %s302
      %p311 = scmp.eq.s32.totalorder %s45, 0
      %p312 = por %p310, %p311
      %p313 = scmp.ne.s32.totalorder %s301, %s302
      %p314 = scmp.eq.s32.totalorder %s46, 1
      %p315 = por %p313, %p314
      %p317 = scmp.ne.s32.totalorder %s302, %s316
      %p318 = scmp.eq.s32.totalorder %s46, 0
      %p319 = por %p317, %p318
      %s321 = sadd.s32 %s320, 1
      %p324 = scmp.eq.s32.totalorder %s40, 1
      %p325 = scmp.ne.s32.totalorder %s320, %s322
      %p326 = scmp.eq.s32.totalorder %s40, 0
      %p327 = por %p325, %p326
      %p328 = scmp.ne.s32.totalorder %s320, %s322
      %p329 = scmp.eq.s32.totalorder %s45, 1
      %p330 = por %p328, %p329
      %p331 = scmp.ne.s32.totalorder %s322, %s323
      %p332 = scmp.eq.s32.totalorder %s45, 0
      %p333 = por %p331, %p332
      %p334 = scmp.ne.s32.totalorder %s322, %s323
      %p335 = scmp.eq.s32.totalorder %s46, 1
      %p336 = por %p334, %p335
      %p338 = scmp.ne.s32.totalorder %s323, %s337
      %p339 = scmp.eq.s32.totalorder %s46, 0
      %p340 = por %p338, %p339
      %s342 = sadd.s32 %s341, 1
      %p345 = scmp.eq.s32.totalorder %s40, 1
      %p346 = scmp.ne.s32.totalorder %s341, %s343
      %p347 = scmp.eq.s32.totalorder %s40, 0
      %p348 = por %p346, %p347
      %p349 = scmp.ne.s32.totalorder %s341, %s343
      %p350 = scmp.eq.s32.totalorder %s45, 1
      %p351 = por %p349, %p350
      %p352 = scmp.ne.s32.totalorder %s343, %s344
      %p353 = scmp.eq.s32.totalorder %s45, 0
      %p354 = por %p352, %p353
      %p355 = scmp.ne.s32.totalorder %s343, %s344
      %p356 = scmp.eq.s32.totalorder %s46, 1
      %p357 = por %p355, %p356
      %p359 = scmp.ne.s32.totalorder %s344, %s358
      %p360 = scmp.eq.s32.totalorder %s46, 0
      %p361 = por %p359, %p360
      %s363 = sadd.s32 %s362, 1
      %p366 = scmp.eq.s32.totalorder %s40, 1
      %p367 = scmp.ne.s32.totalorder %s362, %s364
      %p368 = scmp.eq.s32.totalorder %s40, 0
      %p369 = por %p367, %p368
      %p370 = scmp.ne.s32.totalorder %s362, %s364
      %p371 = scmp.eq.s32.totalorder %s45, 1
      %p372 = por %p370, %p371
      %p373 = scmp.ne.s32.totalorder %s364, %s365
      %p374 = scmp.eq.s32.totalorder %s45, 0
      %p375 = por %p373, %p374
      %p376 = scmp.ne.s32.totalorder %s364, %s365
      %p377 = scmp.eq.s32.totalorder %s46, 1
      %p378 = por %p376, %p377
      %p380 = scmp.ne.s32.totalorder %s365, %s379
      %p381 = scmp.eq.s32.totalorder %s46, 0
      %p382 = por %p380, %p381
      %s384 = sadd.s32 %s383, 1
      %p387 = scmp.eq.s32.totalorder %s40, 1
      %p388 = scmp.ne.s32.totalorder %s383, %s385
      %p389 = scmp.eq.s32.totalorder %s40, 0
      %p390 = por %p388, %p389
      %p391 = scmp.ne.s32.totalorder %s383, %s385
      %p392 = scmp.eq.s32.totalorder %s45, 1
      %p393 = por %p391, %p392
      %p394 = scmp.ne.s32.totalorder %s385, %s386
      %p395 = scmp.eq.s32.totalorder %s45, 0
      %p396 = por %p394, %p395
      %p397 = scmp.ne.s32.totalorder %s385, %s386
      %p398 = scmp.eq.s32.totalorder %s46, 1
      %p399 = por %p397, %p398
      %p401 = scmp.ne.s32.totalorder %s386, %s400
      %p402 = scmp.eq.s32.totalorder %s46, 0
      %p403 = por %p401, %p402
      %s405 = sadd.s32 %s404, 1
      %p408 = scmp.eq.s32.totalorder %s40, 1
      %p409 = scmp.ne.s32.totalorder %s404, %s406
      %p410 = scmp.eq.s32.totalorder %s40, 0
      %p411 = por %p409, %p410
      %p412 = scmp.ne.s32.totalorder %s404, %s406
      %p413 = scmp.eq.s32.totalorder %s45, 1
      %p414 = por %p412, %p413
      %p415 = scmp.ne.s32.totalorder %s406, %s407
      %p416 = scmp.eq.s32.totalorder %s45, 0
      %p417 = por %p415, %p416
      %p418 = scmp.ne.s32.totalorder %s406, %s407
      %p419 = scmp.eq.s32.totalorder %s46, 1
      %p420 = por %p418, %p419
      %p422 = scmp.ne.s32.totalorder %s407, %s421
      %p423 = scmp.eq.s32.totalorder %s46, 0
      %p424 = por %p422, %p423
      %s426 = sadd.s32 %s425, 1
      %p429 = scmp.eq.s32.totalorder %s40, 1
      %p430 = scmp.ne.s32.totalorder %s425, %s427
      %p431 = scmp.eq.s32.totalorder %s40, 0
      %p432 = por %p430, %p431
      %p433 = scmp.ne.s32.totalorder %s425, %s427
      %p434 = scmp.eq.s32.totalorder %s45, 1
      %p435 = por %p433, %p434
      %p436 = scmp.ne.s32.totalorder %s427, %s428
      %p437 = scmp.eq.s32.totalorder %s45, 0
      %p438 = por %p436, %p437
      %p439 = scmp.ne.s32.totalorder %s427, %s428
      %p440 = scmp.eq.s32.totalorder %s46, 1
      %p441 = por %p439, %p440
      %p443 = scmp.ne.s32.totalorder %s428, %s442
      %p444 = scmp.eq.s32.totalorder %s46, 0
      %p445 = por %p443, %p444
      %s447 = sadd.s32 %s446, 1
      %p450 = scmp.eq.s32.totalorder %s40, 1
      %p451 = scmp.ne.s32.totalorder %s446, %s448
      %p452 = scmp.eq.s32.totalorder %s40, 0
      %p453 = por %p451, %p452
      %p454 = scmp.ne.s32.totalorder %s446, %s448
      %p455 = scmp.eq.s32.totalorder %s45, 1
      %p456 = por %p454, %p455
      %p457 = scmp.ne.s32.totalorder %s448, %s449
      %p458 = scmp.eq.s32.totalorder %s45, 0
      %p459 = por %p457, %p458
      %p460 = scmp.ne.s32.totalorder %s448, %s449
      %p461 = scmp.eq.s32.totalorder %s46, 1
      %p462 = por %p460, %p461
      %p464 = scmp.ne.s32.totalorder %s449, %s463
      %p465 = scmp.eq.s32.totalorder %s46, 0
      %p466 = por %p464, %p465
      %s468 = sadd.s32 %s467, 1
      %p471 = scmp.eq.s32.totalorder %s40, 1
      %p472 = scmp.ne.s32.totalorder %s467, %s469
      %p473 = scmp.eq.s32.totalorder %s40, 0
      %p474 = por %p472, %p473
      %p475 = scmp.ne.s32.totalorder %s467, %s469
      %p476 = scmp.eq.s32.totalorder %s45, 1
      %p477 = por %p475, %p476
      %p478 = scmp.ne.s32.totalorder %s469, %s470
      %p479 = scmp.eq.s32.totalorder %s45, 0
      %p480 = por %p478, %p479
      %p481 = scmp.ne.s32.totalorder %s469, %s470
      %p482 = scmp.eq.s32.totalorder %s46, 1
      %p483 = por %p481, %p482
      %p485 = scmp.ne.s32.totalorder %s470, %s484
      %p486 = scmp.eq.s32.totalorder %s46, 0
      %p487 = por %p485, %p486
      %s489 = sadd.s32 %s488, 1
      %p492 = scmp.eq.s32.totalorder %s40, 1
      %p493 = scmp.ne.s32.totalorder %s488, %s490
      %p494 = scmp.eq.s32.totalorder %s40, 0
      %p495 = por %p493, %p494
      %p496 = scmp.ne.s32.totalorder %s488, %s490
      %p497 = scmp.eq.s32.totalorder %s45, 1
      %p498 = por %p496, %p497
      %p499 = scmp.ne.s32.totalorder %s490, %s491
      %p500 = scmp.eq.s32.totalorder %s45, 0
      %p501 = por %p499, %p500
      %p502 = scmp.ne.s32.totalorder %s490, %s491
      %p503 = scmp.eq.s32.totalorder %s46, 1
      %p504 = por %p502, %p503
      %p506 = scmp.ne.s32.totalorder %s491, %s505
      %p507 = scmp.eq.s32.totalorder %s46, 0
      %p508 = por %p506, %p507
      %s510 = sadd.s32 %s509, 1
      %p513 = scmp.eq.s32.totalorder %s40, 1
      %p514 = scmp.ne.s32.totalorder %s509, %s511
      %p515 = scmp.eq.s32.totalorder %s40, 0
      %p516 = por %p514, %p515
      %p517 = scmp.ne.s32.totalorder %s509, %s511
      %p518 = scmp.eq.s32.totalorder %s45, 1
      %p519 = por %p517, %p518
      %p520 = scmp.ne.s32.totalorder %s511, %s512
      %p521 = scmp.eq.s32.totalorder %s45, 0
      %p522 = por %p520, %p521
      %p523 = scmp.ne.s32.totalorder %s511, %s512
      %p524 = scmp.eq.s32.totalorder %s46, 1
      %p525 = por %p523, %p524
      %p527 = scmp.ne.s32.totalorder %s512, %s526
      %p528 = scmp.eq.s32.totalorder %s46, 0
      %p529 = por %p527, %p528
      %s531 = sadd.s32 %s530, 1
      %p534 = scmp.eq.s32.totalorder %s40, 1
      %p535 = scmp.ne.s32.totalorder %s530, %s532
      %p536 = scmp.eq.s32.totalorder %s40, 0
      %p537 = por %p535, %p536
      %p538 = scmp.ne.s32.totalorder %s530, %s532
      %p539 = scmp.eq.s32.totalorder %s45, 1
      %p540 = por %p538, %p539
      %p541 = scmp.ne.s32.totalorder %s532, %s533
      %p542 = scmp.eq.s32.totalorder %s45, 0
      %p543 = por %p541, %p542
      %p544 = scmp.ne.s32.totalorder %s532, %s533
      %p545 = scmp.eq.s32.totalorder %s46, 1
      %p546 = por %p544, %p545
      %p548 = scmp.ne.s32.totalorder %s533, %s547
      %p549 = scmp.eq.s32.totalorder %s46, 0
      %p550 = por %p548, %p549
      %s552 = sadd.s32 %s551, 1
      %p555 = scmp.eq.s32.totalorder %s40, 1
      %p556 = scmp.ne.s32.totalorder %s551, %s553
      %p557 = scmp.eq.s32.totalorder %s40, 0
      %p558 = por %p556, %p557
      %p559 = scmp.ne.s32.totalorder %s551, %s553
      %p560 = scmp.eq.s32.totalorder %s45, 1
      %p561 = por %p559, %p560
      %p562 = scmp.ne.s32.totalorder %s553, %s554
      %p563 = scmp.eq.s32.totalorder %s45, 0
      %p564 = por %p562, %p563
      %p565 = scmp.ne.s32.totalorder %s553, %s554
      %p566 = scmp.eq.s32.totalorder %s46, 1
      %p567 = por %p565, %p566
      %p569 = scmp.ne.s32.totalorder %s554, %s568
      %p570 = scmp.eq.s32.totalorder %s46, 0
      %p571 = por %p569, %p570
      %s572 = ssub.s32 %s40, %s47
      %p573 = scmp.eq.s32.totalorder %s572, 0
      %s575 = sadd.s32 %s574, 1
      %s576 = scalar_select %p573, %s574, %s575
      %p579 = pneg %p573
      %p580 = scmp.eq.s32.totalorder %s40, 1
      %p581 = por %p579, %p580
      %p582 = scmp.ne.s32.totalorder %s574, %s577
      %p583 = scmp.eq.s32.totalorder %s40, 0
      %p584 = por %p582, %p583
      %p585 = scmp.ne.s32.totalorder %s574, %s577
      %p586 = scmp.eq.s32.totalorder %s45, 1
      %p587 = por %p585, %p586
      %p588 = scmp.ne.s32.totalorder %s577, %s578
      %p589 = scmp.eq.s32.totalorder %s45, 0
      %p590 = por %p588, %p589
      %p591 = scmp.ne.s32.totalorder %s577, %s578
      %p592 = scmp.eq.s32.totalorder %s46, 1
      %p593 = por %p591, %p592
      %p595 = scmp.ne.s32.totalorder %s578, %s594
      %p596 = scmp.eq.s32.totalorder %s46, 0
      %p597 = por %p595, %p596
      %p598 = scmp.le.s32.totalorder 1, %s40
      %p599 = scmp.lt.s32.totalorder %s40, 3
      %p600 = pnand %p598, %p599
      %p601 = pneg %p600
      // Predicated region
      $region9: #{decoder_layer.1} parent=5 // pred_check
        _
      $region10: #{decoder_layer.1} parent=5 // pred_check_branch
        %603 = sbr.rel (%p600) target = $region12
      $region11: #{decoder_layer.1} parent=5 // pred_region
        %s604 = ssub.s32 %s40, 1
        // Predicated region
        $region13: #{decoder_layer.1} parent=11 // pred_check
          %p605 = pneg %p165
        $region14: #{decoder_layer.1} parent=11 // pred_check_branch
          %607 = sbr.rel (%p605) target = $region16
        $region15: #{decoder_layer.1} parent=11 // pred_region
          _
        $region16: #{decoder_layer.1} parent=11 // pred_fallthru
          _
        // Predicated region
        $region17: #{decoder_layer.1} parent=11 // pred_check
          %p608 = pneg %p186
        $region18: #{decoder_layer.1} parent=11 // pred_check_branch
          %610 = sbr.rel (%p608) target = $region20
        $region19: #{decoder_layer.1} parent=11 // pred_region
          _
        $region20: #{decoder_layer.1} parent=11 // pred_fallthru
          _
        // Predicated region
        $region21: #{decoder_layer.1} parent=11 // pred_check
          %p611 = pneg %p207
        $region22: #{decoder_layer.1} parent=11 // pred_check_branch
          %613 = sbr.rel (%p611) target = $region24
        $region23: #{decoder_layer.1} parent=11 // pred_region
          _
        $region24: #{decoder_layer.1} parent=11 // pred_fallthru
          _
        // Predicated region
        $region25: #{decoder_layer.1} parent=11 // pred_check
          %p614 = pneg %p228
        $region26: #{decoder_layer.1} parent=11 // pred_check_branch
          %616 = sbr.rel (%p614) target = $region28
        $region27: #{decoder_layer.1} parent=11 // pred_region
          _
        $region28: #{decoder_layer.1} parent=11 // pred_fallthru
          _
        // Predicated region
        $region29: #{decoder_layer.1} parent=11 // pred_check
          %p617 = pneg %p249
        $region30: #{decoder_layer.1} parent=11 // pred_check_branch
          %619 = sbr.rel (%p617) target = $region32
        $region31: #{decoder_layer.1} parent=11 // pred_region
          _
        $region32: #{decoder_layer.1} parent=11 // pred_fallthru
          _
        // Predicated region
        $region33: #{decoder_layer.1} parent=11 // pred_check
          %p620 = pneg %p270
        $region34: #{decoder_layer.1} parent=11 // pred_check_branch
          %622 = sbr.rel (%p620) target = $region36
        $region35: #{decoder_layer.1} parent=11 // pred_region
          %s624 = ssub.s32 16, 16
          %625 = vsyncadd [#allocation3], %s624
          %s627 = sshll.u32 [#allocation2], 4
          %s628 = int_to_ptr.vmem [resolvable:$true] %s627
          %630 = dma.hbm_to_vmem [thread:$0]  %s9, 16, %s628, [#allocation3]
        $region36: #{decoder_layer.1} parent=11 // pred_fallthru
          _
        // Predicated region
        $region37: #{decoder_layer.1} parent=11 // pred_check
          %p631 = pneg %p291
        $region38: #{decoder_layer.1} parent=11 // pred_check_branch
          %633 = sbr.rel (%p631) target = $region40
        $region39: #{decoder_layer.1} parent=11 // pred_region
          _
        $region40: #{decoder_layer.1} parent=11 // pred_fallthru
          _
        // Predicated region
        $region41: #{decoder_layer.1} parent=11 // pred_check
          %p634 = pneg %p312
        $region42: #{decoder_layer.1} parent=11 // pred_check_branch
          %636 = sbr.rel (%p634) target = $region44
        $region43: #{decoder_layer.1} parent=11 // pred_region
          %s638 = ssub.s32 16, 16
          %639 = vsyncadd [#allocation6], %s638
          %s641 = sshll.u32 [#allocation5], 4
          %s642 = int_to_ptr.vmem [resolvable:$true] %s641
          %644 = dma.hbm_to_vmem [thread:$0]  %s11, 16, %s642, [#allocation6]
        $region44: #{decoder_layer.1} parent=11 // pred_fallthru
          _
        // Predicated region
        $region45: #{decoder_layer.1} parent=11 // pred_check
          %p645 = pneg %p333
        $region46: #{decoder_layer.1} parent=11 // pred_check_branch
          %647 = sbr.rel (%p645) target = $region48
        $region47: #{decoder_layer.1} parent=11 // pred_region
          %s649 = ssub.s32 512, 512
          %650 = vsyncadd [#allocation6], %s649
          %s651 = sshll.u32 [#allocation7], 4
          %s652 = int_to_ptr.vmem [resolvable:$true] %s651
          %657 = dma.hbm_to_vmem [thread:$0]  %s12, 512, %s652, [#allocation6], 128, 128, 8
        $region48: #{decoder_layer.1} parent=11 // pred_fallthru
          _
        // Predicated region
        $region49: #{decoder_layer.1} parent=11 // pred_check
          %p658 = pneg %p354
        $region50: #{decoder_layer.1} parent=11 // pred_check_branch
          %660 = sbr.rel (%p658) target = $region52
        $region51: #{decoder_layer.1} parent=11 // pred_region
          %s662 = ssub.s32 16, 16
          %663 = vsyncadd [#allocation9], %s662
          %s665 = sshll.u32 [#allocation8], 4
          %s666 = int_to_ptr.vmem [resolvable:$true] %s665
          %668 = dma.hbm_to_vmem [thread:$0]  %s13, 16, %s666, [#allocation9]
        $region52: #{decoder_layer.1} parent=11 // pred_fallthru
          _
        // Predicated region
        $region53: #{decoder_layer.1} parent=11 // pred_check
          %p669 = pneg %p375
        $region54: #{decoder_layer.1} parent=11 // pred_check_branch
          %671 = sbr.rel (%p669) target = $region56
        $region55: #{decoder_layer.1} parent=11 // pred_region
          _
        $region56: #{decoder_layer.1} parent=11 // pred_fallthru
          _
        // Predicated region
        $region57: #{decoder_layer.1} parent=11 // pred_check
          %p672 = pneg %p396
        $region58: #{decoder_layer.1} parent=11 // pred_check_branch
          %674 = sbr.rel (%p672) target = $region60
        $region59: #{decoder_layer.1} parent=11 // pred_region
          %s676 = ssub.s32 16, 16
          %677 = vsyncadd [#allocation9], %s676
          %s679 = sshll.u32 [#allocation10], 4
          %s680 = int_to_ptr.vmem [resolvable:$true] %s679
          %682 = dma.hbm_to_vmem [thread:$0]  %s15, 16, %s680, [#allocation9]
        $region60: #{decoder_layer.1} parent=11 // pred_fallthru
          _
        // Predicated region
        $region61: #{decoder_layer.1} parent=11 // pred_check
          %p683 = pneg %p417
        $region62: #{decoder_layer.1} parent=11 // pred_check_branch
          %685 = sbr.rel (%p683) target = $region64
        $region63: #{decoder_layer.1} parent=11 // pred_region
          _
        $region64: #{decoder_layer.1} parent=11 // pred_fallthru
          _
        // Predicated region
        $region65: #{decoder_layer.1} parent=11 // pred_check
          %p686 = pneg %p438
        $region66: #{decoder_layer.1} parent=11 // pred_check_branch
          %688 = sbr.rel (%p686) target = $region68
        $region67: #{decoder_layer.1} parent=11 // pred_region
          %s690 = ssub.s32 16, 16
          %691 = vsyncadd [#allocation12], %s690
          %s693 = sshll.u32 [#allocation11], 4
          %s694 = int_to_ptr.vmem [resolvable:$true] %s693
          %696 = dma.hbm_to_vmem [thread:$0]  %s17, 16, %s694, [#allocation12]
        $region68: #{decoder_layer.1} parent=11 // pred_fallthru
          _
        // Predicated region
        $region69: #{decoder_layer.1} parent=11 // pred_check
          %p697 = pneg %p459
        $region70: #{decoder_layer.1} parent=11 // pred_check_branch
          %699 = sbr.rel (%p697) target = $region72
        $region71: #{decoder_layer.1} parent=11 // pred_region
          %s701 = ssub.s32 16, 16
          %702 = vsyncadd [#allocation12], %s701
          %s704 = sshll.u32 [#allocation13], 4
          %s705 = int_to_ptr.vmem [resolvable:$true] %s704
          %707 = dma.hbm_to_vmem [thread:$0]  %s18, 16, %s705, [#allocation12]
        $region72: #{decoder_layer.1} parent=11 // pred_fallthru
          _
        // Predicated region
        $region73: #{decoder_layer.1} parent=11 // pred_check
          %p708 = pneg %p480
        $region74: #{decoder_layer.1} parent=11 // pred_check_branch
          %710 = sbr.rel (%p708) target = $region76
        $region75: #{decoder_layer.1} parent=11 // pred_region
          %s712 = ssub.s32 16, 16
          %713 = vsyncadd [#allocation15], %s712
          %s715 = sshll.u32 [#allocation14], 4
          %s716 = int_to_ptr.vmem [resolvable:$true] %s715
          %718 = dma.hbm_to_vmem [thread:$0]  %s19, 16, %s716, [#allocation15]
        $region76: #{decoder_layer.1} parent=11 // pred_fallthru
          _
        // Predicated region
        $region77: #{decoder_layer.1} parent=11 // pred_check
          %p719 = pneg %p501
        $region78: #{decoder_layer.1} parent=11 // pred_check_branch
          %721 = sbr.rel (%p719) target = $region80
        $region79: #{decoder_layer.1} parent=11 // pred_region
          %s723 = ssub.s32 16, 16
          %724 = vsyncadd [#allocation15], %s723
          %s726 = sshll.u32 [#allocation16], 4
          %s727 = int_to_ptr.vmem [resolvable:$true] %s726
          %729 = dma.hbm_to_vmem [thread:$0]  %s20, 16, %s727, [#allocation15]
        $region80: #{decoder_layer.1} parent=11 // pred_fallthru
          _
        // Predicated region
        $region81: #{decoder_layer.1} parent=11 // pred_check
          %p730 = pneg %p522
        $region82: #{decoder_layer.1} parent=11 // pred_check_branch
          %732 = sbr.rel (%p730) target = $region84
        $region83: #{decoder_layer.1} parent=11 // pred_region
          %s734 = ssub.s32 16, 16
          %735 = vsyncadd [#allocation18], %s734
          %s737 = sshll.u32 [#allocation17], 4
          %s738 = int_to_ptr.vmem [resolvable:$true] %s737
          %740 = dma.hbm_to_vmem [thread:$0]  %s21, 16, %s738, [#allocation18]
        $region84: #{decoder_layer.1} parent=11 // pred_fallthru
          _
        // Predicated region
        $region85: #{decoder_layer.1} parent=11 // pred_check
          %p741 = pneg %p543
        $region86: #{decoder_layer.1} parent=11 // pred_check_branch
          %743 = sbr.rel (%p741) target = $region88
        $region87: #{decoder_layer.1} parent=11 // pred_region
          %s745 = ssub.s32 16, 16
          %746 = vsyncadd [#allocation18], %s745
          %s748 = sshll.u32 [#allocation19], 4
          %s749 = int_to_ptr.vmem [resolvable:$true] %s748
          %751 = dma.hbm_to_vmem [thread:$0]  %s22, 16, %s749, [#allocation18]
        $region88: #{decoder_layer.1} parent=11 // pred_fallthru
          _
        // Predicated region
        $region89: #{decoder_layer.1} parent=11 // pred_check
          %p752 = pneg %p564
        $region90: #{decoder_layer.1} parent=11 // pred_check_branch
          %754 = sbr.rel (%p752) target = $region92
        $region91: #{decoder_layer.1} parent=11 // pred_region
          %s756 = ssub.s32 16, 16
          %757 = vsyncadd [#allocation21], %s756
          %s759 = sshll.u32 [#allocation20], 4
          %s760 = int_to_ptr.vmem [resolvable:$true] %s759
          %762 = dma.hbm_to_vmem [thread:$0]  %s23, 16, %s760, [#allocation21]
        $region92: #{decoder_layer.1} parent=11 // pred_fallthru
          _
      $region12: #{decoder_layer.1} parent=5 // pred_fallthru
        _
      %p763 = scmp.lt.s32.totalorder %s40, 2
      // Predicated region
      $region93: #{decoder_layer.1} parent=5 // pred_check
        %p764 = pneg %p763
      $region94: #{decoder_layer.1} parent=5 // pred_check_branch
        %766 = sbr.rel (%p764) target = $region96
      $region95: #{decoder_layer.1} parent=5 // pred_region
        // Predicated region
        $region97: #{decoder_layer.1} parent=95 // pred_check
          %p767 = pneg %p60
        $region98: #{decoder_layer.1} parent=95 // pred_check_branch
          %769 = sbr.rel (%p767) target = $region100
        $region99: #{decoder_layer.1} parent=95 // pred_region
          %p770 = scmp.lt.s32.totalorder %s40, 1
          %s771 = scalar_select %p770, %s40, 1
          %s772 = smul.addr %s771, 8
          %s773 = scalar_lea.vmem %s0, %s772
        $region100: #{decoder_layer.1} parent=95 // pred_fallthru
          _
        // Predicated region
        $region101: #{decoder_layer.1} parent=95 // pred_check
          %p774 = pneg %p86
        $region102: #{decoder_layer.1} parent=95 // pred_check_branch
          %776 = sbr.rel (%p774) target = $region104
        $region103: #{decoder_layer.1} parent=95 // pred_region
          %p777 = scmp.lt.s32.totalorder %s40, 1
          %s778 = scalar_select %p777, %s40, 1
          %s779 = smul.addr %s778, 2
          %s780 = smul.addr %s779, 8
          %s781 = scalar_lea.vmem %s1, %s780
        $region104: #{decoder_layer.1} parent=95 // pred_fallthru
          _
        // Predicated region
        $region105: #{decoder_layer.1} parent=95 // pred_check
          %p782 = pneg %p112
        $region106: #{decoder_layer.1} parent=95 // pred_check_branch
          %784 = sbr.rel (%p782) target = $region108
        $region107: #{decoder_layer.1} parent=95 // pred_region
          %p785 = scmp.lt.s32.totalorder %s40, 1
          %s786 = scalar_select %p785, %s40, 1
          %s787 = smul.addr %s786, 8
          %s788 = scalar_lea.vmem %s2, %s787
        $region108: #{decoder_layer.1} parent=95 // pred_fallthru
          _
        // Predicated region
        $region109: #{decoder_layer.1} parent=95 // pred_check
          %p789 = pneg %p138
        $region110: #{decoder_layer.1} parent=95 // pred_check_branch
          %791 = sbr.rel (%p789) target = $region112
        $region111: #{decoder_layer.1} parent=95 // pred_region
          %p792 = scmp.lt.s32.totalorder %s40, 1
          %s793 = scalar_select %p792, %s40, 1
          %s794 = smul.addr %s793, 8
          %s795 = scalar_lea.vmem %s3, %s794
        $region112: #{decoder_layer.1} parent=95 // pred_fallthru
          _
      $region96: #{decoder_layer.1} parent=5 // pred_fallthru
        _
      %p796 = scmp.le.s32.totalorder 1, %s40
      %p797 = scmp.lt.s32.totalorder %s40, 3
      %p798 = pnand %p796, %p797
      %p799 = pneg %p798
      // Predicated region
      $region113: #{decoder_layer.1} parent=5 // pred_check
        _
      $region114: #{decoder_layer.1} parent=5 // pred_check_branch
        %801 = sbr.rel (%p798) target = $region116
      $region115: #{decoder_layer.1} parent=5 // pred_region
        %s802 = ssub.s32 %s40, 1
        // Predicated region
        $region117: #{decoder_layer.1} parent=115 // pred_check
          %p803 = pneg %p270
        $region118: #{decoder_layer.1} parent=115 // pred_check_branch
          %805 = sbr.rel (%p803) target = $region120
        $region119: #{decoder_layer.1} parent=115 // pred_region
          %806 = dma.done [#allocation3], 16
        $region120: #{decoder_layer.1} parent=115 // pred_fallthru
          _
        // Predicated region
        $region121: #{decoder_layer.1} parent=115 // pred_check
          %p807 = pneg %p312
        $region122: #{decoder_layer.1} parent=115 // pred_check_branch
          %809 = sbr.rel (%p807) target = $region124
        $region123: #{decoder_layer.1} parent=115 // pred_region
          %810 = dma.done [#allocation6], 16
        $region124: #{decoder_layer.1} parent=115 // pred_fallthru
          _
        // Predicated region
        $region125: #{decoder_layer.1} parent=115 // pred_check
          %p811 = pneg %p333
        $region126: #{decoder_layer.1} parent=115 // pred_check_branch
          %813 = sbr.rel (%p811) target = $region128
        $region127: #{decoder_layer.1} parent=115 // pred_region
          %814 = dma.done [#allocation6], 512
        $region128: #{decoder_layer.1} parent=115 // pred_fallthru
          _
        // Predicated region
        $region129: #{decoder_layer.1} parent=115 // pred_check
          %p815 = pneg %p354
        $region130: #{decoder_layer.1} parent=115 // pred_check_branch
          %817 = sbr.rel (%p815) target = $region132
        $region131: #{decoder_layer.1} parent=115 // pred_region
          %818 = dma.done [#allocation9], 16
        $region132: #{decoder_layer.1} parent=115 // pred_fallthru
          _
        // Predicated region
        $region133: #{decoder_layer.1} parent=115 // pred_check
          %p819 = pneg %p396
        $region134: #{decoder_layer.1} parent=115 // pred_check_branch
          %821 = sbr.rel (%p819) target = $region136
        $region135: #{decoder_layer.1} parent=115 // pred_region
          %822 = dma.done [#allocation9], 16
        $region136: #{decoder_layer.1} parent=115 // pred_fallthru
          _
        // Predicated region
        $region137: #{decoder_layer.1} parent=115 // pred_check
          %p823 = pneg %p438
        $region138: #{decoder_layer.1} parent=115 // pred_check_branch
          %825 = sbr.rel (%p823) target = $region140
        $region139: #{decoder_layer.1} parent=115 // pred_region
          %826 = dma.done [#allocation12], 16
        $region140: #{decoder_layer.1} parent=115 // pred_fallthru
          _
        // Predicated region
        $region141: #{decoder_layer.1} parent=115 // pred_check
          %p827 = pneg %p459
        $region142: #{decoder_layer.1} parent=115 // pred_check_branch
          %829 = sbr.rel (%p827) target = $region144
        $region143: #{decoder_layer.1} parent=115 // pred_region
          %830 = dma.done [#allocation12], 16
        $region144: #{decoder_layer.1} parent=115 // pred_fallthru
          _
        // Predicated region
        $region145: #{decoder_layer.1} parent=115 // pred_check
          %p831 = pneg %p480
        $region146: #{decoder_layer.1} parent=115 // pred_check_branch
          %833 = sbr.rel (%p831) target = $region148
        $region147: #{decoder_layer.1} parent=115 // pred_region
          %834 = dma.done [#allocation15], 16
        $region148: #{decoder_layer.1} parent=115 // pred_fallthru
          _
        // Predicated region
        $region149: #{decoder_layer.1} parent=115 // pred_check
          %p835 = pneg %p501
        $region150: #{decoder_layer.1} parent=115 // pred_check_branch
          %837 = sbr.rel (%p835) target = $region152
        $region151: #{decoder_layer.1} parent=115 // pred_region
          %838 = dma.done [#allocation15], 16
        $region152: #{decoder_layer.1} parent=115 // pred_fallthru
          _
        // Predicated region
        $region153: #{decoder_layer.1} parent=115 // pred_check
          %p839 = pneg %p522
        $region154: #{decoder_layer.1} parent=115 // pred_check_branch
          %841 = sbr.rel (%p839) target = $region156
        $region155: #{decoder_layer.1} parent=115 // pred_region
          %842 = dma.done [#allocation18], 16
        $region156: #{decoder_layer.1} parent=115 // pred_fallthru
          _
        // Predicated region
        $region157: #{decoder_layer.1} parent=115 // pred_check
          %p843 = pneg %p543
        $region158: #{decoder_layer.1} parent=115 // pred_check_branch
          %845 = sbr.rel (%p843) target = $region160
        $region159: #{decoder_layer.1} parent=115 // pred_region
          %846 = dma.done [#allocation18], 16
        $region160: #{decoder_layer.1} parent=115 // pred_fallthru
          _
        // Predicated region
        $region161: #{decoder_layer.1} parent=115 // pred_check
          %p847 = pneg %p564
        $region162: #{decoder_layer.1} parent=115 // pred_check_branch
          %849 = sbr.rel (%p847) target = $region164
        $region163: #{decoder_layer.1} parent=115 // pred_region
          %850 = dma.done [#allocation21], 16
        $region164: #{decoder_layer.1} parent=115 // pred_fallthru
          _
        %p851 = scmp.lt.s32.totalorder %s45, 1
        %s852 = scalar_select %p851, %s45, 1
        %s853 = smul.addr %s852, 8
        %s854 = scalar_lea.vmem %s0, %s853
        %p855 = pneg %p66
        %p856 = pneg %p63
        %p857 = scmp.lt.s32.totalorder %s45, 1
        %s858 = scalar_select %p857, %s45, 1
        %s859 = smul.addr %s858, 2
        %s860 = smul.addr %s859, 8
        %s861 = scalar_lea.vmem %s1, %s860
        %p862 = pneg %p92
        %p863 = pneg %p89
        %p864 = scmp.lt.s32.totalorder %s45, 1
        %s865 = scalar_select %p864, %s45, 1
        %s866 = smul.addr %s865, 8
        %s867 = scalar_lea.vmem %s2, %s866
        %p868 = pneg %p118
        %p869 = pneg %p115
        %p870 = scmp.lt.s32.totalorder %s45, 1
        %s871 = scalar_select %p870, %s45, 1
        %s872 = smul.addr %s871, 8
        %s873 = scalar_lea.vmem %s3, %s872
        %p874 = pneg %p144
        %p875 = pneg %p141
        %p876 = pneg %p165
        %p877 = pneg %p162
        %p878 = pneg %p186
        %p879 = pneg %p183
        %p880 = pneg %p207
        %p881 = pneg %p204
        %p882 = pneg %p228
        %p883 = pneg %p225
        %p884 = pneg %p249
        %p885 = pneg %p246
        %p886 = pneg %p270
        %p887 = pneg %p267
        %p888 = pneg %p291
        %p889 = pneg %p288
        %p890 = pneg %p312
        %p891 = pneg %p309
        %p892 = pneg %p333
        %p893 = pneg %p330
        %p894 = pneg %p354
        %p895 = pneg %p351
        %p896 = pneg %p375
        %p897 = pneg %p372
        %p898 = pneg %p396
        %p899 = pneg %p393
        %p900 = pneg %p417
        %p901 = pneg %p414
        %p902 = pneg %p438
        %p903 = pneg %p435
        %p904 = pneg %p459
        %p905 = pneg %p456
        %p906 = pneg %p480
        %p907 = pneg %p477
        %p908 = pneg %p501
        %p909 = pneg %p498
        %p910 = pneg %p522
        %p911 = pneg %p519
        %p912 = pneg %p543
        %p913 = pneg %p540
        %p914 = pneg %p564
        %p915 = pneg %p561
        %p916 = pneg %p590
        %p917 = pneg %p587
        %s918 = sand.u32 %s577, 1
        %s919 = scalar_lea.sflag [#allocation4], %s918
        %s920 = sand.u32 %s577, 1
        %s921 = smul.addr %s920, 8
        %s922 = scalar_lea.vmem [#allocation22], %s921
        %p923 = scmp.lt.s32.totalorder %s45, 1
        %s924 = scalar_select %p923, %s45, 1
        %s925 = smul.addr %s924, 8
        %s926 = scalar_lea.vmem %s0, %s925
        %p927 = scmp.lt.s32.totalorder %s45, 1
        %s928 = scalar_select %p927, %s45, 1
        %s929 = smul.addr %s928, 2
        %s930 = smul.addr %s929, 8
        %s931 = scalar_lea.vmem %s1, %s930
        %p932 = scmp.lt.s32.totalorder %s45, 1
        %s933 = scalar_select %p932, %s45, 1
        %s934 = smul.addr %s933, 8
        %s935 = scalar_lea.vmem %s2, %s934
        %p936 = scmp.lt.s32.totalorder %s45, 1
        %s937 = scalar_select %p936, %s45, 1
        %s938 = smul.addr %s937, 8
        %s939 = scalar_lea.vmem %s3, %s938
        %v940 = vld [vmem:[%s926] sm:$0xff]
        %v941 = vld [vmem:[%s931] sm:$0xff]
        %v942 = vld [vmem:[%s931 + $0x8] sm:$0xff]
        %v943 = vld [vmem:[%s4] sm:$0xff]
        %v944 = vld [vmem:[%s4 + $0x8] sm:$0xff]
        %v945 = vld [vmem:[%s4 + $0x10] sm:$0xff]
        %v946 = vld [vmem:[%s4 + $0x18] sm:$0xff]
        %v947 = vld [vmem:[%s5] sm:$0x1]
        %v949 = vlaneseq
        %v950 = vshrl.u32 %v949, 7
        %v951 = vsub.s32 0, %v950
        %v952 = vrot.slane %v947, %v951
        %vm954 = vcmask 261120
        %v956 = vsel %vm954, %v940, 0
        %958 = vmatprep.subr.mxu0 0.0
        %959 = vmatpush1.msra.mxu0 %v943
        %960 = vmatprep.subr.mxu0 0.0
        %961 = vmatpush1.msra.mxu0 %v944
        %962 = vmatprep.subr.mxu0 0.0
        %963 = vmatpush1.msra.mxu0 %v945
        %964 = vmatprep.subr.mxu0 0.0
        %965 = vmatpush1.msra.mxu0 %v946
        %966 = vmatprep.subr.mxu0 0.0
        %967 = vmatpush1.msra.mxu0 0.0
        %968 = vmatprep.subr.mxu0 0.0
        %969 = vmatpush1.msra.mxu0 0.0
        %970 = vmatprep.subr.mxu0 0.0
        %971 = vmatpush1.msra.mxu0 0.0
        %972 = vmatprep.subr.mxu0 0.0
        %973 = vmatpush1.msra.mxu0 0.0
        %974 = vmatprep.subr.mxu0 0.0
        %975 = vmatpush1.msra.mxu0 0.0
        %976 = vmatprep.subr.mxu0 0.0
        %977 = vmatpush1.msra.mxu0 0.0
        %978 = vmatprep.subr.mxu0 0.0
        %979 = vmatpush1.msra.mxu0 0.0
        %980 = vmatprep.subr.mxu0 0.0
        %981 = vmatpush1.msra.mxu0 0.0
        %982 = vmatprep.subr.mxu0 0.0
        %983 = vmatpush1.msra.mxu0 0.0
        %984 = vmatprep.subr.mxu0 0.0
        %985 = vmatpush1.msra.mxu0 0.0
        %986 = vmatprep.subr.mxu0 0.0
        %987 = vmatpush1.msra.mxu0 0.0
        %988 = vmatprep.subr.mxu0 0.0
        %989 = vmatpush1.msra.mxu0 0.0
        %990 = vmatprep.subr.mxu0 0.0
        %991 = vmatpush1.msra.mxu0 0.0
        %992 = vmatprep.subr.mxu0 0.0
        %993 = vmatpush1.msra.mxu0 0.0
        %994 = vmatprep.subr.mxu0 0.0
        %995 = vmatpush1.msra.mxu0 0.0
        %996 = vmatprep.subr.mxu0 0.0
        %997 = vmatpush1.msra.mxu0 0.0
        %998 = vmatprep.subr.mxu0 0.0
        %999 = vmatpush1.msra.mxu0 0.0
        %1000 = vmatprep.subr.mxu0 0.0
        %1001 = vmatpush1.msra.mxu0 0.0
        %1002 = vmatprep.subr.mxu0 0.0
        %1003 = vmatpush1.msra.mxu0 0.0
        %1004 = vmatprep.subr.mxu0 0.0
        %1005 = vmatpush1.msra.mxu0 0.0
        %1006 = vmatprep.subr.mxu0 0.0
        %1007 = vmatpush1.msra.mxu0 0.0
        %1008 = vmatprep.subr.mxu0 0.0
        %1009 = vmatpush1.msra.mxu0 0.0
        %1010 = vmatprep.subr.mxu0 0.0
        %1011 = vmatpush1.msra.mxu0 0.0
        %1012 = vmatprep.subr.mxu0 0.0
        %1013 = vmatpush1.msra.mxu0 0.0
        %1014 = vmatprep.subr.mxu0 0.0
        %1015 = vmatpush1.msra.mxu0 0.0
        %1016 = vmatprep.subr.mxu0 0.0
        %1017 = vmatpush1.msra.mxu0 0.0
        %1018 = vmatprep.subr.mxu0 0.0
        %1019 = vmatpush1.msra.mxu0 0.0
        %1020 = vmatprep.subr.mxu0 0.0
        %1021 = vmatpush1.msra.mxu0 0.0
        %1022 = vmatprep.mubr.f32.mxu0 0.0
        %1023 = vmatmul.mubr.f32.gmra.mrb[0].mxu0 %v956
        %v1024 = vpop.f32.mrb[0].mxu0
        %v1025 = vadd.f32 %v952, %v1024
        %v1026 = vpop.f32.mrb[0].mxu0
        %1027 = vdwg.mxu0
        %v1028 = vld [vmem:[%s935] sm:$0xff]
        %v1029 = vmul.f32 %v1025, 0.35355338
        %vm1030 = vcmp.gt.f32.partialorder %v1028, 0.5
        %1032 = vrot.lane.b32.xlu0 %v1025, 96
        %v1033 = vpop.permute.xlu0 %1032
        %vm1034 = vcmask 64512
        %v1036 = vsel %vm1034, %v1029, 0
        %v1038 = vsel %vm1034, %v1033, 0
        %1040 = vmatprep.subr.mxu0 0.0
        %1041 = vmatpush1.xpose.msra.mxu0 %v1038
        %1042 = vmatprep.subr.mxu0 0.0
        %1043 = vmatpush1.xpose.msra.mxu0 0.0
        %1044 = vmatprep.subr.mxu0 0.0
        %1045 = vmatpush1.xpose.msra.mxu0 0.0
        %1046 = vmatprep.subr.mxu0 0.0
        %1047 = vmatpush1.xpose.msra.mxu0 0.0
        %1048 = vmatprep.subr.mxu0 0.0
        %1049 = vmatpush1.xpose.msra.mxu0 0.0
        %1050 = vmatprep.subr.mxu0 0.0
        %1051 = vmatpush1.xpose.msra.mxu0 0.0
        %1052 = vmatprep.subr.mxu0 0.0
        %1053 = vmatpush1.xpose.msra.mxu0 0.0
        %1054 = vmatprep.subr.mxu0 0.0
        %1055 = vmatpush1.xpose.msra.mxu0 0.0
        %1056 = vmatprep.subr.mxu0 0.0
        %1057 = vmatpush1.xpose.msra.mxu0 0.0
        %1058 = vmatprep.subr.mxu0 0.0
        %1059 = vmatpush1.xpose.msra.mxu0 0.0
        %1060 = vmatprep.subr.mxu0 0.0
        %1061 = vmatpush1.xpose.msra.mxu0 0.0
        %1062 = vmatprep.subr.mxu0 0.0
        %1063 = vmatpush1.xpose.msra.mxu0 0.0
        %1064 = vmatprep.subr.mxu0 0.0
        %1065 = vmatpush1.xpose.msra.mxu0 0.0
        %1066 = vmatprep.subr.mxu0 0.0
        %1067 = vmatpush1.xpose.msra.mxu0 0.0
        %1068 = vmatprep.subr.mxu0 0.0
        %1069 = vmatpush1.xpose.msra.mxu0 0.0
        %1070 = vmatprep.subr.mxu0 0.0
        %1071 = vmatpush1.xpose.msra.mxu0 0.0
        %1072 = vmatprep.subr.mxu0 0.0
        %1073 = vmatpush1.xpose.msra.mxu0 0.0
        %1074 = vmatprep.subr.mxu0 0.0
        %1075 = vmatpush1.xpose.msra.mxu0 0.0
        %1076 = vmatprep.subr.mxu0 0.0
        %1077 = vmatpush1.xpose.msra.mxu0 0.0
        %1078 = vmatprep.subr.mxu0 0.0
        %1079 = vmatpush1.xpose.msra.mxu0 0.0
        %1080 = vmatprep.subr.mxu0 0.0
        %1081 = vmatpush1.xpose.msra.mxu0 0.0
        %1082 = vmatprep.subr.mxu0 0.0
        %1083 = vmatpush1.xpose.msra.mxu0 0.0
        %1084 = vmatprep.subr.mxu0 0.0
        %1085 = vmatpush1.xpose.msra.mxu0 0.0
        %1086 = vmatprep.subr.mxu0 0.0
        %1087 = vmatpush1.xpose.msra.mxu0 0.0
        %1088 = vmatprep.subr.mxu0 0.0
        %1089 = vmatpush1.xpose.msra.mxu0 0.0
        %1090 = vmatprep.subr.mxu0 0.0
        %1091 = vmatpush1.xpose.msra.mxu0 0.0
        %1092 = vmatprep.subr.mxu0 0.0
        %1093 = vmatpush1.xpose.msra.mxu0 0.0
        %1094 = vmatprep.subr.mxu0 0.0
        %1095 = vmatpush1.xpose.msra.mxu0 0.0
        %1096 = vmatprep.subr.mxu0 0.0
        %1097 = vmatpush1.xpose.msra.mxu0 0.0
        %1098 = vmatprep.subr.mxu0 0.0
        %1099 = vmatpush1.xpose.msra.mxu0 0.0
        %1100 = vmatprep.subr.mxu0 0.0
        %1101 = vmatpush1.xpose.msra.mxu0 0.0
        %1102 = vmatprep.subr.mxu0 0.0
        %1103 = vmatpush1.xpose.msra.mxu0 0.0
        %1104 = vmatprep.mubr.f32.mxu0 0.0
        %1105 = vmatmul.mubr.f32.gmra.mrb[0].mxu0 %v1036
        %v1106 = vpop.f32.mrb[0].mxu0
        %v1107 = vadd.f32 0.0, %v1106
        %v1108 = vpop.f32.mrb[0].mxu0
        %1109 = vdwg.mxu0
        %v1110 = vsel %vm1030, -1e+10, %v1107
        %v1111 = vsel %vm1034, %v1110, -inf
        %1112 = vmax.xlane.f32.xlu0 %v1111
        %v1113 = vpop.xlane.xlu0 %1112
        %v1114 = vsub.f32 %v1110, %v1113
        %v1115 = vmul.f32 %v1114, 1.442695
        %v1116 = vpow.pop %v1115
        %v1117 = vsel %vm1034, %v1116, 0.0
        %1118 = vadd.xlane.f32.xlu0 %v1117
        %v1119 = vpop.xlane.xlu0 %1118
        %v1120 = vrcp.pop %v1119
        %v1121 = vmul.f32 %v1116, %v1120
        %1122 = vrot.lane.b32.xlu0 %v1025, 64
        %v1123 = vpop.permute.xlu0 %1122
        %v1126 = vsel %vm1034, %v1121, 0
        %1128 = vmatprep.subr.mxu0 0.0
        %1129 = vmatpush1.msra.mxu0 %v1123
        %1130 = vmatprep.subr.mxu0 0.0
        %1131 = vmatpush1.msra.mxu0 0.0
        %1132 = vmatprep.subr.mxu0 0.0
        %1133 = vmatpush1.msra.mxu0 0.0
        %1134 = vmatprep.subr.mxu0 0.0
        %1135 = vmatpush1.msra.mxu0 0.0
        %1136 = vmatprep.subr.mxu0 0.0
        %1137 = vmatpush1.msra.mxu0 0.0
        %1138 = vmatprep.subr.mxu0 0.0
        %1139 = vmatpush1.msra.mxu0 0.0
        %1140 = vmatprep.subr.mxu0 0.0
        %1141 = vmatpush1.msra.mxu0 0.0
        %1142 = vmatprep.subr.mxu0 0.0
        %1143 = vmatpush1.msra.mxu0 0.0
        %1144 = vmatprep.subr.mxu0 0.0
        %1145 = vmatpush1.msra.mxu0 0.0
        %1146 = vmatprep.subr.mxu0 0.0
        %1147 = vmatpush1.msra.mxu0 0.0
        %1148 = vmatprep.subr.mxu0 0.0
        %1149 = vmatpush1.msra.mxu0 0.0
        %1150 = vmatprep.subr.mxu0 0.0
        %1151 = vmatpush1.msra.mxu0 0.0
        %1152 = vmatprep.subr.mxu0 0.0
        %1153 = vmatpush1.msra.mxu0 0.0
        %1154 = vmatprep.subr.mxu0 0.0
        %1155 = vmatpush1.msra.mxu0 0.0
        %1156 = vmatprep.subr.mxu0 0.0
        %1157 = vmatpush1.msra.mxu0 0.0
        %1158 = vmatprep.subr.mxu0 0.0
        %1159 = vmatpush1.msra.mxu0 0.0
        %1160 = vmatprep.subr.mxu0 0.0
        %1161 = vmatpush1.msra.mxu0 0.0
        %1162 = vmatprep.subr.mxu0 0.0
        %1163 = vmatpush1.msra.mxu0 0.0
        %1164 = vmatprep.subr.mxu0 0.0
        %1165 = vmatpush1.msra.mxu0 0.0
        %1166 = vmatprep.subr.mxu0 0.0
        %1167 = vmatpush1.msra.mxu0 0.0
        %1168 = vmatprep.subr.mxu0 0.0
        %1169 = vmatpush1.msra.mxu0 0.0
        %1170 = vmatprep.subr.mxu0 0.0
        %1171 = vmatpush1.msra.mxu0 0.0
        %1172 = vmatprep.subr.mxu0 0.0
        %1173 = vmatpush1.msra.mxu0 0.0
        %1174 = vmatprep.subr.mxu0 0.0
        %1175 = vmatpush1.msra.mxu0 0.0
        %1176 = vmatprep.subr.mxu0 0.0
        %1177 = vmatpush1.msra.mxu0 0.0
        %1178 = vmatprep.subr.mxu0 0.0
        %1179 = vmatpush1.msra.mxu0 0.0
        %1180 = vmatprep.subr.mxu0 0.0
        %1181 = vmatpush1.msra.mxu0 0.0
        %1182 = vmatprep.subr.mxu0 0.0
        %1183 = vmatpush1.msra.mxu0 0.0
        %1184 = vmatprep.subr.mxu0 0.0
        %1185 = vmatpush1.msra.mxu0 0.0
        %1186 = vmatprep.subr.mxu0 0.0
        %1187 = vmatpush1.msra.mxu0 0.0
        %1188 = vmatprep.subr.mxu0 0.0
        %1189 = vmatpush1.msra.mxu0 0.0
        %1190 = vmatprep.subr.mxu0 0.0
        %1191 = vmatpush1.msra.mxu0 0.0
        %1192 = vmatprep.mubr.f32.mxu0 0.0
        %1193 = vmatmul.mubr.f32.gmra.mrb[0].mxu0 %v1126
        %v1194 = vpop.f32.mrb[0].mxu0
        %v1195 = vadd.f32 0.0, %v1194
        %v1196 = vpop.f32.mrb[0].mxu0
        %1197 = vdwg.mxu0
        %1198 = vrot.lane.b32.xlu0 %v1029, 120
        %v1199 = vpop.permute.xlu0 %1198
        %1200 = vrot.lane.b32.xlu0 %v1025, 88
        %v1201 = vpop.permute.xlu0 %1200
        %v1202 = vsel %vm1034, %v1199, 0
        %v1204 = vsel %vm1034, %v1201, 0
        %1206 = vmatprep.subr.mxu0 0.0
        %1207 = vmatpush1.xpose.msra.mxu0 %v1204
        %1208 = vmatprep.subr.mxu0 0.0
        %1209 = vmatpush1.xpose.msra.mxu0 0.0
        %1210 = vmatprep.subr.mxu0 0.0
        %1211 = vmatpush1.xpose.msra.mxu0 0.0
        %1212 = vmatprep.subr.mxu0 0.0
        %1213 = vmatpush1.xpose.msra.mxu0 0.0
        %1214 = vmatprep.subr.mxu0 0.0
        %1215 = vmatpush1.xpose.msra.mxu0 0.0
        %1216 = vmatprep.subr.mxu0 0.0
        %1217 = vmatpush1.xpose.msra.mxu0 0.0
        %1218 = vmatprep.subr.mxu0 0.0
        %1219 = vmatpush1.xpose.msra.mxu0 0.0
        %1220 = vmatprep.subr.mxu0 0.0
        %1221 = vmatpush1.xpose.msra.mxu0 0.0
        %1222 = vmatprep.subr.mxu0 0.0
        %1223 = vmatpush1.xpose.msra.mxu0 0.0
        %1224 = vmatprep.subr.mxu0 0.0
        %1225 = vmatpush1.xpose.msra.mxu0 0.0
        %1226 = vmatprep.subr.mxu0 0.0
        %1227 = vmatpush1.xpose.msra.mxu0 0.0
        %1228 = vmatprep.subr.mxu0 0.0
        %1229 = vmatpush1.xpose.msra.mxu0 0.0
        %1230 = vmatprep.subr.mxu0 0.0
        %1231 = vmatpush1.xpose.msra.mxu0 0.0
        %1232 = vmatprep.subr.mxu0 0.0
        %1233 = vmatpush1.xpose.msra.mxu0 0.0
        %1234 = vmatprep.subr.mxu0 0.0
        %1235 = vmatpush1.xpose.msra.mxu0 0.0
        %1236 = vmatprep.subr.mxu0 0.0
        %1237 = vmatpush1.xpose.msra.mxu0 0.0
        %1238 = vmatprep.subr.mxu0 0.0
        %1239 = vmatpush1.xpose.msra.mxu0 0.0
        %1240 = vmatprep.subr.mxu0 0.0
        %1241 = vmatpush1.xpose.msra.mxu0 0.0
        %1242 = vmatprep.subr.mxu0 0.0
        %1243 = vmatpush1.xpose.msra.mxu0 0.0
        %1244 = vmatprep.subr.mxu0 0.0
        %1245 = vmatpush1.xpose.msra.mxu0 0.0
        %1246 = vmatprep.subr.mxu0 0.0
        %1247 = vmatpush1.xpose.msra.mxu0 0.0
        %1248 = vmatprep.subr.mxu0 0.0
        %1249 = vmatpush1.xpose.msra.mxu0 0.0
        %1250 = vmatprep.subr.mxu0 0.0
        %1251 = vmatpush1.xpose.msra.mxu0 0.0
        %1252 = vmatprep.subr.mxu0 0.0
        %1253 = vmatpush1.xpose.msra.mxu0 0.0
        %1254 = vmatprep.subr.mxu0 0.0
        %1255 = vmatpush1.xpose.msra.mxu0 0.0
        %1256 = vmatprep.subr.mxu0 0.0
        %1257 = vmatpush1.xpose.msra.mxu0 0.0
        %1258 = vmatprep.subr.mxu0 0.0
        %1259 = vmatpush1.xpose.msra.mxu0 0.0
        %1260 = vmatprep.subr.mxu0 0.0
        %1261 = vmatpush1.xpose.msra.mxu0 0.0
        %1262 = vmatprep.subr.mxu0 0.0
        %1263 = vmatpush1.xpose.msra.mxu0 0.0
        %1264 = vmatprep.subr.mxu0 0.0
        %1265 = vmatpush1.xpose.msra.mxu0 0.0
        %1266 = vmatprep.subr.mxu0 0.0
        %1267 = vmatpush1.xpose.msra.mxu0 0.0
        %1268 = vmatprep.subr.mxu0 0.0
        %1269 = vmatpush1.xpose.msra.mxu0 0.0
        %1270 = vmatprep.mubr.f32.mxu0 0.0
        %1271 = vmatmul.mubr.f32.gmra.mrb[0].mxu0 %v1202
        %v1272 = vpop.f32.mrb[0].mxu0
        %v1273 = vadd.f32 0.0, %v1272
        %v1274 = vpop.f32.mrb[0].mxu0
        %1275 = vdwg.mxu0
        %v1276 = vsel %vm1030, -1e+10, %v1273
        %v1277 = vsel %vm1034, %v1276, -inf
        %1278 = vmax.xlane.f32.xlu0 %v1277
        %v1279 = vpop.xlane.xlu0 %1278
        %v1280 = vsub.f32 %v1276, %v1279
        %v1281 = vmul.f32 %v1280, 1.442695
        %v1282 = vpow.pop %v1281
        %v1283 = vsel %vm1034, %v1282, 0.0
        %1284 = vadd.xlane.f32.xlu0 %v1283
        %v1285 = vpop.xlane.xlu0 %1284
        %v1286 = vrcp.pop %v1285
        %v1287 = vmul.f32 %v1282, %v1286
        %1288 = vrot.lane.b32.xlu0 %v1025, 56
        %v1289 = vpop.permute.xlu0 %1288
        %v1292 = vsel %vm1034, %v1287, 0
        %1294 = vmatprep.subr.mxu0 0.0
        %1295 = vmatpush1.msra.mxu0 %v1289
        %1296 = vmatprep.subr.mxu0 0.0
        %1297 = vmatpush1.msra.mxu0 0.0
        %1298 = vmatprep.subr.mxu0 0.0
        %1299 = vmatpush1.msra.mxu0 0.0
        %1300 = vmatprep.subr.mxu0 0.0
        %1301 = vmatpush1.msra.mxu0 0.0
        %1302 = vmatprep.subr.mxu0 0.0
        %1303 = vmatpush1.msra.mxu0 0.0
        %1304 = vmatprep.subr.mxu0 0.0
        %1305 = vmatpush1.msra.mxu0 0.0
        %1306 = vmatprep.subr.mxu0 0.0
        %1307 = vmatpush1.msra.mxu0 0.0
        %1308 = vmatprep.subr.mxu0 0.0
        %1309 = vmatpush1.msra.mxu0 0.0
        %1310 = vmatprep.subr.mxu0 0.0
        %1311 = vmatpush1.msra.mxu0 0.0
        %1312 = vmatprep.subr.mxu0 0.0
        %1313 = vmatpush1.msra.mxu0 0.0
        %1314 = vmatprep.subr.mxu0 0.0
        %1315 = vmatpush1.msra.mxu0 0.0
        %1316 = vmatprep.subr.mxu0 0.0
        %1317 = vmatpush1.msra.mxu0 0.0
        %1318 = vmatprep.subr.mxu0 0.0
        %1319 = vmatpush1.msra.mxu0 0.0
        %1320 = vmatprep.subr.mxu0 0.0
        %1321 = vmatpush1.msra.mxu0 0.0
        %1322 = vmatprep.subr.mxu0 0.0
        %1323 = vmatpush1.msra.mxu0 0.0
        %1324 = vmatprep.subr.mxu0 0.0
        %1325 = vmatpush1.msra.mxu0 0.0
        %1326 = vmatprep.subr.mxu0 0.0
        %1327 = vmatpush1.msra.mxu0 0.0
        %1328 = vmatprep.subr.mxu0 0.0
        %1329 = vmatpush1.msra.mxu0 0.0
        %1330 = vmatprep.subr.mxu0 0.0
        %1331 = vmatpush1.msra.mxu0 0.0
        %1332 = vmatprep.subr.mxu0 0.0
        %1333 = vmatpush1.msra.mxu0 0.0
        %1334 = vmatprep.subr.mxu0 0.0
        %1335 = vmatpush1.msra.mxu0 0.0
        %1336 = vmatprep.subr.mxu0 0.0
        %1337 = vmatpush1.msra.mxu0 0.0
        %1338 = vmatprep.subr.mxu0 0.0
        %1339 = vmatpush1.msra.mxu0 0.0
        %1340 = vmatprep.subr.mxu0 0.0
        %1341 = vmatpush1.msra.mxu0 0.0
        %1342 = vmatprep.subr.mxu0 0.0
        %1343 = vmatpush1.msra.mxu0 0.0
        %1344 = vmatprep.subr.mxu0 0.0
        %1345 = vmatpush1.msra.mxu0 0.0
        %1346 = vmatprep.subr.mxu0 0.0
        %1347 = vmatpush1.msra.mxu0 0.0
        %1348 = vmatprep.subr.mxu0 0.0
        %1349 = vmatpush1.msra.mxu0 0.0
        %1350 = vmatprep.subr.mxu0 0.0
        %1351 = vmatpush1.msra.mxu0 0.0
        %1352 = vmatprep.subr.mxu0 0.0
        %1353 = vmatpush1.msra.mxu0 0.0
        %1354 = vmatprep.subr.mxu0 0.0
        %1355 = vmatpush1.msra.mxu0 0.0
        %1356 = vmatprep.subr.mxu0 0.0
        %1357 = vmatpush1.msra.mxu0 0.0
        %1358 = vmatprep.mubr.f32.mxu0 0.0
        %1359 = vmatmul.mubr.f32.gmra.mrb[0].mxu0 %v1292
        %v1360 = vpop.f32.mrb[0].mxu0
        %v1361 = vadd.f32 0.0, %v1360
        %v1362 = vpop.f32.mrb[0].mxu0
        %1363 = vdwg.mxu0
        %1364 = vrot.lane.b32.xlu0 %v1029, 112
        %v1365 = vpop.permute.xlu0 %1364
        %1366 = vrot.lane.b32.xlu0 %v1025, 80
        %v1367 = vpop.permute.xlu0 %1366
        %v1368 = vsel %vm1034, %v1365, 0
        %v1370 = vsel %vm1034, %v1367, 0
        %1372 = vmatprep.subr.mxu0 0.0
        %1373 = vmatpush1.xpose.msra.mxu0 %v1370
        %1374 = vmatprep.subr.mxu0 0.0
        %1375 = vmatpush1.xpose.msra.mxu0 0.0
        %1376 = vmatprep.subr.mxu0 0.0
        %1377 = vmatpush1.xpose.msra.mxu0 0.0
        %1378 = vmatprep.subr.mxu0 0.0
        %1379 = vmatpush1.xpose.msra.mxu0 0.0
        %1380 = vmatprep.subr.mxu0 0.0
        %1381 = vmatpush1.xpose.msra.mxu0 0.0
        %1382 = vmatprep.subr.mxu0 0.0
        %1383 = vmatpush1.xpose.msra.mxu0 0.0
        %1384 = vmatprep.subr.mxu0 0.0
        %1385 = vmatpush1.xpose.msra.mxu0 0.0
        %1386 = vmatprep.subr.mxu0 0.0
        %1387 = vmatpush1.xpose.msra.mxu0 0.0
        %1388 = vmatprep.subr.mxu0 0.0
        %1389 = vmatpush1.xpose.msra.mxu0 0.0
        %1390 = vmatprep.subr.mxu0 0.0
        %1391 = vmatpush1.xpose.msra.mxu0 0.0
        %1392 = vmatprep.subr.mxu0 0.0
        %1393 = vmatpush1.xpose.msra.mxu0 0.0
        %1394 = vmatprep.subr.mxu0 0.0
        %1395 = vmatpush1.xpose.msra.mxu0 0.0
        %1396 = vmatprep.subr.mxu0 0.0
        %1397 = vmatpush1.xpose.msra.mxu0 0.0
        %1398 = vmatprep.subr.mxu0 0.0
        %1399 = vmatpush1.xpose.msra.mxu0 0.0
        %1400 = vmatprep.subr.mxu0 0.0
        %1401 = vmatpush1.xpose.msra.mxu0 0.0
        %1402 = vmatprep.subr.mxu0 0.0
        %1403 = vmatpush1.xpose.msra.mxu0 0.0
        %1404 = vmatprep.subr.mxu0 0.0
        %1405 = vmatpush1.xpose.msra.mxu0 0.0
        %1406 = vmatprep.subr.mxu0 0.0
        %1407 = vmatpush1.xpose.msra.mxu0 0.0
        %1408 = vmatprep.subr.mxu0 0.0
        %1409 = vmatpush1.xpose.msra.mxu0 0.0
        %1410 = vmatprep.subr.mxu0 0.0
        %1411 = vmatpush1.xpose.msra.mxu0 0.0
        %1412 = vmatprep.subr.mxu0 0.0
        %1413 = vmatpush1.xpose.msra.mxu0 0.0
        %1414 = vmatprep.subr.mxu0 0.0
        %1415 = vmatpush1.xpose.msra.mxu0 0.0
        %1416 = vmatprep.subr.mxu0 0.0
        %1417 = vmatpush1.xpose.msra.mxu0 0.0
        %1418 = vmatprep.subr.mxu0 0.0
        %1419 = vmatpush1.xpose.msra.mxu0 0.0
        %1420 = vmatprep.subr.mxu0 0.0
        %1421 = vmatpush1.xpose.msra.mxu0 0.0
        %1422 = vmatprep.subr.mxu0 0.0
        %1423 = vmatpush1.xpose.msra.mxu0 0.0
        %1424 = vmatprep.subr.mxu0 0.0
        %1425 = vmatpush1.xpose.msra.mxu0 0.0
        %1426 = vmatprep.subr.mxu0 0.0
        %1427 = vmatpush1.xpose.msra.mxu0 0.0
        %1428 = vmatprep.subr.mxu0 0.0
        %1429 = vmatpush1.xpose.msra.mxu0 0.0
        %1430 = vmatprep.subr.mxu0 0.0
        %1431 = vmatpush1.xpose.msra.mxu0 0.0
        %1432 = vmatprep.subr.mxu0 0.0
        %1433 = vmatpush1.xpose.msra.mxu0 0.0
        %1434 = vmatprep.subr.mxu0 0.0
        %1435 = vmatpush1.xpose.msra.mxu0 0.0
        %1436 = vmatprep.mubr.f32.mxu0 0.0
        %1437 = vmatmul.mubr.f32.gmra.mrb[0].mxu0 %v1368
        %v1438 = vpop.f32.mrb[0].mxu0
        %v1439 = vadd.f32 0.0, %v1438
        %v1440 = vpop.f32.mrb[0].mxu0
        %1441 = vdwg.mxu0
        %v1442 = vsel %vm1030, -1e+10, %v1439
        %v1443 = vsel %vm1034, %v1442, -inf
        %1444 = vmax.xlane.f32.xlu0 %v1443
        %v1445 = vpop.xlane.xlu0 %1444
        %v1446 = vsub.f32 %v1442, %v1445
        %v1447 = vmul.f32 %v1446, 1.442695
        %v1448 = vpow.pop %v1447
        %v1449 = vsel %vm1034, %v1448, 0.0
        %1450 = vadd.xlane.f32.xlu0 %v1449
        %v1451 = vpop.xlane.xlu0 %1450
        %v1452 = vrcp.pop %v1451
        %v1453 = vmul.f32 %v1448, %v1452
        %1454 = vrot.lane.b32.xlu0 %v1025, 48
        %v1455 = vpop.permute.xlu0 %1454
        %v1458 = vsel %vm1034, %v1453, 0
        %1460 = vmatprep.subr.mxu0 0.0
        %1461 = vmatpush1.msra.mxu0 %v1455
        %1462 = vmatprep.subr.mxu0 0.0
        %1463 = vmatpush1.msra.mxu0 0.0
        %1464 = vmatprep.subr.mxu0 0.0
        %1465 = vmatpush1.msra.mxu0 0.0
        %1466 = vmatprep.subr.mxu0 0.0
        %1467 = vmatpush1.msra.mxu0 0.0
        %1468 = vmatprep.subr.mxu0 0.0
        %1469 = vmatpush1.msra.mxu0 0.0
        %1470 = vmatprep.subr.mxu0 0.0
        %1471 = vmatpush1.msra.mxu0 0.0
        %1472 = vmatprep.subr.mxu0 0.0
        %1473 = vmatpush1.msra.mxu0 0.0
        %1474 = vmatprep.subr.mxu0 0.0
        %1475 = vmatpush1.msra.mxu0 0.0
        %1476 = vmatprep.subr.mxu0 0.0
        %1477 = vmatpush1.msra.mxu0 0.0
        %1478 = vmatprep.subr.mxu0 0.0
        %1479 = vmatpush1.msra.mxu0 0.0
        %1480 = vmatprep.subr.mxu0 0.0
        %1481 = vmatpush1.msra.mxu0 0.0
        %1482 = vmatprep.subr.mxu0 0.0
        %1483 = vmatpush1.msra.mxu0 0.0
        %1484 = vmatprep.subr.mxu0 0.0
        %1485 = vmatpush1.msra.mxu0 0.0
        %1486 = vmatprep.subr.mxu0 0.0
        %1487 = vmatpush1.msra.mxu0 0.0
        %1488 = vmatprep.subr.mxu0 0.0
        %1489 = vmatpush1.msra.mxu0 0.0
        %1490 = vmatprep.subr.mxu0 0.0
        %1491 = vmatpush1.msra.mxu0 0.0
        %1492 = vmatprep.subr.mxu0 0.0
        %1493 = vmatpush1.msra.mxu0 0.0
        %1494 = vmatprep.subr.mxu0 0.0
        %1495 = vmatpush1.msra.mxu0 0.0
        %1496 = vmatprep.subr.mxu0 0.0
        %1497 = vmatpush1.msra.mxu0 0.0
        %1498 = vmatprep.subr.mxu0 0.0
        %1499 = vmatpush1.msra.mxu0 0.0
        %1500 = vmatprep.subr.mxu0 0.0
        %1501 = vmatpush1.msra.mxu0 0.0
        %1502 = vmatprep.subr.mxu0 0.0
        %1503 = vmatpush1.msra.mxu0 0.0
        %1504 = vmatprep.subr.mxu0 0.0
        %1505 = vmatpush1.msra.mxu0 0.0
        %1506 = vmatprep.subr.mxu0 0.0
        %1507 = vmatpush1.msra.mxu0 0.0
        %1508 = vmatprep.subr.mxu0 0.0
        %1509 = vmatpush1.msra.mxu0 0.0
        %1510 = vmatprep.subr.mxu0 0.0
        %1511 = vmatpush1.msra.mxu0 0.0
        %1512 = vmatprep.subr.mxu0 0.0
        %1513 = vmatpush1.msra.mxu0 0.0
        %1514 = vmatprep.subr.mxu0 0.0
        %1515 = vmatpush1.msra.mxu0 0.0
        %1516 = vmatprep.subr.mxu0 0.0
        %1517 = vmatpush1.msra.mxu0 0.0
        %1518 = vmatprep.subr.mxu0 0.0
        %1519 = vmatpush1.msra.mxu0 0.0
        %1520 = vmatprep.subr.mxu0 0.0
        %1521 = vmatpush1.msra.mxu0 0.0
        %1522 = vmatprep.subr.mxu0 0.0
        %1523 = vmatpush1.msra.mxu0 0.0
        %1524 = vmatprep.mubr.f32.mxu0 0.0
        %1525 = vmatmul.mubr.f32.gmra.mrb[0].mxu0 %v1458
        %v1526 = vpop.f32.mrb[0].mxu0
        %v1527 = vadd.f32 0.0, %v1526
        %v1528 = vpop.f32.mrb[0].mxu0
        %1529 = vdwg.mxu0
        %1530 = vrot.lane.b32.xlu0 %v1029, 104
        %v1531 = vpop.permute.xlu0 %1530
        %1532 = vrot.lane.b32.xlu0 %v1025, 72
        %v1533 = vpop.permute.xlu0 %1532
        %v1534 = vsel %vm1034, %v1531, 0
        %v1536 = vsel %vm1034, %v1533, 0
        %1538 = vmatprep.subr.mxu0 0.0
        %1539 = vmatpush1.xpose.msra.mxu0 %v1536
        %1540 = vmatprep.subr.mxu0 0.0
        %1541 = vmatpush1.xpose.msra.mxu0 0.0
        %1542 = vmatprep.subr.mxu0 0.0
        %1543 = vmatpush1.xpose.msra.mxu0 0.0
        %1544 = vmatprep.subr.mxu0 0.0
        %1545 = vmatpush1.xpose.msra.mxu0 0.0
        %1546 = vmatprep.subr.mxu0 0.0
        %1547 = vmatpush1.xpose.msra.mxu0 0.0
        %1548 = vmatprep.subr.mxu0 0.0
        %1549 = vmatpush1.xpose.msra.mxu0 0.0
        %1550 = vmatprep.subr.mxu0 0.0
        %1551 = vmatpush1.xpose.msra.mxu0 0.0
        %1552 = vmatprep.subr.mxu0 0.0
        %1553 = vmatpush1.xpose.msra.mxu0 0.0
        %1554 = vmatprep.subr.mxu0 0.0
        %1555 = vmatpush1.xpose.msra.mxu0 0.0
        %1556 = vmatprep.subr.mxu0 0.0
        %1557 = vmatpush1.xpose.msra.mxu0 0.0
        %1558 = vmatprep.subr.mxu0 0.0
        %1559 = vmatpush1.xpose.msra.mxu0 0.0
        %1560 = vmatprep.subr.mxu0 0.0
        %1561 = vmatpush1.xpose.msra.mxu0 0.0
        %1562 = vmatprep.subr.mxu0 0.0
        %1563 = vmatpush1.xpose.msra.mxu0 0.0
        %1564 = vmatprep.subr.mxu0 0.0
        %1565 = vmatpush1.xpose.msra.mxu0 0.0
        %1566 = vmatprep.subr.mxu0 0.0
        %1567 = vmatpush1.xpose.msra.mxu0 0.0
        %1568 = vmatprep.subr.mxu0 0.0
        %1569 = vmatpush1.xpose.msra.mxu0 0.0
        %1570 = vmatprep.subr.mxu0 0.0
        %1571 = vmatpush1.xpose.msra.mxu0 0.0
        %1572 = vmatprep.subr.mxu0 0.0
        %1573 = vmatpush1.xpose.msra.mxu0 0.0
        %1574 = vmatprep.subr.mxu0 0.0
        %1575 = vmatpush1.xpose.msra.mxu0 0.0
        %1576 = vmatprep.subr.mxu0 0.0
        %1577 = vmatpush1.xpose.msra.mxu0 0.0
        %1578 = vmatprep.subr.mxu0 0.0
        %1579 = vmatpush1.xpose.msra.mxu0 0.0
        %1580 = vmatprep.subr.mxu0 0.0
        %1581 = vmatpush1.xpose.msra.mxu0 0.0
        %1582 = vmatprep.subr.mxu0 0.0
        %1583 = vmatpush1.xpose.msra.mxu0 0.0
        %1584 = vmatprep.subr.mxu0 0.0
        %1585 = vmatpush1.xpose.msra.mxu0 0.0
        %1586 = vmatprep.subr.mxu0 0.0
        %1587 = vmatpush1.xpose.msra.mxu0 0.0
        %1588 = vmatprep.subr.mxu0 0.0
        %1589 = vmatpush1.xpose.msra.mxu0 0.0
        %1590 = vmatprep.subr.mxu0 0.0
        %1591 = vmatpush1.xpose.msra.mxu0 0.0
        %1592 = vmatprep.subr.mxu0 0.0
        %1593 = vmatpush1.xpose.msra.mxu0 0.0
        %1594 = vmatprep.subr.mxu0 0.0
        %1595 = vmatpush1.xpose.msra.mxu0 0.0
        %1596 = vmatprep.subr.mxu0 0.0
        %1597 = vmatpush1.xpose.msra.mxu0 0.0
        %1598 = vmatprep.subr.mxu0 0.0
        %1599 = vmatpush1.xpose.msra.mxu0 0.0
        %1600 = vmatprep.subr.mxu0 0.0
        %1601 = vmatpush1.xpose.msra.mxu0 0.0
        %1602 = vmatprep.mubr.f32.mxu0 0.0
        %1603 = vmatmul.mubr.f32.gmra.mrb[0].mxu0 %v1534
        %v1604 = vpop.f32.mrb[0].mxu0
        %v1605 = vadd.f32 0.0, %v1604
        %v1606 = vpop.f32.mrb[0].mxu0
        %1607 = vdwg.mxu0
        %v1608 = vsel %vm1030, -1e+10, %v1605
        %v1609 = vsel %vm1034, %v1608, -inf
        %1610 = vmax.xlane.f32.xlu0 %v1609
        %v1611 = vpop.xlane.xlu0 %1610
        %v1612 = vsub.f32 %v1608, %v1611
        %v1613 = vmul.f32 %v1612, 1.442695
        %v1614 = vpow.pop %v1613
        %v1615 = vsel %vm1034, %v1614, 0.0
        %1616 = vadd.xlane.f32.xlu0 %v1615
        %v1617 = vpop.xlane.xlu0 %1616
        %v1618 = vrcp.pop %v1617
        %v1619 = vmul.f32 %v1614, %v1618
        %1620 = vrot.lane.b32.xlu0 %v1025, 40
        %v1621 = vpop.permute.xlu0 %1620
        %v1624 = vsel %vm1034, %v1619, 0
        %1626 = vmatprep.subr.mxu0 0.0
        %1627 = vmatpush1.msra.mxu0 %v1621
        %1628 = vmatprep.subr.mxu0 0.0
        %1629 = vmatpush1.msra.mxu0 0.0
        %1630 = vmatprep.subr.mxu0 0.0
        %1631 = vmatpush1.msra.mxu0 0.0
        %1632 = vmatprep.subr.mxu0 0.0
        %1633 = vmatpush1.msra.mxu0 0.0
        %1634 = vmatprep.subr.mxu0 0.0
        %1635 = vmatpush1.msra.mxu0 0.0
        %1636 = vmatprep.subr.mxu0 0.0
        %1637 = vmatpush1.msra.mxu0 0.0
        %1638 = vmatprep.subr.mxu0 0.0
        %1639 = vmatpush1.msra.mxu0 0.0
        %1640 = vmatprep.subr.mxu0 0.0
        %1641 = vmatpush1.msra.mxu0 0.0
        %1642 = vmatprep.subr.mxu0 0.0
        %1643 = vmatpush1.msra.mxu0 0.0
        %1644 = vmatprep.subr.mxu0 0.0
        %1645 = vmatpush1.msra.mxu0 0.0
        %1646 = vmatprep.subr.mxu0 0.0
        %1647 = vmatpush1.msra.mxu0 0.0
        %1648 = vmatprep.subr.mxu0 0.0
        %1649 = vmatpush1.msra.mxu0 0.0
        %1650 = vmatprep.subr.mxu0 0.0
        %1651 = vmatpush1.msra.mxu0 0.0
        %1652 = vmatprep.subr.mxu0 0.0
        %1653 = vmatpush1.msra.mxu0 0.0
        %1654 = vmatprep.subr.mxu0 0.0
        %1655 = vmatpush1.msra.mxu0 0.0
        %1656 = vmatprep.subr.mxu0 0.0
        %1657 = vmatpush1.msra.mxu0 0.0
        %1658 = vmatprep.subr.mxu0 0.0
        %1659 = vmatpush1.msra.mxu0 0.0
        %1660 = vmatprep.subr.mxu0 0.0
        %1661 = vmatpush1.msra.mxu0 0.0
        %1662 = vmatprep.subr.mxu0 0.0
        %1663 = vmatpush1.msra.mxu0 0.0
        %1664 = vmatprep.subr.mxu0 0.0
        %1665 = vmatpush1.msra.mxu0 0.0
        %1666 = vmatprep.subr.mxu0 0.0
        %1667 = vmatpush1.msra.mxu0 0.0
        %1668 = vmatprep.subr.mxu0 0.0
        %1669 = vmatpush1.msra.mxu0 0.0
        %1670 = vmatprep.subr.mxu0 0.0
        %1671 = vmatpush1.msra.mxu0 0.0
        %1672 = vmatprep.subr.mxu0 0.0
        %1673 = vmatpush1.msra.mxu0 0.0
        %1674 = vmatprep.subr.mxu0 0.0
        %1675 = vmatpush1.msra.mxu0 0.0
        %1676 = vmatprep.subr.mxu0 0.0
        %1677 = vmatpush1.msra.mxu0 0.0
        %1678 = vmatprep.subr.mxu0 0.0
        %1679 = vmatpush1.msra.mxu0 0.0
        %1680 = vmatprep.subr.mxu0 0.0
        %1681 = vmatpush1.msra.mxu0 0.0
        %1682 = vmatprep.subr.mxu0 0.0
        %1683 = vmatpush1.msra.mxu0 0.0
        %1684 = vmatprep.subr.mxu0 0.0
        %1685 = vmatpush1.msra.mxu0 0.0
        %1686 = vmatprep.subr.mxu0 0.0
        %1687 = vmatpush1.msra.mxu0 0.0
        %1688 = vmatprep.subr.mxu0 0.0
        %1689 = vmatpush1.msra.mxu0 0.0
        %1690 = vmatprep.mubr.f32.mxu0 0.0
        %1691 = vmatmul.mubr.f32.gmra.mrb[0].mxu0 %v1624
        %v1692 = vpop.f32.mrb[0].mxu0
        %v1693 = vadd.f32 0.0, %v1692
        %v1694 = vpop.f32.mrb[0].mxu0
        %1695 = vdwg.mxu0
        %1697 = vrot.lane.b32.xlu0 %v1361, 8
        %v1698 = vpop.permute.xlu0 %1697
        %1701 = vrot.lane.b32.xlu0 %v1527, 16
        %v1702 = vpop.permute.xlu0 %1701
        %1705 = vrot.lane.b32.xlu0 %v1693, 24
        %v1706 = vpop.permute.xlu0 %1705
        %v1708 = vsel %vm1034, %v1195, %v1698
        %vm1709 = vcmask 130048
        %v1710 = vsel %vm1709, %v1708, %v1702
        %vm1711 = vcmask 195584
        %v1712 = vsel %vm1711, %v1710, %v1706
        %v1713 = vld [vmem:[%s6] sm:$0xff]
        %v1714 = vld [vmem:[%s6 + $0x8] sm:$0xff]
        %v1715 = vld [vmem:[%s6 + $0x10] sm:$0xff]
        %v1716 = vld [vmem:[%s6 + $0x18] sm:$0xff]
        %v1717 = vld [vmem:[%s7] sm:$0x1]
        %v1719 = vlaneseq
        %v1720 = vshrl.u32 %v1719, 7
        %v1721 = vsub.s32 0, %v1720
        %v1722 = vrot.slane %v1717, %v1721
        %v1725 = vsel %vm954, %v1712, 0
        %1727 = vmatprep.subr.mxu0 0.0
        %1728 = vmatpush1.msra.mxu0 %v1713
        %1729 = vmatprep.subr.mxu0 0.0
        %1730 = vmatpush1.msra.mxu0 %v1714
        %1731 = vmatprep.subr.mxu0 0.0
        %1732 = vmatpush1.msra.mxu0 %v1715
        %1733 = vmatprep.subr.mxu0 0.0
        %1734 = vmatpush1.msra.mxu0 %v1716
        %1735 = vmatprep.subr.mxu0 0.0
        %1736 = vmatpush1.msra.mxu0 0.0
        %1737 = vmatprep.subr.mxu0 0.0
        %1738 = vmatpush1.msra.mxu0 0.0
        %1739 = vmatprep.subr.mxu0 0.0
        %1740 = vmatpush1.msra.mxu0 0.0
        %1741 = vmatprep.subr.mxu0 0.0
        %1742 = vmatpush1.msra.mxu0 0.0
        %1743 = vmatprep.subr.mxu0 0.0
        %1744 = vmatpush1.msra.mxu0 0.0
        %1745 = vmatprep.subr.mxu0 0.0
        %1746 = vmatpush1.msra.mxu0 0.0
        %1747 = vmatprep.subr.mxu0 0.0
        %1748 = vmatpush1.msra.mxu0 0.0
        %1749 = vmatprep.subr.mxu0 0.0
        %1750 = vmatpush1.msra.mxu0 0.0
        %1751 = vmatprep.subr.mxu0 0.0
        %1752 = vmatpush1.msra.mxu0 0.0
        %1753 = vmatprep.subr.mxu0 0.0
        %1754 = vmatpush1.msra.mxu0 0.0
        %1755 = vmatprep.subr.mxu0 0.0
        %1756 = vmatpush1.msra.mxu0 0.0
        %1757 = vmatprep.subr.mxu0 0.0
        %1758 = vmatpush1.msra.mxu0 0.0
        %1759 = vmatprep.subr.mxu0 0.0
        %1760 = vmatpush1.msra.mxu0 0.0
        %1761 = vmatprep.subr.mxu0 0.0
        %1762 = vmatpush1.msra.mxu0 0.0
        %1763 = vmatprep.subr.mxu0 0.0
        %1764 = vmatpush1.msra.mxu0 0.0
        %1765 = vmatprep.subr.mxu0 0.0
        %1766 = vmatpush1.msra.mxu0 0.0
        %1767 = vmatprep.subr.mxu0 0.0
        %1768 = vmatpush1.msra.mxu0 0.0
        %1769 = vmatprep.subr.mxu0 0.0
        %1770 = vmatpush1.msra.mxu0 0.0
        %1771 = vmatprep.subr.mxu0 0.0
        %1772 = vmatpush1.msra.mxu0 0.0
        %1773 = vmatprep.subr.mxu0 0.0
        %1774 = vmatpush1.msra.mxu0 0.0
        %1775 = vmatprep.subr.mxu0 0.0
        %1776 = vmatpush1.msra.mxu0 0.0
        %1777 = vmatprep.subr.mxu0 0.0
        %1778 = vmatpush1.msra.mxu0 0.0
        %1779 = vmatprep.subr.mxu0 0.0
        %1780 = vmatpush1.msra.mxu0 0.0
        %1781 = vmatprep.subr.mxu0 0.0
        %1782 = vmatpush1.msra.mxu0 0.0
        %1783 = vmatprep.subr.mxu0 0.0
        %1784 = vmatpush1.msra.mxu0 0.0
        %1785 = vmatprep.subr.mxu0 0.0
        %1786 = vmatpush1.msra.mxu0 0.0
        %1787 = vmatprep.subr.mxu0 0.0
        %1788 = vmatpush1.msra.mxu0 0.0
        %1789 = vmatprep.subr.mxu0 0.0
        %1790 = vmatpush1.msra.mxu0 0.0
        %1791 = vmatprep.mubr.f32.mxu0 0.0
        %1792 = vmatmul.mubr.f32.gmra.mrb[0].mxu0 %v1725
        %v1793 = vpop.f32.mrb[0].mxu0
        %v1794 = vadd.f32 %v1722, %v1793
        %v1795 = vpop.f32.mrb[0].mxu0
        %1796 = vdwg.mxu0
        %v1797 = vadd.f32 %v940, %v1794
        %v1798 = vld [vmem:[#allocation13] sm:$0x1]
        %v1799 = vld [vmem:[#allocation14] sm:$0x1]
        %v1800 = vsel %vm954, %v1797, 0.0
        %1801 = vadd.xlane.f32.xlu0 %v1800
        %v1802 = vpop.xlane.xlu0 %1801
        %v1803 = vrcp.pop 32.0
        %v1804 = vmul.f32 %v1802, %v1803
        %v1805 = vsub.f32 %v1797, %v1804
        %v1806 = vmul.f32 %v1805, %v1805
        %v1807 = vsel %vm954, %v1806, 0.0
        %1808 = vadd.xlane.f32.xlu0 %v1807
        %v1809 = vpop.xlane.xlu0 %1808
        %v1810 = vmul.f32 %v1809, 0.032258064
        %v1811 = vrsqrt.pop %v1810
        %v1812 = vmul.f32 %v1810, %v1811
        %vm1813 = vcmp.eq.f32.partialorder %v1810, inf
        %v1814 = vsel %vm1813, %v1810, %v1812
        %vm1815 = vcmp.eq.f32.partialorder %v1810, 0.0
        %v1816 = vand.u32 %v1810, 2147483648
        %v1817 = vsel %vm1815, %v1816, %v1814
        %v1818 = vadd.f32 %v1817, 1e-12
        %v1819 = vrcp.pop %v1818
        %v1820 = vmul.f32 %v1805, %v1819
        %v1822 = vlaneseq
        %v1823 = vshrl.u32 %v1822, 7
        %v1824 = vsub.s32 0, %v1823
        %v1825 = vrot.slane %v1798, %v1824
        %v1827 = vmul.f32 %v1825, %v1820
        %v1829 = vlaneseq
        %v1830 = vshrl.u32 %v1829, 7
        %v1831 = vsub.s32 0, %v1830
        %v1832 = vrot.slane %v1799, %v1831
        %v1834 = vadd.f32 %v1827, %v1832
        %v1835 = vld [vmem:[%s8] sm:$0xff]
        %v1836 = vld [vmem:[%s8 + $0x8] sm:$0xff]
        %v1837 = vld [vmem:[%s8 + $0x10] sm:$0xff]
        %v1838 = vld [vmem:[%s8 + $0x18] sm:$0xff]
        %v1839 = vld [vmem:[#allocation2] sm:$0x1]
        %v1841 = vlaneseq
        %v1842 = vshrl.u32 %v1841, 7
        %v1843 = vsub.s32 0, %v1842
        %v1844 = vrot.slane %v1839, %v1843
        %v1847 = vsel %vm954, %v1834, 0
        %1849 = vmatprep.subr.mxu0 0.0
        %1850 = vmatpush1.msra.mxu0 %v1835
        %1851 = vmatprep.subr.mxu0 0.0
        %1852 = vmatpush1.msra.mxu0 %v1836
        %1853 = vmatprep.subr.mxu0 0.0
        %1854 = vmatpush1.msra.mxu0 %v1837
        %1855 = vmatprep.subr.mxu0 0.0
        %1856 = vmatpush1.msra.mxu0 %v1838
        %1857 = vmatprep.subr.mxu0 0.0
        %1858 = vmatpush1.msra.mxu0 0.0
        %1859 = vmatprep.subr.mxu0 0.0
        %1860 = vmatpush1.msra.mxu0 0.0
        %1861 = vmatprep.subr.mxu0 0.0
        %1862 = vmatpush1.msra.mxu0 0.0
        %1863 = vmatprep.subr.mxu0 0.0
        %1864 = vmatpush1.msra.mxu0 0.0
        %1865 = vmatprep.subr.mxu0 0.0
        %1866 = vmatpush1.msra.mxu0 0.0
        %1867 = vmatprep.subr.mxu0 0.0
        %1868 = vmatpush1.msra.mxu0 0.0
        %1869 = vmatprep.subr.mxu0 0.0
        %1870 = vmatpush1.msra.mxu0 0.0
        %1871 = vmatprep.subr.mxu0 0.0
        %1872 = vmatpush1.msra.mxu0 0.0
        %1873 = vmatprep.subr.mxu0 0.0
        %1874 = vmatpush1.msra.mxu0 0.0
        %1875 = vmatprep.subr.mxu0 0.0
        %1876 = vmatpush1.msra.mxu0 0.0
        %1877 = vmatprep.subr.mxu0 0.0
        %1878 = vmatpush1.msra.mxu0 0.0
        %1879 = vmatprep.subr.mxu0 0.0
        %1880 = vmatpush1.msra.mxu0 0.0
        %1881 = vmatprep.subr.mxu0 0.0
        %1882 = vmatpush1.msra.mxu0 0.0
        %1883 = vmatprep.subr.mxu0 0.0
        %1884 = vmatpush1.msra.mxu0 0.0
        %1885 = vmatprep.subr.mxu0 0.0
        %1886 = vmatpush1.msra.mxu0 0.0
        %1887 = vmatprep.subr.mxu0 0.0
        %1888 = vmatpush1.msra.mxu0 0.0
        %1889 = vmatprep.subr.mxu0 0.0
        %1890 = vmatpush1.msra.mxu0 0.0
        %1891 = vmatprep.subr.mxu0 0.0
        %1892 = vmatpush1.msra.mxu0 0.0
        %1893 = vmatprep.subr.mxu0 0.0
        %1894 = vmatpush1.msra.mxu0 0.0
        %1895 = vmatprep.subr.mxu0 0.0
        %1896 = vmatpush1.msra.mxu0 0.0
        %1897 = vmatprep.subr.mxu0 0.0
        %1898 = vmatpush1.msra.mxu0 0.0
        %1899 = vmatprep.subr.mxu0 0.0
        %1900 = vmatpush1.msra.mxu0 0.0
        %1901 = vmatprep.subr.mxu0 0.0
        %1902 = vmatpush1.msra.mxu0 0.0
        %1903 = vmatprep.subr.mxu0 0.0
        %1904 = vmatpush1.msra.mxu0 0.0
        %1905 = vmatprep.subr.mxu0 0.0
        %1906 = vmatpush1.msra.mxu0 0.0
        %1907 = vmatprep.subr.mxu0 0.0
        %1908 = vmatpush1.msra.mxu0 0.0
        %1909 = vmatprep.subr.mxu0 0.0
        %1910 = vmatpush1.msra.mxu0 0.0
        %1911 = vmatprep.subr.mxu0 0.0
        %1912 = vmatpush1.msra.mxu0 0.0
        %1913 = vmatprep.mubr.f32.mxu0 0.0
        %1914 = vmatmul.mubr.f32.gmra.mrb[0].mxu0 %v1847
        %v1915 = vpop.f32.mrb[0].mxu0
        %v1916 = vadd.f32 %v1844, %v1915
        %v1917 = vpop.f32.mrb[0].mxu0
        %1918 = vdwg.mxu0
        %v1919 = vld [vmem:[%s10] sm:$0xff]
        %v1920 = vld [vmem:[%s10 + $0x8] sm:$0xff]
        %v1921 = vld [vmem:[%s10 + $0x10] sm:$0xff]
        %v1922 = vld [vmem:[%s10 + $0x18] sm:$0xff]
        %v1923 = vld [vmem:[#allocation5] sm:$0x1]
        %v1925 = vlaneseq
        %v1926 = vshrl.u32 %v1925, 7
        %v1927 = vsub.s32 0, %v1926
        %v1928 = vrot.slane %v1923, %v1927
        %v1931 = vsel %vm954, %v941, 0
        %v1934 = vsel %vm954, %v942, 0
        %1936 = vmatprep.subr.mxu0 0.0
        %1937 = vmatpush1.msra.mxu0 %v1919
        %1938 = vmatprep.subr.mxu0 0.0
        %1939 = vmatpush1.msra.mxu0 %v1920
        %1940 = vmatprep.subr.mxu0 0.0
        %1941 = vmatpush1.msra.mxu0 %v1921
        %1942 = vmatprep.subr.mxu0 0.0
        %1943 = vmatpush1.msra.mxu0 %v1922
        %1944 = vmatprep.subr.mxu0 0.0
        %1945 = vmatpush1.msra.mxu0 0.0
        %1946 = vmatprep.subr.mxu0 0.0
        %1947 = vmatpush1.msra.mxu0 0.0
        %1948 = vmatprep.subr.mxu0 0.0
        %1949 = vmatpush1.msra.mxu0 0.0
        %1950 = vmatprep.subr.mxu0 0.0
        %1951 = vmatpush1.msra.mxu0 0.0
        %1952 = vmatprep.subr.mxu0 0.0
        %1953 = vmatpush1.msra.mxu0 0.0
        %1954 = vmatprep.subr.mxu0 0.0
        %1955 = vmatpush1.msra.mxu0 0.0
        %1956 = vmatprep.subr.mxu0 0.0
        %1957 = vmatpush1.msra.mxu0 0.0
        %1958 = vmatprep.subr.mxu0 0.0
        %1959 = vmatpush1.msra.mxu0 0.0
        %1960 = vmatprep.subr.mxu0 0.0
        %1961 = vmatpush1.msra.mxu0 0.0
        %1962 = vmatprep.subr.mxu0 0.0
        %1963 = vmatpush1.msra.mxu0 0.0
        %1964 = vmatprep.subr.mxu0 0.0
        %1965 = vmatpush1.msra.mxu0 0.0
        %1966 = vmatprep.subr.mxu0 0.0
        %1967 = vmatpush1.msra.mxu0 0.0
        %1968 = vmatprep.subr.mxu0 0.0
        %1969 = vmatpush1.msra.mxu0 0.0
        %1970 = vmatprep.subr.mxu0 0.0
        %1971 = vmatpush1.msra.mxu0 0.0
        %1972 = vmatprep.subr.mxu0 0.0
        %1973 = vmatpush1.msra.mxu0 0.0
        %1974 = vmatprep.subr.mxu0 0.0
        %1975 = vmatpush1.msra.mxu0 0.0
        %1976 = vmatprep.subr.mxu0 0.0
        %1977 = vmatpush1.msra.mxu0 0.0
        %1978 = vmatprep.subr.mxu0 0.0
        %1979 = vmatpush1.msra.mxu0 0.0
        %1980 = vmatprep.subr.mxu0 0.0
        %1981 = vmatpush1.msra.mxu0 0.0
        %1982 = vmatprep.subr.mxu0 0.0
        %1983 = vmatpush1.msra.mxu0 0.0
        %1984 = vmatprep.subr.mxu0 0.0
        %1985 = vmatpush1.msra.mxu0 0.0
        %1986 = vmatprep.subr.mxu0 0.0
        %1987 = vmatpush1.msra.mxu0 0.0
        %1988 = vmatprep.subr.mxu0 0.0
        %1989 = vmatpush1.msra.mxu0 0.0
        %1990 = vmatprep.subr.mxu0 0.0
        %1991 = vmatpush1.msra.mxu0 0.0
        %1992 = vmatprep.subr.mxu0 0.0
        %1993 = vmatpush1.msra.mxu0 0.0
        %1994 = vmatprep.subr.mxu0 0.0
        %1995 = vmatpush1.msra.mxu0 0.0
        %1996 = vmatprep.subr.mxu0 0.0
        %1997 = vmatpush1.msra.mxu0 0.0
        %1998 = vmatprep.subr.mxu0 0.0
        %1999 = vmatpush1.msra.mxu0 0.0
        %2000 = vmatprep.mubr.f32.mxu0 0.0
        %2001 = vmatmul.mubr.f32.gmra.mrb[0].mxu0 %v1931
        %v2002 = vpop.f32.mrb[0].mxu0
        %v2003 = vadd.f32 %v1928, %v2002
        %v2004 = vpop.f32.mrb[0].mxu0
        %2005 = vmatprep.mubr.f32.mxu0 0.0
        %2006 = vmatmul.mubr.f32.gmra.mrb[0].mxu0 %v1934
        %v2007 = vpop.f32.mrb[0].mxu0
        %v2008 = vadd.f32 %v1928, %v2007
        %v2009 = vpop.f32.mrb[0].mxu0
        %2010 = vdwg.mxu0
        %v2011 = vld [vmem:[%s939] sm:$0xff]
        %v2012 = vmul.f32 %v1916, 0.35355338
        %vm2013 = vcmp.gt.f32.partialorder %v2011, 0.5
        %v2015 = vsel %vm1034, %v2012, 0
        %v2018 = vsel %vm1034, %v2003, 0
        %v2021 = vsel %vm1034, %v2008, 0
        %2023 = vmatprep.subr.mxu0 0.0
        %2024 = vmatpush1.xpose.msra.mxu0 %v2018
        %2025 = vmatprep.subr.mxu0 0.0
        %2026 = vmatpush1.xpose.msra.mxu0 %v2021
        %2027 = vmatprep.subr.mxu0 0.0
        %2028 = vmatpush1.xpose.msra.mxu0 0.0
        %2029 = vmatprep.subr.mxu0 0.0
        %2030 = vmatpush1.xpose.msra.mxu0 0.0
        %2031 = vmatprep.subr.mxu0 0.0
        %2032 = vmatpush1.xpose.msra.mxu0 0.0
        %2033 = vmatprep.subr.mxu0 0.0
        %2034 = vmatpush1.xpose.msra.mxu0 0.0
        %2035 = vmatprep.subr.mxu0 0.0
        %2036 = vmatpush1.xpose.msra.mxu0 0.0
        %2037 = vmatprep.subr.mxu0 0.0
        %2038 = vmatpush1.xpose.msra.mxu0 0.0
        %2039 = vmatprep.subr.mxu0 0.0
        %2040 = vmatpush1.xpose.msra.mxu0 0.0
        %2041 = vmatprep.subr.mxu0 0.0
        %2042 = vmatpush1.xpose.msra.mxu0 0.0
        %2043 = vmatprep.subr.mxu0 0.0
        %2044 = vmatpush1.xpose.msra.mxu0 0.0
        %2045 = vmatprep.subr.mxu0 0.0
        %2046 = vmatpush1.xpose.msra.mxu0 0.0
        %2047 = vmatprep.subr.mxu0 0.0
        %2048 = vmatpush1.xpose.msra.mxu0 0.0
        %2049 = vmatprep.subr.mxu0 0.0
        %2050 = vmatpush1.xpose.msra.mxu0 0.0
        %2051 = vmatprep.subr.mxu0 0.0
        %2052 = vmatpush1.xpose.msra.mxu0 0.0
        %2053 = vmatprep.subr.mxu0 0.0
        %2054 = vmatpush1.xpose.msra.mxu0 0.0
        %2055 = vmatprep.subr.mxu0 0.0
        %2056 = vmatpush1.xpose.msra.mxu0 0.0
        %2057 = vmatprep.subr.mxu0 0.0
        %2058 = vmatpush1.xpose.msra.mxu0 0.0
        %2059 = vmatprep.subr.mxu0 0.0
        %2060 = vmatpush1.xpose.msra.mxu0 0.0
        %2061 = vmatprep.subr.mxu0 0.0
        %2062 = vmatpush1.xpose.msra.mxu0 0.0
        %2063 = vmatprep.subr.mxu0 0.0
        %2064 = vmatpush1.xpose.msra.mxu0 0.0
        %2065 = vmatprep.subr.mxu0 0.0
        %2066 = vmatpush1.xpose.msra.mxu0 0.0
        %2067 = vmatprep.subr.mxu0 0.0
        %2068 = vmatpush1.xpose.msra.mxu0 0.0
        %2069 = vmatprep.subr.mxu0 0.0
        %2070 = vmatpush1.xpose.msra.mxu0 0.0
        %2071 = vmatprep.subr.mxu0 0.0
        %2072 = vmatpush1.xpose.msra.mxu0 0.0
        %2073 = vmatprep.subr.mxu0 0.0
        %2074 = vmatpush1.xpose.msra.mxu0 0.0
        %2075 = vmatprep.subr.mxu0 0.0
        %2076 = vmatpush1.xpose.msra.mxu0 0.0
        %2077 = vmatprep.subr.mxu0 0.0
        %2078 = vmatpush1.xpose.msra.mxu0 0.0
        %2079 = vmatprep.subr.mxu0 0.0
        %2080 = vmatpush1.xpose.msra.mxu0 0.0
        %2081 = vmatprep.subr.mxu0 0.0
        %2082 = vmatpush1.xpose.msra.mxu0 0.0
        %2083 = vmatprep.subr.mxu0 0.0
        %2084 = vmatpush1.xpose.msra.mxu0 0.0
        %2085 = vmatprep.subr.mxu0 0.0
        %2086 = vmatpush1.xpose.msra.mxu0 0.0
        %2087 = vmatprep.mubr.f32.mxu0 0.0
        %2088 = vmatmul.mubr.f32.gmra.mrb[0].mxu0 %v2015
        %v2089 = vpop.f32.mrb[0].mxu0
        %v2090 = vadd.f32 0.0, %v2089
        %v2091 = vpop.f32.mrb[0].mxu0
        %2092 = vdwg.mxu0
        %v2093 = vsel %vm2013, -1e+10, %v2090
        %v2094 = vsel %vm1709, %v2093, -inf
        %2095 = vmax.xlane.f32.xlu0 %v2094
        %v2096 = vpop.xlane.xlu0 %2095
        %v2097 = vsub.f32 %v2093, %v2096
        %v2098 = vmul.f32 %v2097, 1.442695
        %v2099 = vpow.pop %v2098
        %v2100 = vsel %vm1709, %v2099, 0.0
        %2101 = vadd.xlane.f32.xlu0 %v2100
        %v2102 = vpop.xlane.xlu0 %2101
        %v2103 = vrcp.pop %v2102
        %v2104 = vmul.f32 %v2099, %v2103
        %2105 = vrot.lane.b32.xlu0 %v2003, 96
        %v2106 = vpop.permute.xlu0 %2105
        %2107 = vrot.lane.b32.xlu0 %v2008, 96
        %v2108 = vpop.permute.xlu0 %2107
        %v2112 = vsel %vm1709, %v2104, 0
        %2114 = vmatprep.subr.mxu0 0.0
        %2115 = vmatpush1.msra.mxu0 %v2106
        %2116 = vmatprep.subr.mxu0 0.0
        %2117 = vmatpush1.msra.mxu0 %v2108
        %2118 = vmatprep.subr.mxu0 0.0
        %2119 = vmatpush1.msra.mxu0 0.0
        %2120 = vmatprep.subr.mxu0 0.0
        %2121 = vmatpush1.msra.mxu0 0.0
        %2122 = vmatprep.subr.mxu0 0.0
        %2123 = vmatpush1.msra.mxu0 0.0
        %2124 = vmatprep.subr.mxu0 0.0
        %2125 = vmatpush1.msra.mxu0 0.0
        %2126 = vmatprep.subr.mxu0 0.0
        %2127 = vmatpush1.msra.mxu0 0.0
        %2128 = vmatprep.subr.mxu0 0.0
        %2129 = vmatpush1.msra.mxu0 0.0
        %2130 = vmatprep.subr.mxu0 0.0
        %2131 = vmatpush1.msra.mxu0 0.0
        %2132 = vmatprep.subr.mxu0 0.0
        %2133 = vmatpush1.msra.mxu0 0.0
        %2134 = vmatprep.subr.mxu0 0.0
        %2135 = vmatpush1.msra.mxu0 0.0
        %2136 = vmatprep.subr.mxu0 0.0
        %2137 = vmatpush1.msra.mxu0 0.0
        %2138 = vmatprep.subr.mxu0 0.0
        %2139 = vmatpush1.msra.mxu0 0.0
        %2140 = vmatprep.subr.mxu0 0.0
        %2141 = vmatpush1.msra.mxu0 0.0
        %2142 = vmatprep.subr.mxu0 0.0
        %2143 = vmatpush1.msra.mxu0 0.0
        %2144 = vmatprep.subr.mxu0 0.0
        %2145 = vmatpush1.msra.mxu0 0.0
        %2146 = vmatprep.subr.mxu0 0.0
        %2147 = vmatpush1.msra.mxu0 0.0
        %2148 = vmatprep.subr.mxu0 0.0
        %2149 = vmatpush1.msra.mxu0 0.0
        %2150 = vmatprep.subr.mxu0 0.0
        %2151 = vmatpush1.msra.mxu0 0.0
        %2152 = vmatprep.subr.mxu0 0.0
        %2153 = vmatpush1.msra.mxu0 0.0
        %2154 = vmatprep.subr.mxu0 0.0
        %2155 = vmatpush1.msra.mxu0 0.0
        %2156 = vmatprep.subr.mxu0 0.0
        %2157 = vmatpush1.msra.mxu0 0.0
        %2158 = vmatprep.subr.mxu0 0.0
        %2159 = vmatpush1.msra.mxu0 0.0
        %2160 = vmatprep.subr.mxu0 0.0
        %2161 = vmatpush1.msra.mxu0 0.0
        %2162 = vmatprep.subr.mxu0 0.0
        %2163 = vmatpush1.msra.mxu0 0.0
        %2164 = vmatprep.subr.mxu0 0.0
        %2165 = vmatpush1.msra.mxu0 0.0
        %2166 = vmatprep.subr.mxu0 0.0
        %2167 = vmatpush1.msra.mxu0 0.0
        %2168 = vmatprep.subr.mxu0 0.0
        %2169 = vmatpush1.msra.mxu0 0.0
        %2170 = vmatprep.subr.mxu0 0.0
        %2171 = vmatpush1.msra.mxu0 0.0
        %2172 = vmatprep.subr.mxu0 0.0
        %2173 = vmatpush1.msra.mxu0 0.0
        %2174 = vmatprep.subr.mxu0 0.0
        %2175 = vmatpush1.msra.mxu0 0.0
        %2176 = vmatprep.subr.mxu0 0.0
        %2177 = vmatpush1.msra.mxu0 0.0
        %2178 = vmatprep.mubr.f32.mxu0 0.0
        %2179 = vmatmul.mubr.f32.gmra.mrb[0].mxu0 %v2112
        %v2180 = vpop.f32.mrb[0].mxu0
        %v2181 = vadd.f32 0.0, %v2180
        %v2182 = vpop.f32.mrb[0].mxu0
        %2183 = vdwg.mxu0
        %2184 = vrot.lane.b32.xlu0 %v2012, 120
        %v2185 = vpop.permute.xlu0 %2184
        %2186 = vrot.lane.b32.xlu0 %v2003, 120
        %v2187 = vpop.permute.xlu0 %2186
        %2188 = vrot.lane.b32.xlu0 %v2008, 120
        %v2189 = vpop.permute.xlu0 %2188
        %v2190 = vsel %vm1034, %v2185, 0
        %v2192 = vsel %vm1034, %v2187, 0
        %v2194 = vsel %vm1034, %v2189, 0
        %2196 = vmatprep.subr.mxu0 0.0
        %2197 = vmatpush1.xpose.msra.mxu0 %v2192
        %2198 = vmatprep.subr.mxu0 0.0
        %2199 = vmatpush1.xpose.msra.mxu0 %v2194
        %2200 = vmatprep.subr.mxu0 0.0
        %2201 = vmatpush1.xpose.msra.mxu0 0.0
        %2202 = vmatprep.subr.mxu0 0.0
        %2203 = vmatpush1.xpose.msra.mxu0 0.0
        %2204 = vmatprep.subr.mxu0 0.0
        %2205 = vmatpush1.xpose.msra.mxu0 0.0
        %2206 = vmatprep.subr.mxu0 0.0
        %2207 = vmatpush1.xpose.msra.mxu0 0.0
        %2208 = vmatprep.subr.mxu0 0.0
        %2209 = vmatpush1.xpose.msra.mxu0 0.0
        %2210 = vmatprep.subr.mxu0 0.0
        %2211 = vmatpush1.xpose.msra.mxu0 0.0
        %2212 = vmatprep.subr.mxu0 0.0
        %2213 = vmatpush1.xpose.msra.mxu0 0.0
        %2214 = vmatprep.subr.mxu0 0.0
        %2215 = vmatpush1.xpose.msra.mxu0 0.0
        %2216 = vmatprep.subr.mxu0 0.0
        %2217 = vmatpush1.xpose.msra.mxu0 0.0
        %2218 = vmatprep.subr.mxu0 0.0
        %2219 = vmatpush1.xpose.msra.mxu0 0.0
        %2220 = vmatprep.subr.mxu0 0.0
        %2221 = vmatpush1.xpose.msra.mxu0 0.0
        %2222 = vmatprep.subr.mxu0 0.0
        %2223 = vmatpush1.xpose.msra.mxu0 0.0
        %2224 = vmatprep.subr.mxu0 0.0
        %2225 = vmatpush1.xpose.msra.mxu0 0.0
        %2226 = vmatprep.subr.mxu0 0.0
        %2227 = vmatpush1.xpose.msra.mxu0 0.0
        %2228 = vmatprep.subr.mxu0 0.0
        %2229 = vmatpush1.xpose.msra.mxu0 0.0
        %2230 = vmatprep.subr.mxu0 0.0
        %2231 = vmatpush1.xpose.msra.mxu0 0.0
        %2232 = vmatprep.subr.mxu0 0.0
        %2233 = vmatpush1.xpose.msra.mxu0 0.0
        %2234 = vmatprep.subr.mxu0 0.0
        %2235 = vmatpush1.xpose.msra.mxu0 0.0
        %2236 = vmatprep.subr.mxu0 0.0
        %2237 = vmatpush1.xpose.msra.mxu0 0.0
        %2238 = vmatprep.subr.mxu0 0.0
        %2239 = vmatpush1.xpose.msra.mxu0 0.0
        %2240 = vmatprep.subr.mxu0 0.0
        %2241 = vmatpush1.xpose.msra.mxu0 0.0
        %2242 = vmatprep.subr.mxu0 0.0
        %2243 = vmatpush1.xpose.msra.mxu0 0.0
        %2244 = vmatprep.subr.mxu0 0.0
        %2245 = vmatpush1.xpose.msra.mxu0 0.0
        %2246 = vmatprep.subr.mxu0 0.0
        %2247 = vmatpush1.xpose.msra.mxu0 0.0
        %2248 = vmatprep.subr.mxu0 0.0
        %2249 = vmatpush1.xpose.msra.mxu0 0.0
        %2250 = vmatprep.subr.mxu0 0.0
        %2251 = vmatpush1.xpose.msra.mxu0 0.0
        %2252 = vmatprep.subr.mxu0 0.0
        %2253 = vmatpush1.xpose.msra.mxu0 0.0
        %2254 = vmatprep.subr.mxu0 0.0
        %2255 = vmatpush1.xpose.msra.mxu0 0.0
        %2256 = vmatprep.subr.mxu0 0.0
        %2257 = vmatpush1.xpose.msra.mxu0 0.0
        %2258 = vmatprep.subr.mxu0 0.0
        %2259 = vmatpush1.xpose.msra.mxu0 0.0
        %2260 = vmatprep.mubr.f32.mxu0 0.0
        %2261 = vmatmul.mubr.f32.gmra.mrb[0].mxu0 %v2190
        %v2262 = vpop.f32.mrb[0].mxu0
        %v2263 = vadd.f32 0.0, %v2262
        %v2264 = vpop.f32.mrb[0].mxu0
        %2265 = vdwg.mxu0
        %v2266 = vsel %vm2013, -1e+10, %v2263
        %v2267 = vsel %vm1709, %v2266, -inf
        %2268 = vmax.xlane.f32.xlu0 %v2267
        %v2269 = vpop.xlane.xlu0 %2268
        %v2270 = vsub.f32 %v2266, %v2269
        %v2271 = vmul.f32 %v2270, 1.442695
        %v2272 = vpow.pop %v2271
        %v2273 = vsel %vm1709, %v2272, 0.0
        %2274 = vadd.xlane.f32.xlu0 %v2273
        %v2275 = vpop.xlane.xlu0 %2274
        %v2276 = vrcp.pop %v2275
        %v2277 = vmul.f32 %v2272, %v2276
        %2278 = vrot.lane.b32.xlu0 %v2003, 88
        %v2279 = vpop.permute.xlu0 %2278
        %2280 = vrot.lane.b32.xlu0 %v2008, 88
        %v2281 = vpop.permute.xlu0 %2280
        %v2285 = vsel %vm1709, %v2277, 0
        %2287 = vmatprep.subr.mxu0 0.0
        %2288 = vmatpush1.msra.mxu0 %v2279
        %2289 = vmatprep.subr.mxu0 0.0
        %2290 = vmatpush1.msra.mxu0 %v2281
        %2291 = vmatprep.subr.mxu0 0.0
        %2292 = vmatpush1.msra.mxu0 0.0
        %2293 = vmatprep.subr.mxu0 0.0
        %2294 = vmatpush1.msra.mxu0 0.0
        %2295 = vmatprep.subr.mxu0 0.0
        %2296 = vmatpush1.msra.mxu0 0.0
        %2297 = vmatprep.subr.mxu0 0.0
        %2298 = vmatpush1.msra.mxu0 0.0
        %2299 = vmatprep.subr.mxu0 0.0
        %2300 = vmatpush1.msra.mxu0 0.0
        %2301 = vmatprep.subr.mxu0 0.0
        %2302 = vmatpush1.msra.mxu0 0.0
        %2303 = vmatprep.subr.mxu0 0.0
        %2304 = vmatpush1.msra.mxu0 0.0
        %2305 = vmatprep.subr.mxu0 0.0
        %2306 = vmatpush1.msra.mxu0 0.0
        %2307 = vmatprep.subr.mxu0 0.0
        %2308 = vmatpush1.msra.mxu0 0.0
        %2309 = vmatprep.subr.mxu0 0.0
        %2310 = vmatpush1.msra.mxu0 0.0
        %2311 = vmatprep.subr.mxu0 0.0
        %2312 = vmatpush1.msra.mxu0 0.0
        %2313 = vmatprep.subr.mxu0 0.0
        %2314 = vmatpush1.msra.mxu0 0.0
        %2315 = vmatprep.subr.mxu0 0.0
        %2316 = vmatpush1.msra.mxu0 0.0
        %2317 = vmatprep.subr.mxu0 0.0
        %2318 = vmatpush1.msra.mxu0 0.0
        %2319 = vmatprep.subr.mxu0 0.0
        %2320 = vmatpush1.msra.mxu0 0.0
        %2321 = vmatprep.subr.mxu0 0.0
        %2322 = vmatpush1.msra.mxu0 0.0
        %2323 = vmatprep.subr.mxu0 0.0
        %2324 = vmatpush1.msra.mxu0 0.0
        %2325 = vmatprep.subr.mxu0 0.0
        %2326 = vmatpush1.msra.mxu0 0.0
        %2327 = vmatprep.subr.mxu0 0.0
        %2328 = vmatpush1.msra.mxu0 0.0
        %2329 = vmatprep.subr.mxu0 0.0
        %2330 = vmatpush1.msra.mxu0 0.0
        %2331 = vmatprep.subr.mxu0 0.0
        %2332 = vmatpush1.msra.mxu0 0.0
        %2333 = vmatprep.subr.mxu0 0.0
        %2334 = vmatpush1.msra.mxu0 0.0
        %2335 = vmatprep.subr.mxu0 0.0
        %2336 = vmatpush1.msra.mxu0 0.0
        %2337 = vmatprep.subr.mxu0 0.0
        %2338 = vmatpush1.msra.mxu0 0.0
        %2339 = vmatprep.subr.mxu0 0.0
        %2340 = vmatpush1.msra.mxu0 0.0
        %2341 = vmatprep.subr.mxu0 0.0
        %2342 = vmatpush1.msra.mxu0 0.0
        %2343 = vmatprep.subr.mxu0 0.0
        %2344 = vmatpush1.msra.mxu0 0.0
        %2345 = vmatprep.subr.mxu0 0.0
        %2346 = vmatpush1.msra.mxu0 0.0
        %2347 = vmatprep.subr.mxu0 0.0
        %2348 = vmatpush1.msra.mxu0 0.0
        %2349 = vmatprep.subr.mxu0 0.0
        %2350 = vmatpush1.msra.mxu0 0.0
        %2351 = vmatprep.mubr.f32.mxu0 0.0
        %2352 = vmatmul.mubr.f32.gmra.mrb[0].mxu0 %v2285
        %v2353 = vpop.f32.mrb[0].mxu0
        %v2354 = vadd.f32 0.0, %v2353
        %v2355 = vpop.f32.mrb[0].mxu0
        %2356 = vdwg.mxu0
        %2357 = vrot.lane.b32.xlu0 %v2012, 112
        %v2358 = vpop.permute.xlu0 %2357
        %2359 = vrot.lane.b32.xlu0 %v2003, 112
        %v2360 = vpop.permute.xlu0 %2359
        %2361 = vrot.lane.b32.xlu0 %v2008, 112
        %v2362 = vpop.permute.xlu0 %2361
        %v2363 = vsel %vm1034, %v2358, 0
        %v2365 = vsel %vm1034, %v2360, 0
        %v2367 = vsel %vm1034, %v2362, 0
        %2369 = vmatprep.subr.mxu0 0.0
        %2370 = vmatpush1.xpose.msra.mxu0 %v2365
        %2371 = vmatprep.subr.mxu0 0.0
        %2372 = vmatpush1.xpose.msra.mxu0 %v2367
        %2373 = vmatprep.subr.mxu0 0.0
        %2374 = vmatpush1.xpose.msra.mxu0 0.0
        %2375 = vmatprep.subr.mxu0 0.0
        %2376 = vmatpush1.xpose.msra.mxu0 0.0
        %2377 = vmatprep.subr.mxu0 0.0
        %2378 = vmatpush1.xpose.msra.mxu0 0.0
        %2379 = vmatprep.subr.mxu0 0.0
        %2380 = vmatpush1.xpose.msra.mxu0 0.0
        %2381 = vmatprep.subr.mxu0 0.0
        %2382 = vmatpush1.xpose.msra.mxu0 0.0
        %2383 = vmatprep.subr.mxu0 0.0
        %2384 = vmatpush1.xpose.msra.mxu0 0.0
        %2385 = vmatprep.subr.mxu0 0.0
        %2386 = vmatpush1.xpose.msra.mxu0 0.0
        %2387 = vmatprep.subr.mxu0 0.0
        %2388 = vmatpush1.xpose.msra.mxu0 0.0
        %2389 = vmatprep.subr.mxu0 0.0
        %2390 = vmatpush1.xpose.msra.mxu0 0.0
        %2391 = vmatprep.subr.mxu0 0.0
        %2392 = vmatpush1.xpose.msra.mxu0 0.0
        %2393 = vmatprep.subr.mxu0 0.0
        %2394 = vmatpush1.xpose.msra.mxu0 0.0
        %2395 = vmatprep.subr.mxu0 0.0
        %2396 = vmatpush1.xpose.msra.mxu0 0.0
        %2397 = vmatprep.subr.mxu0 0.0
        %2398 = vmatpush1.xpose.msra.mxu0 0.0
        %2399 = vmatprep.subr.mxu0 0.0
        %2400 = vmatpush1.xpose.msra.mxu0 0.0
        %2401 = vmatprep.subr.mxu0 0.0
        %2402 = vmatpush1.xpose.msra.mxu0 0.0
        %2403 = vmatprep.subr.mxu0 0.0
        %2404 = vmatpush1.xpose.msra.mxu0 0.0
        %2405 = vmatprep.subr.mxu0 0.0
        %2406 = vmatpush1.xpose.msra.mxu0 0.0
        %2407 = vmatprep.subr.mxu0 0.0
        %2408 = vmatpush1.xpose.msra.mxu0 0.0
        %2409 = vmatprep.subr.mxu0 0.0
        %2410 = vmatpush1.xpose.msra.mxu0 0.0
        %2411 = vmatprep.subr.mxu0 0.0
        %2412 = vmatpush1.xpose.msra.mxu0 0.0
        %2413 = vmatprep.subr.mxu0 0.0
        %2414 = vmatpush1.xpose.msra.mxu0 0.0
        %2415 = vmatprep.subr.mxu0 0.0
        %2416 = vmatpush1.xpose.msra.mxu0 0.0
        %2417 = vmatprep.subr.mxu0 0.0
        %2418 = vmatpush1.xpose.msra.mxu0 0.0
        %2419 = vmatprep.subr.mxu0 0.0
        %2420 = vmatpush1.xpose.msra.mxu0 0.0
        %2421 = vmatprep.subr.mxu0 0.0
        %2422 = vmatpush1.xpose.msra.mxu0 0.0
        %2423 = vmatprep.subr.mxu0 0.0
        %2424 = vmatpush1.xpose.msra.mxu0 0.0
        %2425 = vmatprep.subr.mxu0 0.0
        %2426 = vmatpush1.xpose.msra.mxu0 0.0
        %2427 = vmatprep.subr.mxu0 0.0
        %2428 = vmatpush1.xpose.msra.mxu0 0.0
        %2429 = vmatprep.subr.mxu0 0.0
        %2430 = vmatpush1.xpose.msra.mxu0 0.0
        %2431 = vmatprep.subr.mxu0 0.0
        %2432 = vmatpush1.xpose.msra.mxu0 0.0
        %2433 = vmatprep.mubr.f32.mxu0 0.0
        %2434 = vmatmul.mubr.f32.gmra.mrb[0].mxu0 %v2363
        %v2435 = vpop.f32.mrb[0].mxu0
        %v2436 = vadd.f32 0.0, %v2435
        %v2437 = vpop.f32.mrb[0].mxu0
        %2438 = vdwg.mxu0
        %v2439 = vsel %vm2013, -1e+10, %v2436
        %v2440 = vsel %vm1709, %v2439, -inf
        %2441 = vmax.xlane.f32.xlu0 %v2440
        %v2442 = vpop.xlane.xlu0 %2441
        %v2443 = vsub.f32 %v2439, %v2442
        %v2444 = vmul.f32 %v2443, 1.442695
        %v2445 = vpow.pop %v2444
        %v2446 = vsel %vm1709, %v2445, 0.0
        %2447 = vadd.xlane.f32.xlu0 %v2446
        %v2448 = vpop.xlane.xlu0 %2447
        %v2449 = vrcp.pop %v2448
        %v2450 = vmul.f32 %v2445, %v2449
        %2451 = vrot.lane.b32.xlu0 %v2003, 80
        %v2452 = vpop.permute.xlu0 %2451
        %2453 = vrot.lane.b32.xlu0 %v2008, 80
        %v2454 = vpop.permute.xlu0 %2453
        %v2458 = vsel %vm1709, %v2450, 0
        %2460 = vmatprep.subr.mxu0 0.0
        %2461 = vmatpush1.msra.mxu0 %v2452
        %2462 = vmatprep.subr.mxu0 0.0
        %2463 = vmatpush1.msra.mxu0 %v2454
        %2464 = vmatprep.subr.mxu0 0.0
        %2465 = vmatpush1.msra.mxu0 0.0
        %2466 = vmatprep.subr.mxu0 0.0
        %2467 = vmatpush1.msra.mxu0 0.0
        %2468 = vmatprep.subr.mxu0 0.0
        %2469 = vmatpush1.msra.mxu0 0.0
        %2470 = vmatprep.subr.mxu0 0.0
        %2471 = vmatpush1.msra.mxu0 0.0
        %2472 = vmatprep.subr.mxu0 0.0
        %2473 = vmatpush1.msra.mxu0 0.0
        %2474 = vmatprep.subr.mxu0 0.0
        %2475 = vmatpush1.msra.mxu0 0.0
        %2476 = vmatprep.subr.mxu0 0.0
        %2477 = vmatpush1.msra.mxu0 0.0
        %2478 = vmatprep.subr.mxu0 0.0
        %2479 = vmatpush1.msra.mxu0 0.0
        %2480 = vmatprep.subr.mxu0 0.0
        %2481 = vmatpush1.msra.mxu0 0.0
        %2482 = vmatprep.subr.mxu0 0.0
        %2483 = vmatpush1.msra.mxu0 0.0
        %2484 = vmatprep.subr.mxu0 0.0
        %2485 = vmatpush1.msra.mxu0 0.0
        %2486 = vmatprep.subr.mxu0 0.0
        %2487 = vmatpush1.msra.mxu0 0.0
        %2488 = vmatprep.subr.mxu0 0.0
        %2489 = vmatpush1.msra.mxu0 0.0
        %2490 = vmatprep.subr.mxu0 0.0
        %2491 = vmatpush1.msra.mxu0 0.0
        %2492 = vmatprep.subr.mxu0 0.0
        %2493 = vmatpush1.msra.mxu0 0.0
        %2494 = vmatprep.subr.mxu0 0.0
        %2495 = vmatpush1.msra.mxu0 0.0
        %2496 = vmatprep.subr.mxu0 0.0
        %2497 = vmatpush1.msra.mxu0 0.0
        %2498 = vmatprep.subr.mxu0 0.0
        %2499 = vmatpush1.msra.mxu0 0.0
        %2500 = vmatprep.subr.mxu0 0.0
        %2501 = vmatpush1.msra.mxu0 0.0
        %2502 = vmatprep.subr.mxu0 0.0
        %2503 = vmatpush1.msra.mxu0 0.0
        %2504 = vmatprep.subr.mxu0 0.0
        %2505 = vmatpush1.msra.mxu0 0.0
        %2506 = vmatprep.subr.mxu0 0.0
        %2507 = vmatpush1.msra.mxu0 0.0
        %2508 = vmatprep.subr.mxu0 0.0
        %2509 = vmatpush1.msra.mxu0 0.0
        %2510 = vmatprep.subr.mxu0 0.0
        %2511 = vmatpush1.msra.mxu0 0.0
        %2512 = vmatprep.subr.mxu0 0.0
        %2513 = vmatpush1.msra.mxu0 0.0
        %2514 = vmatprep.subr.mxu0 0.0
        %2515 = vmatpush1.msra.mxu0 0.0
        %2516 = vmatprep.subr.mxu0 0.0
        %2517 = vmatpush1.msra.mxu0 0.0
        %2518 = vmatprep.subr.mxu0 0.0
        %2519 = vmatpush1.msra.mxu0 0.0
        %2520 = vmatprep.subr.mxu0 0.0
        %2521 = vmatpush1.msra.mxu0 0.0
        %2522 = vmatprep.subr.mxu0 0.0
        %2523 = vmatpush1.msra.mxu0 0.0
        %2524 = vmatprep.mubr.f32.mxu0 0.0
        %2525 = vmatmul.mubr.f32.gmra.mrb[0].mxu0 %v2458
        %v2526 = vpop.f32.mrb[0].mxu0
        %v2527 = vadd.f32 0.0, %v2526
        %v2528 = vpop.f32.mrb[0].mxu0
        %2529 = vdwg.mxu0
        %2530 = vrot.lane.b32.xlu0 %v2012, 104
        %v2531 = vpop.permute.xlu0 %2530
        %2532 = vrot.lane.b32.xlu0 %v2003, 104
        %v2533 = vpop.permute.xlu0 %2532
        %2534 = vrot.lane.b32.xlu0 %v2008, 104
        %v2535 = vpop.permute.xlu0 %2534
        %v2536 = vsel %vm1034, %v2531, 0
        %v2538 = vsel %vm1034, %v2533, 0
        %v2540 = vsel %vm1034, %v2535, 0
        %2542 = vmatprep.subr.mxu0 0.0
        %2543 = vmatpush1.xpose.msra.mxu0 %v2538
        %2544 = vmatprep.subr.mxu0 0.0
        %2545 = vmatpush1.xpose.msra.mxu0 %v2540
        %2546 = vmatprep.subr.mxu0 0.0
        %2547 = vmatpush1.xpose.msra.mxu0 0.0
        %2548 = vmatprep.subr.mxu0 0.0
        %2549 = vmatpush1.xpose.msra.mxu0 0.0
        %2550 = vmatprep.subr.mxu0 0.0
        %2551 = vmatpush1.xpose.msra.mxu0 0.0
        %2552 = vmatprep.subr.mxu0 0.0
        %2553 = vmatpush1.xpose.msra.mxu0 0.0
        %2554 = vmatprep.subr.mxu0 0.0
        %2555 = vmatpush1.xpose.msra.mxu0 0.0
        %2556 = vmatprep.subr.mxu0 0.0
        %2557 = vmatpush1.xpose.msra.mxu0 0.0
        %2558 = vmatprep.subr.mxu0 0.0
        %2559 = vmatpush1.xpose.msra.mxu0 0.0
        %2560 = vmatprep.subr.mxu0 0.0
        %2561 = vmatpush1.xpose.msra.mxu0 0.0
        %2562 = vmatprep.subr.mxu0 0.0
        %2563 = vmatpush1.xpose.msra.mxu0 0.0
        %2564 = vmatprep.subr.mxu0 0.0
        %2565 = vmatpush1.xpose.msra.mxu0 0.0
        %2566 = vmatprep.subr.mxu0 0.0
        %2567 = vmatpush1.xpose.msra.mxu0 0.0
        %2568 = vmatprep.subr.mxu0 0.0
        %2569 = vmatpush1.xpose.msra.mxu0 0.0
        %2570 = vmatprep.subr.mxu0 0.0
        %2571 = vmatpush1.xpose.msra.mxu0 0.0
        %2572 = vmatprep.subr.mxu0 0.0
        %2573 = vmatpush1.xpose.msra.mxu0 0.0
        %2574 = vmatprep.subr.mxu0 0.0
        %2575 = vmatpush1.xpose.msra.mxu0 0.0
        %2576 = vmatprep.subr.mxu0 0.0
        %2577 = vmatpush1.xpose.msra.mxu0 0.0
        %2578 = vmatprep.subr.mxu0 0.0
        %2579 = vmatpush1.xpose.msra.mxu0 0.0
        %2580 = vmatprep.subr.mxu0 0.0
        %2581 = vmatpush1.xpose.msra.mxu0 0.0
        %2582 = vmatprep.subr.mxu0 0.0
        %2583 = vmatpush1.xpose.msra.mxu0 0.0
        %2584 = vmatprep.subr.mxu0 0.0
        %2585 = vmatpush1.xpose.msra.mxu0 0.0
        %2586 = vmatprep.subr.mxu0 0.0
        %2587 = vmatpush1.xpose.msra.mxu0 0.0
        %2588 = vmatprep.subr.mxu0 0.0
        %2589 = vmatpush1.xpose.msra.mxu0 0.0
        %2590 = vmatprep.subr.mxu0 0.0
        %2591 = vmatpush1.xpose.msra.mxu0 0.0
        %2592 = vmatprep.subr.mxu0 0.0
        %2593 = vmatpush1.xpose.msra.mxu0 0.0
        %2594 = vmatprep.subr.mxu0 0.0
        %2595 = vmatpush1.xpose.msra.mxu0 0.0
        %2596 = vmatprep.subr.mxu0 0.0
        %2597 = vmatpush1.xpose.msra.mxu0 0.0
        %2598 = vmatprep.subr.mxu0 0.0
        %2599 = vmatpush1.xpose.msra.mxu0 0.0
        %2600 = vmatprep.subr.mxu0 0.0
        %2601 = vmatpush1.xpose.msra.mxu0 0.0
        %2602 = vmatprep.subr.mxu0 0.0
        %2603 = vmatpush1.xpose.msra.mxu0 0.0
        %2604 = vmatprep.subr.mxu0 0.0
        %2605 = vmatpush1.xpose.msra.mxu0 0.0
        %2606 = vmatprep.mubr.f32.mxu0 0.0
        %2607 = vmatmul.mubr.f32.gmra.mrb[0].mxu0 %v2536
        %v2608 = vpop.f32.mrb[0].mxu0
        %v2609 = vadd.f32 0.0, %v2608
        %v2610 = vpop.f32.mrb[0].mxu0
        %2611 = vdwg.mxu0
        %v2612 = vsel %vm2013, -1e+10, %v2609
        %v2613 = vsel %vm1709, %v2612, -inf
        %2614 = vmax.xlane.f32.xlu0 %v2613
        %v2615 = vpop.xlane.xlu0 %2614
        %v2616 = vsub.f32 %v2612, %v2615
        %v2617 = vmul.f32 %v2616, 1.442695
        %v2618 = vpow.pop %v2617
        %v2619 = vsel %vm1709, %v2618, 0.0
        %2620 = vadd.xlane.f32.xlu0 %v2619
        %v2621 = vpop.xlane.xlu0 %2620
        %v2622 = vrcp.pop %v2621
        %v2623 = vmul.f32 %v2618, %v2622
        %2624 = vrot.lane.b32.xlu0 %v2003, 72
        %v2625 = vpop.permute.xlu0 %2624
        %2626 = vrot.lane.b32.xlu0 %v2008, 72
        %v2627 = vpop.permute.xlu0 %2626
        %v2631 = vsel %vm1709, %v2623, 0
        %2633 = vmatprep.subr.mxu0 0.0
        %2634 = vmatpush1.msra.mxu0 %v2625
        %2635 = vmatprep.subr.mxu0 0.0
        %2636 = vmatpush1.msra.mxu0 %v2627
        %2637 = vmatprep.subr.mxu0 0.0
        %2638 = vmatpush1.msra.mxu0 0.0
        %2639 = vmatprep.subr.mxu0 0.0
        %2640 = vmatpush1.msra.mxu0 0.0
        %2641 = vmatprep.subr.mxu0 0.0
        %2642 = vmatpush1.msra.mxu0 0.0
        %2643 = vmatprep.subr.mxu0 0.0
        %2644 = vmatpush1.msra.mxu0 0.0
        %2645 = vmatprep.subr.mxu0 0.0
        %2646 = vmatpush1.msra.mxu0 0.0
        %2647 = vmatprep.subr.mxu0 0.0
        %2648 = vmatpush1.msra.mxu0 0.0
        %2649 = vmatprep.subr.mxu0 0.0
        %2650 = vmatpush1.msra.mxu0 0.0
        %2651 = vmatprep.subr.mxu0 0.0
        %2652 = vmatpush1.msra.mxu0 0.0
        %2653 = vmatprep.subr.mxu0 0.0
        %2654 = vmatpush1.msra.mxu0 0.0
        %2655 = vmatprep.subr.mxu0 0.0
        %2656 = vmatpush1.msra.mxu0 0.0
        %2657 = vmatprep.subr.mxu0 0.0
        %2658 = vmatpush1.msra.mxu0 0.0
        %2659 = vmatprep.subr.mxu0 0.0
        %2660 = vmatpush1.msra.mxu0 0.0
        %2661 = vmatprep.subr.mxu0 0.0
        %2662 = vmatpush1.msra.mxu0 0.0
        %2663 = vmatprep.subr.mxu0 0.0
        %2664 = vmatpush1.msra.mxu0 0.0
        %2665 = vmatprep.subr.mxu0 0.0
        %2666 = vmatpush1.msra.mxu0 0.0
        %2667 = vmatprep.subr.mxu0 0.0
        %2668 = vmatpush1.msra.mxu0 0.0
        %2669 = vmatprep.subr.mxu0 0.0
        %2670 = vmatpush1.msra.mxu0 0.0
        %2671 = vmatprep.subr.mxu0 0.0
        %2672 = vmatpush1.msra.mxu0 0.0
        %2673 = vmatprep.subr.mxu0 0.0
        %2674 = vmatpush1.msra.mxu0 0.0
        %2675 = vmatprep.subr.mxu0 0.0
        %2676 = vmatpush1.msra.mxu0 0.0
        %2677 = vmatprep.subr.mxu0 0.0
        %2678 = vmatpush1.msra.mxu0 0.0
        %2679 = vmatprep.subr.mxu0 0.0
        %2680 = vmatpush1.msra.mxu0 0.0
        %2681 = vmatprep.subr.mxu0 0.0
        %2682 = vmatpush1.msra.mxu0 0.0
        %2683 = vmatprep.subr.mxu0 0.0
        %2684 = vmatpush1.msra.mxu0 0.0
        %2685 = vmatprep.subr.mxu0 0.0
        %2686 = vmatpush1.msra.mxu0 0.0
        %2687 = vmatprep.subr.mxu0 0.0
        %2688 = vmatpush1.msra.mxu0 0.0
        %2689 = vmatprep.subr.mxu0 0.0
        %2690 = vmatpush1.msra.mxu0 0.0
        %2691 = vmatprep.subr.mxu0 0.0
        %2692 = vmatpush1.msra.mxu0 0.0
        %2693 = vmatprep.subr.mxu0 0.0
        %2694 = vmatpush1.msra.mxu0 0.0
        %2695 = vmatprep.subr.mxu0 0.0
        %2696 = vmatpush1.msra.mxu0 0.0
        %2697 = vmatprep.mubr.f32.mxu0 0.0
        %2698 = vmatmul.mubr.f32.gmra.mrb[0].mxu0 %v2631
        %v2699 = vpop.f32.mrb[0].mxu0
        %v2700 = vadd.f32 0.0, %v2699
        %v2701 = vpop.f32.mrb[0].mxu0
        %2702 = vdwg.mxu0
        %2704 = vrot.lane.b32.xlu0 %v2354, 8
        %v2705 = vpop.permute.xlu0 %2704
        %2708 = vrot.lane.b32.xlu0 %v2527, 16
        %v2709 = vpop.permute.xlu0 %2708
        %2712 = vrot.lane.b32.xlu0 %v2700, 24
        %v2713 = vpop.permute.xlu0 %2712
        %v2715 = vsel %vm1034, %v2181, %v2705
        %v2716 = vsel %vm1709, %v2715, %v2709
        %v2717 = vsel %vm1711, %v2716, %v2713
        %v2718 = vld [vmem:[#allocation7] sm:$0xff]
        %v2719 = vld [vmem:[#allocation7 + $0x8] sm:$0xff]
        %v2720 = vld [vmem:[#allocation7 + $0x10] sm:$0xff]
        %v2721 = vld [vmem:[#allocation7 + $0x18] sm:$0xff]
        %v2722 = vld [vmem:[#allocation8] sm:$0x1]
        %v2724 = vlaneseq
        %v2725 = vshrl.u32 %v2724, 7
        %v2726 = vsub.s32 0, %v2725
        %v2727 = vrot.slane %v2722, %v2726
        %v2730 = vsel %vm954, %v2717, 0
        %2732 = vmatprep.subr.mxu0 0.0
        %2733 = vmatpush1.msra.mxu0 %v2718
        %2734 = vmatprep.subr.mxu0 0.0
        %2735 = vmatpush1.msra.mxu0 %v2719
        %2736 = vmatprep.subr.mxu0 0.0
        %2737 = vmatpush1.msra.mxu0 %v2720
        %2738 = vmatprep.subr.mxu0 0.0
        %2739 = vmatpush1.msra.mxu0 %v2721
        %2740 = vmatprep.subr.mxu0 0.0
        %2741 = vmatpush1.msra.mxu0 0.0
        %2742 = vmatprep.subr.mxu0 0.0
        %2743 = vmatpush1.msra.mxu0 0.0
        %2744 = vmatprep.subr.mxu0 0.0
        %2745 = vmatpush1.msra.mxu0 0.0
        %2746 = vmatprep.subr.mxu0 0.0
        %2747 = vmatpush1.msra.mxu0 0.0
        %2748 = vmatprep.subr.mxu0 0.0
        %2749 = vmatpush1.msra.mxu0 0.0
        %2750 = vmatprep.subr.mxu0 0.0
        %2751 = vmatpush1.msra.mxu0 0.0
        %2752 = vmatprep.subr.mxu0 0.0
        %2753 = vmatpush1.msra.mxu0 0.0
        %2754 = vmatprep.subr.mxu0 0.0
        %2755 = vmatpush1.msra.mxu0 0.0
        %2756 = vmatprep.subr.mxu0 0.0
        %2757 = vmatpush1.msra.mxu0 0.0
        %2758 = vmatprep.subr.mxu0 0.0
        %2759 = vmatpush1.msra.mxu0 0.0
        %2760 = vmatprep.subr.mxu0 0.0
        %2761 = vmatpush1.msra.mxu0 0.0
        %2762 = vmatprep.subr.mxu0 0.0
        %2763 = vmatpush1.msra.mxu0 0.0
        %2764 = vmatprep.subr.mxu0 0.0
        %2765 = vmatpush1.msra.mxu0 0.0
        %2766 = vmatprep.subr.mxu0 0.0
        %2767 = vmatpush1.msra.mxu0 0.0
        %2768 = vmatprep.subr.mxu0 0.0
        %2769 = vmatpush1.msra.mxu0 0.0
        %2770 = vmatprep.subr.mxu0 0.0
        %2771 = vmatpush1.msra.mxu0 0.0
        %2772 = vmatprep.subr.mxu0 0.0
        %2773 = vmatpush1.msra.mxu0 0.0
        %2774 = vmatprep.subr.mxu0 0.0
        %2775 = vmatpush1.msra.mxu0 0.0
        %2776 = vmatprep.subr.mxu0 0.0
        %2777 = vmatpush1.msra.mxu0 0.0
        %2778 = vmatprep.subr.mxu0 0.0
        %2779 = vmatpush1.msra.mxu0 0.0
        %2780 = vmatprep.subr.mxu0 0.0
        %2781 = vmatpush1.msra.mxu0 0.0
        %2782 = vmatprep.subr.mxu0 0.0
        %2783 = vmatpush1.msra.mxu0 0.0
        %2784 = vmatprep.subr.mxu0 0.0
        %2785 = vmatpush1.msra.mxu0 0.0
        %2786 = vmatprep.subr.mxu0 0.0
        %2787 = vmatpush1.msra.mxu0 0.0
        %2788 = vmatprep.subr.mxu0 0.0
        %2789 = vmatpush1.msra.mxu0 0.0
        %2790 = vmatprep.subr.mxu0 0.0
        %2791 = vmatpush1.msra.mxu0 0.0
        %2792 = vmatprep.subr.mxu0 0.0
        %2793 = vmatpush1.msra.mxu0 0.0
        %2794 = vmatprep.subr.mxu0 0.0
        %2795 = vmatpush1.msra.mxu0 0.0
        %2796 = vmatprep.mubr.f32.mxu0 0.0
        %2797 = vmatmul.mubr.f32.gmra.mrb[0].mxu0 %v2730
        %v2798 = vpop.f32.mrb[0].mxu0
        %v2799 = vadd.f32 %v2727, %v2798
        %v2800 = vpop.f32.mrb[0].mxu0
        %2801 = vdwg.mxu0
        %v2802 = vadd.f32 %v1834, %v2799
        %v2803 = vld [vmem:[#allocation16] sm:$0x1]
        %v2804 = vld [vmem:[#allocation17] sm:$0x1]
        %v2805 = vsel %vm954, %v2802, 0.0
        %2806 = vadd.xlane.f32.xlu0 %v2805
        %v2807 = vpop.xlane.xlu0 %2806
        %v2808 = vmul.f32 %v2807, %v1803
        %v2809 = vsub.f32 %v2802, %v2808
        %v2810 = vmul.f32 %v2809, %v2809
        %v2811 = vsel %vm954, %v2810, 0.0
        %2812 = vadd.xlane.f32.xlu0 %v2811
        %v2813 = vpop.xlane.xlu0 %2812
        %v2814 = vmul.f32 %v2813, 0.032258064
        %v2815 = vrsqrt.pop %v2814
        %v2816 = vmul.f32 %v2814, %v2815
        %vm2817 = vcmp.eq.f32.partialorder %v2814, inf
        %v2818 = vsel %vm2817, %v2814, %v2816
        %vm2819 = vcmp.eq.f32.partialorder %v2814, 0.0
        %v2820 = vand.u32 %v2814, 2147483648
        %v2821 = vsel %vm2819, %v2820, %v2818
        %v2822 = vadd.f32 %v2821, 1e-12
        %v2823 = vrcp.pop %v2822
        %v2824 = vmul.f32 %v2809, %v2823
        %v2826 = vlaneseq
        %v2827 = vshrl.u32 %v2826, 7
        %v2828 = vsub.s32 0, %v2827
        %v2829 = vrot.slane %v2803, %v2828
        %v2831 = vmul.f32 %v2829, %v2824
        %v2833 = vlaneseq
        %v2834 = vshrl.u32 %v2833, 7
        %v2835 = vsub.s32 0, %v2834
        %v2836 = vrot.slane %v2804, %v2835
        %v2838 = vadd.f32 %v2831, %v2836
        %v2839 = vld [vmem:[%s14] sm:$0xff]
        %v2840 = vld [vmem:[%s14 + $0x8] sm:$0xff]
        %v2841 = vld [vmem:[%s14 + $0x10] sm:$0xff]
        %v2842 = vld [vmem:[%s14 + $0x18] sm:$0xff]
        %v2843 = vld [vmem:[#allocation10] sm:$0x1]
        %v2845 = vlaneseq
        %v2846 = vshrl.u32 %v2845, 7
        %v2847 = vsub.s32 0, %v2846
        %v2848 = vrot.slane %v2843, %v2847
        %v2851 = vsel %vm954, %v2838, 0
        %2853 = vmatprep.subr.mxu0 0.0
        %2854 = vmatpush1.msra.mxu0 %v2839
        %2855 = vmatprep.subr.mxu0 0.0
        %2856 = vmatpush1.msra.mxu0 %v2840
        %2857 = vmatprep.subr.mxu0 0.0
        %2858 = vmatpush1.msra.mxu0 %v2841
        %2859 = vmatprep.subr.mxu0 0.0
        %2860 = vmatpush1.msra.mxu0 %v2842
        %2861 = vmatprep.subr.mxu0 0.0
        %2862 = vmatpush1.msra.mxu0 0.0
        %2863 = vmatprep.subr.mxu0 0.0
        %2864 = vmatpush1.msra.mxu0 0.0
        %2865 = vmatprep.subr.mxu0 0.0
        %2866 = vmatpush1.msra.mxu0 0.0
        %2867 = vmatprep.subr.mxu0 0.0
        %2868 = vmatpush1.msra.mxu0 0.0
        %2869 = vmatprep.subr.mxu0 0.0
        %2870 = vmatpush1.msra.mxu0 0.0
        %2871 = vmatprep.subr.mxu0 0.0
        %2872 = vmatpush1.msra.mxu0 0.0
        %2873 = vmatprep.subr.mxu0 0.0
        %2874 = vmatpush1.msra.mxu0 0.0
        %2875 = vmatprep.subr.mxu0 0.0
        %2876 = vmatpush1.msra.mxu0 0.0
        %2877 = vmatprep.subr.mxu0 0.0
        %2878 = vmatpush1.msra.mxu0 0.0
        %2879 = vmatprep.subr.mxu0 0.0
        %2880 = vmatpush1.msra.mxu0 0.0
        %2881 = vmatprep.subr.mxu0 0.0
        %2882 = vmatpush1.msra.mxu0 0.0
        %2883 = vmatprep.subr.mxu0 0.0
        %2884 = vmatpush1.msra.mxu0 0.0
        %2885 = vmatprep.subr.mxu0 0.0
        %2886 = vmatpush1.msra.mxu0 0.0
        %2887 = vmatprep.subr.mxu0 0.0
        %2888 = vmatpush1.msra.mxu0 0.0
        %2889 = vmatprep.subr.mxu0 0.0
        %2890 = vmatpush1.msra.mxu0 0.0
        %2891 = vmatprep.subr.mxu0 0.0
        %2892 = vmatpush1.msra.mxu0 0.0
        %2893 = vmatprep.subr.mxu0 0.0
        %2894 = vmatpush1.msra.mxu0 0.0
        %2895 = vmatprep.subr.mxu0 0.0
        %2896 = vmatpush1.msra.mxu0 0.0
        %2897 = vmatprep.subr.mxu0 0.0
        %2898 = vmatpush1.msra.mxu0 0.0
        %2899 = vmatprep.subr.mxu0 0.0
        %2900 = vmatpush1.msra.mxu0 0.0
        %2901 = vmatprep.subr.mxu0 0.0
        %2902 = vmatpush1.msra.mxu0 0.0
        %2903 = vmatprep.subr.mxu0 0.0
        %2904 = vmatpush1.msra.mxu0 0.0
        %2905 = vmatprep.subr.mxu0 0.0
        %2906 = vmatpush1.msra.mxu0 0.0
        %2907 = vmatprep.subr.mxu0 0.0
        %2908 = vmatpush1.msra.mxu0 0.0
        %2909 = vmatprep.subr.mxu0 0.0
        %2910 = vmatpush1.msra.mxu0 0.0
        %2911 = vmatprep.subr.mxu0 0.0
        %2912 = vmatpush1.msra.mxu0 0.0
        %2913 = vmatprep.subr.mxu0 0.0
        %2914 = vmatpush1.msra.mxu0 0.0
        %2915 = vmatprep.subr.mxu0 0.0
        %2916 = vmatpush1.msra.mxu0 0.0
        %2917 = vmatprep.mubr.f32.mxu0 0.0
        %2918 = vmatmul.mubr.f32.gmra.mrb[0].mxu0 %v2851
        %v2919 = vpop.f32.mrb[0].mxu0
        %v2920 = vadd.f32 %v2848, %v2919
        %v2921 = vpop.f32.mrb[0].mxu0
        %2922 = vdwg.mxu0
        %v2923 = vmax.f32 %v2920, 0.0
        %v2924 = vld [vmem:[%s16] sm:$0xff]
        %v2925 = vld [vmem:[%s16 + $0x8] sm:$0xff]
        %v2926 = vld [vmem:[%s16 + $0x10] sm:$0xff]
        %v2927 = vld [vmem:[%s16 + $0x18] sm:$0xff]
        %v2928 = vld [vmem:[%s16 + $0x20] sm:$0xff]
        %v2929 = vld [vmem:[%s16 + $0x28] sm:$0xff]
        %v2930 = vld [vmem:[%s16 + $0x30] sm:$0xff]
        %v2931 = vld [vmem:[%s16 + $0x38] sm:$0xff]
        %v2932 = vld [vmem:[#allocation11] sm:$0x1]
        %v2934 = vlaneseq
        %v2935 = vshrl.u32 %v2934, 7
        %v2936 = vsub.s32 0, %v2935
        %v2937 = vrot.slane %v2932, %v2936
        %vm2939 = vcmask 523264
        %v2941 = vsel %vm2939, %v2923, 0
        %2943 = vmatprep.subr.mxu0 0.0
        %2944 = vmatpush1.msra.mxu0 %v2924
        %2945 = vmatprep.subr.mxu0 0.0
        %2946 = vmatpush1.msra.mxu0 %v2925
        %2947 = vmatprep.subr.mxu0 0.0
        %2948 = vmatpush1.msra.mxu0 %v2926
        %2949 = vmatprep.subr.mxu0 0.0
        %2950 = vmatpush1.msra.mxu0 %v2927
        %2951 = vmatprep.subr.mxu0 0.0
        %2952 = vmatpush1.msra.mxu0 %v2928
        %2953 = vmatprep.subr.mxu0 0.0
        %2954 = vmatpush1.msra.mxu0 %v2929
        %2955 = vmatprep.subr.mxu0 0.0
        %2956 = vmatpush1.msra.mxu0 %v2930
        %2957 = vmatprep.subr.mxu0 0.0
        %2958 = vmatpush1.msra.mxu0 %v2931
        %2959 = vmatprep.subr.mxu0 0.0
        %2960 = vmatpush1.msra.mxu0 0.0
        %2961 = vmatprep.subr.mxu0 0.0
        %2962 = vmatpush1.msra.mxu0 0.0
        %2963 = vmatprep.subr.mxu0 0.0
        %2964 = vmatpush1.msra.mxu0 0.0
        %2965 = vmatprep.subr.mxu0 0.0
        %2966 = vmatpush1.msra.mxu0 0.0
        %2967 = vmatprep.subr.mxu0 0.0
        %2968 = vmatpush1.msra.mxu0 0.0
        %2969 = vmatprep.subr.mxu0 0.0
        %2970 = vmatpush1.msra.mxu0 0.0
        %2971 = vmatprep.subr.mxu0 0.0
        %2972 = vmatpush1.msra.mxu0 0.0
        %2973 = vmatprep.subr.mxu0 0.0
        %2974 = vmatpush1.msra.mxu0 0.0
        %2975 = vmatprep.subr.mxu0 0.0
        %2976 = vmatpush1.msra.mxu0 0.0
        %2977 = vmatprep.subr.mxu0 0.0
        %2978 = vmatpush1.msra.mxu0 0.0
        %2979 = vmatprep.subr.mxu0 0.0
        %2980 = vmatpush1.msra.mxu0 0.0
        %2981 = vmatprep.subr.mxu0 0.0
        %2982 = vmatpush1.msra.mxu0 0.0
        %2983 = vmatprep.subr.mxu0 0.0
        %2984 = vmatpush1.msra.mxu0 0.0
        %2985 = vmatprep.subr.mxu0 0.0
        %2986 = vmatpush1.msra.mxu0 0.0
        %2987 = vmatprep.subr.mxu0 0.0
        %2988 = vmatpush1.msra.mxu0 0.0
        %2989 = vmatprep.subr.mxu0 0.0
        %2990 = vmatpush1.msra.mxu0 0.0
        %2991 = vmatprep.subr.mxu0 0.0
        %2992 = vmatpush1.msra.mxu0 0.0
        %2993 = vmatprep.subr.mxu0 0.0
        %2994 = vmatpush1.msra.mxu0 0.0
        %2995 = vmatprep.subr.mxu0 0.0
        %2996 = vmatpush1.msra.mxu0 0.0
        %2997 = vmatprep.subr.mxu0 0.0
        %2998 = vmatpush1.msra.mxu0 0.0
        %2999 = vmatprep.subr.mxu0 0.0
        %3000 = vmatpush1.msra.mxu0 0.0
        %3001 = vmatprep.subr.mxu0 0.0
        %3002 = vmatpush1.msra.mxu0 0.0
        %3003 = vmatprep.subr.mxu0 0.0
        %3004 = vmatpush1.msra.mxu0 0.0
        %3005 = vmatprep.subr.mxu0 0.0
        %3006 = vmatpush1.msra.mxu0 0.0
        %3007 = vmatprep.mubr.f32.mxu0 0.0
        %3008 = vmatmul.mubr.f32.gmra.mrb[0].mxu0 %v2941
        %v3009 = vpop.f32.mrb[0].mxu0
        %v3010 = vadd.f32 %v2937, %v3009
        %v3011 = vpop.f32.mrb[0].mxu0
        %3012 = vdwg.mxu0
        %v3013 = vadd.f32 %v2838, %v3010
        %v3014 = vld [vmem:[#allocation19] sm:$0x1]
        %v3015 = vld [vmem:[#allocation20] sm:$0x1]
        %v3016 = vsel %vm954, %v3013, 0.0
        %3017 = vadd.xlane.f32.xlu0 %v3016
        %v3018 = vpop.xlane.xlu0 %3017
        %v3019 = vmul.f32 %v3018, %v1803
        %v3020 = vsub.f32 %v3013, %v3019
        %v3021 = vmul.f32 %v3020, %v3020
        %v3022 = vsel %vm954, %v3021, 0.0
        %3023 = vadd.xlane.f32.xlu0 %v3022
        %v3024 = vpop.xlane.xlu0 %3023
        %v3025 = vmul.f32 %v3024, 0.032258064
        %v3026 = vrsqrt.pop %v3025
        %v3027 = vmul.f32 %v3025, %v3026
        %vm3028 = vcmp.eq.f32.partialorder %v3025, inf
        %v3029 = vsel %vm3028, %v3025, %v3027
        %vm3030 = vcmp.eq.f32.partialorder %v3025, 0.0
        %v3031 = vand.u32 %v3025, 2147483648
        %v3032 = vsel %vm3030, %v3031, %v3029
        %v3033 = vadd.f32 %v3032, 1e-12
        %v3034 = vrcp.pop %v3033
        %v3035 = vmul.f32 %v3020, %v3034
        %v3037 = vlaneseq
        %v3038 = vshrl.u32 %v3037, 7
        %v3039 = vsub.s32 0, %v3038
        %v3040 = vrot.slane %v3014, %v3039
        %v3042 = vmul.f32 %v3040, %v3035
        %v3044 = vlaneseq
        %v3045 = vshrl.u32 %v3044, 7
        %v3046 = vsub.s32 0, %v3045
        %v3047 = vrot.slane %v3015, %v3046
        %v3049 = vadd.f32 %v3042, %v3047
        %3050 = vst.msk [vmem:[%s922] sm:$0xff] %vm954, %v3049
        %s3051 = sand.u32 %s577, 1
        %s3052 = scalar_lea.sflag [#allocation4], %s3051
        %s3053 = sand.u32 %s577, 1
        %s3054 = smul.addr %s3053, 8
        %s3055 = scalar_lea.vmem [#allocation22], %s3054
        // Predicated region
        $region165: #{decoder_layer.1} parent=115 // pred_check
          %p3056 = pneg %p587
        $region166: #{decoder_layer.1} parent=115 // pred_check_branch
          %3058 = sbr.rel (%p3056) target = $region168
        $region167: #{decoder_layer.1} parent=115 // pred_region
          %s3060 = ssub.s32 128, 128
          %3061 = vsyncadd %s3052, %s3060
          %s3062 = smul.addr %s45, 128
          %s3063 = scalar_lea.hbm %s24, %s3062
          %s3065 = sshll.u32 %s3055, 4
          %s3066 = int_to_ptr.vmem [resolvable:$true] %s3065
          %3068 = dma.vmem_to_hbm [thread:$0]  %s3066, 128, %s3063, %s3052
        $region168: #{decoder_layer.1} parent=115 // pred_fallthru
          _
      $region116: #{decoder_layer.1} parent=5 // pred_fallthru
        _
      %p3069 = scmp.le.s32.totalorder 2, %s40
      // Predicated region
      $region169: #{decoder_layer.1} parent=5 // pred_check
        %p3070 = pneg %p3069
      $region170: #{decoder_layer.1} parent=5 // pred_check_branch
        %3072 = sbr.rel (%p3070) target = $region172
      $region171: #{decoder_layer.1} parent=5 // pred_region
        %s3073 = ssub.s32 %s40, 2
        // Predicated region
        $region173: #{decoder_layer.1} parent=171 // pred_check
          %p3074 = pneg %p593
        $region174: #{decoder_layer.1} parent=171 // pred_check_branch
          %3076 = sbr.rel (%p3074) target = $region176
        $region175: #{decoder_layer.1} parent=171 // pred_region
          %s3077 = sand.u32 %s578, 1
          %s3078 = scalar_lea.sflag [#allocation4], %s3077
          %s3079 = sand.u32 %s578, 1
          %s3080 = smul.addr %s3079, 8
          %s3081 = scalar_lea.vmem [#allocation22], %s3080
          %3082 = dma.done %s3078, 128
        $region176: #{decoder_layer.1} parent=171 // pred_fallthru
          _
      $region172: #{decoder_layer.1} parent=5 // pred_fallthru
        _
    $region6: #{decoder_layer.1} parent=1 // loop_footer
      %s44 = sadd.s32 1, %s40
    $region7: #{decoder_layer.1} parent=1 // loop_footer_branch
      %39 = sbr.rel target = $region3
    $region8: #{decoder_layer.1} parent=1 // loop_exit
      _
    %3083 = vsyncpa [#allocation3], 1
    %s3084 = scalar_lea.sflag [#allocation3], 1
    %3085 = vsyncpa %s3084, 1
    %3086 = vsyncpa [#allocation6], 1
    %3087 = vsyncpa [#allocation9], 1
    %3088 = vsyncpa [#allocation12], 1
    %3089 = vsyncpa [#allocation15], 1
    %3090 = vsyncpa [#allocation18], 1
    %3091 = vsyncpa [#allocation21], 1
    %3092 = vsyncpa [#allocation4], 1
    %s3093 = scalar_lea.sflag [#allocation4], 1
    %3094 = vsyncpa %s3093, 1

</llo_original>
